<compile_context>
chip_gen: v7x
topology: tpu7x:2x2x1
jax: 0.10.0
libtpu: 0.0.40
codegen_flags: <defaults>
</compile_context>

<pallas_src>
import jax
import jax.numpy as jnp
import numpy as np
from jax import lax
from jax.experimental import pallas as pl
from jax.experimental.pallas import tpu as pltpu


def _shift_prev(v):
    """v[:, l] -> v[:, l-1] with zero at l == 0 (XLU lane roll + VPU mask, no copies)."""
    lane = lax.broadcasted_iota(jnp.int32, v.shape, v.ndim - 1)
    return jnp.where(lane > 0, pltpu.roll(v, 1, axis=v.ndim - 1), 0.0)


def _shift_next(v):
    """v[:, l] -> v[:, l+1] with zero at l == L-1."""
    L = v.shape[-1]
    lane = lax.broadcasted_iota(jnp.int32, v.shape, v.ndim - 1)
    return jnp.where(lane < L - 1, pltpu.roll(v, L - 1, axis=v.ndim - 1), 0.0)


def mel_decoder_kernel(x_ref, w0_ref, b0_ref,
                       r1wa_ref, r1ba_ref, r1wb_ref, r1bb_ref,
                       r2wa_ref, r2ba_ref, r2wb_ref, r2bb_ref,
                       r3wa_ref, r3ba_ref, r3wb_ref, r3bb_ref,
                       wt_ref, bt_ref, o_ref):
    f32 = jnp.float32

    def conv3(v, w_ref, b_ref):
        # Conv1d(k=3, pad=1): three per-tap MXU matmuls on roll-shifted operands.
        # Tap 0 multiplies v[l-1], tap 1 v[l], tap 2 v[l+1].
        y = jnp.dot(w_ref[1], v, preferred_element_type=f32)
        y = y + jnp.dot(w_ref[0], _shift_prev(v), preferred_element_type=f32)
        y = y + jnp.dot(w_ref[2], _shift_next(v), preferred_element_type=f32)
        return y + b_ref[...]

    x = x_ref[0]                                   # (Cin, L): channels on sublanes, L on lanes
    h = conv3(x, w0_ref, b0_ref)                   # head Conv1d(k=3, pad=1)

    # ResBlocks: ReLU -> Conv1d(k=3,pad=1) -> ReLU -> Conv1d(k=1) -> residual add.
    for wa_ref, ba_ref, wb_ref, bb_ref in (
            (r1wa_ref, r1ba_ref, r1wb_ref, r1bb_ref),
            (r2wa_ref, r2ba_ref, r2wb_ref, r2bb_ref),
            (r3wa_ref, r3ba_ref, r3wb_ref, r3bb_ref)):
        r = conv3(jnp.maximum(h, 0.0), wa_ref, ba_ref)
        r = jnp.dot(wb_ref[...], jnp.maximum(r, 0.0),
                    preferred_element_type=f32) + bb_ref[...]
        h = h + r

    # ConvTranspose1d(k=4, s=2, p=1):
    #   out[2m]   = wt[:,:,1]^T h[m]   + wt[:,:,3]^T h[m-1] + bt
    #   out[2m+1] = wt[:,:,0]^T h[m+1] + wt[:,:,2]^T h[m]   + bt
    bt = bt_ref[...]
    even = (jnp.dot(wt_ref[1], h, preferred_element_type=f32)
            + jnp.dot(wt_ref[3], _shift_prev(h), preferred_element_type=f32) + bt)
    odd = (jnp.dot(wt_ref[2], h, preferred_element_type=f32)
           + jnp.dot(wt_ref[0], _shift_next(h), preferred_element_type=f32) + bt)
    cout = even.shape[0]
    o_ref[0, :cout, :] = even                      # rows [0:Cout)     = time steps 2m
    o_ref[0, cout:, :] = odd                       # rows [Cout:2Cout) = time steps 2m+1


def mel_decoder_forward(x_ncl, pt_params):
    """x_ncl: (N, Cin, L) float32 (PyTorch NCL).  Returns (N, out_channel, 2L)."""
    N, Cin, L = x_ncl.shape
    (w0, b0), res, (wt, bt) = pt_params
    C = w0.shape[0]
    Cout = wt.shape[1]

    def tap_major(w):    # (Cout, Cin, 3) -> (3, Cout, Cin); tap k multiplies x[l + k - 1]
        return jnp.transpose(w, (2, 0, 1))

    weight_args = [tap_major(w0), b0.reshape(C, 1)]
    for (wa, ba, wb, bb) in res:
        weight_args += [tap_major(wa), ba.reshape(C, 1), wb[:, :, 0], bb.reshape(C, 1)]
    # ConvTranspose1d weight (C, Cout, 4) -> (4, Cout, C): wt4[k] = wt[:, :, k].T
    weight_args += [jnp.transpose(wt, (2, 1, 0)), bt.reshape(Cout, 1)]

    def const_spec(a):   # whole (tiny) weight, VMEM-resident across all grid steps
        nd = a.ndim
        return pl.BlockSpec(a.shape, lambda n, _nd=nd: (0,) * _nd)

    out = pl.pallas_call(
        mel_decoder_kernel,
        out_shape=jax.ShapeDtypeStruct((N, 2 * Cout, L), jnp.float32),
        grid=(N,),                                     # one sequence per grid step
        in_specs=[pl.BlockSpec((1, Cin, L), lambda n: (n, 0, 0))]
                 + [const_spec(a) for a in weight_args],
        out_specs=pl.BlockSpec((1, 2 * Cout, L), lambda n: (n, 0, 0)),
        compiler_params=pltpu.CompilerParams(dimension_semantics=("parallel",)),
    )(x_ncl, *weight_args)

    # rows [0:Cout) = even time steps, [Cout:2Cout) = odd.  Interleave -> NCL.
    # TODO(synk): do this interleave in-kernel (XLU shuffle / strided lane store) to avoid
    #             the extra HBM pass over the largest tensor at realistic mel lengths.
    out = out.reshape(N, 2, Cout, L)
    return jnp.transpose(out, (0, 2, 3, 1)).reshape(N, Cout, 2 * L)


# ---------------- pure-JAX reference (PyTorch semantics via lax.conv) ----------------

def _ref_conv1d(x, w, b, pad):
    y = lax.conv_general_dilated(x, w, (1,), [(pad, pad)],
                                 dimension_numbers=('NCH', 'OIH', 'NCH'))
    return y + b[None, :, None]


def _ref_convtranspose1d(x, w, b, stride, pad):
    K = w.shape[-1]
    rhs = jnp.flip(jnp.transpose(w, (1, 0, 2)), axis=-1)   # (Cout, Cin, K), flipped taps
    y = lax.conv_general_dilated(x, rhs, (1,), [(K - 1 - pad, K - 1 - pad)],
                                 lhs_dilation=(stride,),
                                 dimension_numbers=('NCH', 'OIH', 'NCH'))
    return y + b[None, :, None]


def mel_decoder_reference(x_ncl, pt_params):
    (w0, b0), res, (wt, bt) = pt_params
    h = _ref_conv1d(x_ncl, w0, b0, 1)
    for (wa, ba, wb, bb) in res:
        r = _ref_conv1d(jax.nn.relu(h), wa, ba, 1)
        r = _ref_conv1d(jax.nn.relu(r), wb, bb, 0)
        h = h + r
    return _ref_convtranspose1d(h, wt, bt, 2, 1)


# ---------------- deterministic parameter construction ----------------

def make_params(key, in_channel, channel, out_channel, n_res_block=3):
    ks = jax.random.split(key, 4 + 4 * n_res_block)
    i = iter(range(len(ks)))

    def nrm(shape, scale=0.02):
        return (scale * jax.random.normal(ks[next(i)], shape)).astype(jnp.float32)

    w0 = nrm((channel, in_channel, 3)); b0 = nrm((channel,), 0.01)
    res = []
    for _ in range(n_res_block):
        wa = nrm((channel, channel, 3)); ba = nrm((channel,), 0.01)
        wb = nrm((channel, channel, 1)); bb = nrm((channel,), 0.01)
        res.append((wa, ba, wb, bb))
    wt = nrm((channel, out_channel, 4)); bt = nrm((out_channel,), 0.01)
    return (w0, b0), tuple(res), (wt, bt)


if __name__ == "__main__":
    # Lane-dense example sizes: L = 128 fills the 128-lane axis; channels are multiples
    # of 8 sublanes.  stride = 2 configuration.
    N, in_channel, channel, out_channel, L = 2, 8, 32, 16, 128
    key = jax.random.PRNGKey(0)
    kx, kp = jax.random.split(key)
    x = jax.random.normal(kx, (N, in_channel, L), dtype=jnp.float32)   # PyTorch NCL input
    params = make_params(kp, in_channel, channel, out_channel)

    out = jax.block_until_ready(mel_decoder_forward(x, params))
    ref = jax.block_until_ready(mel_decoder_reference(x, params))

    assert out.shape == (N, out_channel, 2 * L), out.shape
    np.testing.assert_allclose(np.asarray(out), np.asarray(ref), rtol=1e-4, atol=1e-4)
    print("KERNEL_OK")
</pallas_src>

<mosaic_0001>
module attributes {stable_mosaic.version = 11 : i64} {
  func.func @mel_decoder_kernel(%arg0: i32, %arg1: memref<1x8x128xf32, #tpu.memory_space<vmem>>, %arg2: memref<3x32x8xf32, #tpu.memory_space<vmem>>, %arg3: memref<32x1xf32, #tpu.memory_space<vmem>>, %arg4: memref<3x32x32xf32, #tpu.memory_space<vmem>>, %arg5: memref<32x1xf32, #tpu.memory_space<vmem>>, %arg6: memref<32x32xf32, #tpu.memory_space<vmem>>, %arg7: memref<32x1xf32, #tpu.memory_space<vmem>>, %arg8: memref<3x32x32xf32, #tpu.memory_space<vmem>>, %arg9: memref<32x1xf32, #tpu.memory_space<vmem>>, %arg10: memref<32x32xf32, #tpu.memory_space<vmem>>, %arg11: memref<32x1xf32, #tpu.memory_space<vmem>>, %arg12: memref<3x32x32xf32, #tpu.memory_space<vmem>>, %arg13: memref<32x1xf32, #tpu.memory_space<vmem>>, %arg14: memref<32x32xf32, #tpu.memory_space<vmem>>, %arg15: memref<32x1xf32, #tpu.memory_space<vmem>>, %arg16: memref<4x16x32xf32, #tpu.memory_space<vmem>>, %arg17: memref<16x1xf32, #tpu.memory_space<vmem>>, %arg18: memref<1x32x128xf32, #tpu.memory_space<vmem>>) attributes {dimension_semantics = [#tpu.dimension_semantics<parallel>], iteration_bounds = array<i64: 2>, scalar_prefetch = 0 : i64, scratch_operands = 0 : i64, tpu.core_type = #tpu.core_type<tc>, window_params = [{transform_indices = @transform_0, window_bounds = array<i64: 1, 8, 128>}, {pipeline_mode = #tpu.pipeline_mode<synchronous>, transform_indices = @transform_1, window_bounds = array<i64: 3, 32, 8>}, {pipeline_mode = #tpu.pipeline_mode<synchronous>, transform_indices = @transform_2, window_bounds = array<i64: 32, 1>}, {pipeline_mode = #tpu.pipeline_mode<synchronous>, transform_indices = @transform_3, window_bounds = array<i64: 3, 32, 32>}, {pipeline_mode = #tpu.pipeline_mode<synchronous>, transform_indices = @transform_4, window_bounds = array<i64: 32, 1>}, {pipeline_mode = #tpu.pipeline_mode<synchronous>, transform_indices = @transform_5, window_bounds = array<i64: 32, 32>}, {pipeline_mode = #tpu.pipeline_mode<synchronous>, transform_indices = @transform_6, window_bounds = array<i64: 32, 1>}, {pipeline_mode = #tpu.pipeline_mode<synchronous>, transform_indices = @transform_7, window_bounds = array<i64: 3, 32, 32>}, {pipeline_mode = #tpu.pipeline_mode<synchronous>, transform_indices = @transform_8, window_bounds = array<i64: 32, 1>}, {pipeline_mode = #tpu.pipeline_mode<synchronous>, transform_indices = @transform_9, window_bounds = array<i64: 32, 32>}, {pipeline_mode = #tpu.pipeline_mode<synchronous>, transform_indices = @transform_10, window_bounds = array<i64: 32, 1>}, {pipeline_mode = #tpu.pipeline_mode<synchronous>, transform_indices = @transform_11, window_bounds = array<i64: 3, 32, 32>}, {pipeline_mode = #tpu.pipeline_mode<synchronous>, transform_indices = @transform_12, window_bounds = array<i64: 32, 1>}, {pipeline_mode = #tpu.pipeline_mode<synchronous>, transform_indices = @transform_13, window_bounds = array<i64: 32, 32>}, {pipeline_mode = #tpu.pipeline_mode<synchronous>, transform_indices = @transform_14, window_bounds = array<i64: 32, 1>}, {pipeline_mode = #tpu.pipeline_mode<synchronous>, transform_indices = @transform_15, window_bounds = array<i64: 4, 16, 32>}, {pipeline_mode = #tpu.pipeline_mode<synchronous>, transform_indices = @transform_16, window_bounds = array<i64: 16, 1>}, {transform_indices = @transform_17, window_bounds = array<i64: 1, 32, 128>}]} {
    %c0 = arith.constant 0 : index
    %c0_0 = arith.constant 0 : index
    %c0_1 = arith.constant 0 : index
    %0 = vector.load %arg1[%c0, %c0_0, %c0_1] : memref<1x8x128xf32, #tpu.memory_space<vmem>>, vector<1x8x128xf32>
    %1 = vector.shape_cast %0 : vector<1x8x128xf32> to vector<8x128xf32>
    %c1 = arith.constant 1 : index
    %c0_2 = arith.constant 0 : index
    %c0_3 = arith.constant 0 : index
    %2 = vector.load %arg2[%c1, %c0_2, %c0_3] : memref<3x32x8xf32, #tpu.memory_space<vmem>>, vector<1x32x8xf32>
    %3 = vector.shape_cast %2 : vector<1x32x8xf32> to vector<32x8xf32>
    %cst = arith.constant dense<0.000000e+00> : vector<32x128xf32>
    %4 = tpu.matmul %3, %1, %cst {dimension_numbers = #tpu.dot_dimension_numbers<[1], [0], [0], [1], [0, 0, 1, 1], [], []>} : vector<32x8xf32>, vector<8x128xf32>, vector<32x128xf32> -> vector<32x128xf32>
    %c0_4 = arith.constant 0 : index
    %c0_5 = arith.constant 0 : index
    %c0_6 = arith.constant 0 : index
    %5 = vector.load %arg2[%c0_4, %c0_5, %c0_6] : memref<3x32x8xf32, #tpu.memory_space<vmem>>, vector<1x32x8xf32>
    %6 = vector.shape_cast %5 : vector<1x32x8xf32> to vector<32x8xf32>
    %7 = tpu.iota {dimensions = array<i32: 1>} : vector<8x128xi32>
    %c0_i32 = arith.constant 0 : i32
    %8 = vector.broadcast %c0_i32 : i32 to vector<8x128xi32>
    %9 = arith.cmpi sgt, %7, %8 : vector<8x128xi32>
    %c1_i32 = arith.constant 1 : i32
    %10 = tpu.dynamic_rotate %1 by %c1_i32 dim 1 : vector<8x128xf32>, i32 -> vector<8x128xf32>
    %cst_7 = arith.constant 0.000000e+00 : f32
    %11 = vector.broadcast %cst_7 : f32 to vector<8x128xf32>
    %12 = arith.select %9, %10, %11 : vector<8x128xi1>, vector<8x128xf32>
    %cst_8 = arith.constant dense<0.000000e+00> : vector<32x128xf32>
    %13 = tpu.matmul %6, %12, %cst_8 {dimension_numbers = #tpu.dot_dimension_numbers<[1], [0], [0], [1], [0, 0, 1, 1], [], []>} : vector<32x8xf32>, vector<8x128xf32>, vector<32x128xf32> -> vector<32x128xf32>
    %14 = arith.addf %4, %13 : vector<32x128xf32>
    %c2 = arith.constant 2 : index
    %c0_9 = arith.constant 0 : index
    %c0_10 = arith.constant 0 : index
    %15 = vector.load %arg2[%c2, %c0_9, %c0_10] : memref<3x32x8xf32, #tpu.memory_space<vmem>>, vector<1x32x8xf32>
    %16 = vector.shape_cast %15 : vector<1x32x8xf32> to vector<32x8xf32>
    %17 = tpu.iota {dimensions = array<i32: 1>} : vector<8x128xi32>
    %c127_i32 = arith.constant 127 : i32
    %18 = vector.broadcast %c127_i32 : i32 to vector<8x128xi32>
    %19 = arith.cmpi slt, %17, %18 : vector<8x128xi32>
    %c127_i32_11 = arith.constant 127 : i32
    %20 = tpu.dynamic_rotate %1 by %c127_i32_11 dim 1 : vector<8x128xf32>, i32 -> vector<8x128xf32>
    %cst_12 = arith.constant 0.000000e+00 : f32
    %21 = vector.broadcast %cst_12 : f32 to vector<8x128xf32>
    %22 = arith.select %19, %20, %21 : vector<8x128xi1>, vector<8x128xf32>
    %cst_13 = arith.constant dense<0.000000e+00> : vector<32x128xf32>
    %23 = tpu.matmul %16, %22, %cst_13 {dimension_numbers = #tpu.dot_dimension_numbers<[1], [0], [0], [1], [0, 0, 1, 1], [], []>} : vector<32x8xf32>, vector<8x128xf32>, vector<32x128xf32> -> vector<32x128xf32>
    %24 = arith.addf %14, %23 : vector<32x128xf32>
    %c0_14 = arith.constant 0 : index
    %c0_15 = arith.constant 0 : index
    %25 = vector.load %arg3[%c0_14, %c0_15] : memref<32x1xf32, #tpu.memory_space<vmem>>, vector<32x1xf32>
    %26 = vector.broadcast %25 : vector<32x1xf32> to vector<32x128xf32>
    %27 = arith.addf %24, %26 : vector<32x128xf32>
    %cst_16 = arith.constant 0.000000e+00 : f32
    %28 = vector.broadcast %cst_16 : f32 to vector<32x128xf32>
    %29 = arith.maximumf %27, %28 : vector<32x128xf32>
    %c1_17 = arith.constant 1 : index
    %c0_18 = arith.constant 0 : index
    %c0_19 = arith.constant 0 : index
    %30 = vector.load %arg4[%c1_17, %c0_18, %c0_19] : memref<3x32x32xf32, #tpu.memory_space<vmem>>, vector<1x32x32xf32>
    %31 = vector.shape_cast %30 : vector<1x32x32xf32> to vector<32x32xf32>
    %cst_20 = arith.constant dense<0.000000e+00> : vector<32x128xf32>
    %32 = tpu.matmul %31, %29, %cst_20 {dimension_numbers = #tpu.dot_dimension_numbers<[1], [0], [0], [1], [0, 0, 1, 1], [], []>} : vector<32x32xf32>, vector<32x128xf32>, vector<32x128xf32> -> vector<32x128xf32>
    %c0_21 = arith.constant 0 : index
    %c0_22 = arith.constant 0 : index
    %c0_23 = arith.constant 0 : index
    %33 = vector.load %arg4[%c0_21, %c0_22, %c0_23] : memref<3x32x32xf32, #tpu.memory_space<vmem>>, vector<1x32x32xf32>
    %34 = vector.shape_cast %33 : vector<1x32x32xf32> to vector<32x32xf32>
    %35 = tpu.iota {dimensions = array<i32: 1>} : vector<32x128xi32>
    %c0_i32_24 = arith.constant 0 : i32
    %36 = vector.broadcast %c0_i32_24 : i32 to vector<32x128xi32>
    %37 = arith.cmpi sgt, %35, %36 : vector<32x128xi32>
    %c1_i32_25 = arith.constant 1 : i32
    %38 = tpu.dynamic_rotate %29 by %c1_i32_25 dim 1 : vector<32x128xf32>, i32 -> vector<32x128xf32>
    %cst_26 = arith.constant 0.000000e+00 : f32
    %39 = vector.broadcast %cst_26 : f32 to vector<32x128xf32>
    %40 = arith.select %37, %38, %39 : vector<32x128xi1>, vector<32x128xf32>
    %cst_27 = arith.constant dense<0.000000e+00> : vector<32x128xf32>
    %41 = tpu.matmul %34, %40, %cst_27 {dimension_numbers = #tpu.dot_dimension_numbers<[1], [0], [0], [1], [0, 0, 1, 1], [], []>} : vector<32x32xf32>, vector<32x128xf32>, vector<32x128xf32> -> vector<32x128xf32>
    %42 = arith.addf %32, %41 : vector<32x128xf32>
    %c2_28 = arith.constant 2 : index
    %c0_29 = arith.constant 0 : index
    %c0_30 = arith.constant 0 : index
    %43 = vector.load %arg4[%c2_28, %c0_29, %c0_30] : memref<3x32x32xf32, #tpu.memory_space<vmem>>, vector<1x32x32xf32>
    %44 = vector.shape_cast %43 : vector<1x32x32xf32> to vector<32x32xf32>
    %45 = tpu.iota {dimensions = array<i32: 1>} : vector<32x128xi32>
    %c127_i32_31 = arith.constant 127 : i32
    %46 = vector.broadcast %c127_i32_31 : i32 to vector<32x128xi32>
    %47 = arith.cmpi slt, %45, %46 : vector<32x128xi32>
    %c127_i32_32 = arith.constant 127 : i32
    %48 = tpu.dynamic_rotate %29 by %c127_i32_32 dim 1 : vector<32x128xf32>, i32 -> vector<32x128xf32>
    %cst_33 = arith.constant 0.000000e+00 : f32
    %49 = vector.broadcast %cst_33 : f32 to vector<32x128xf32>
    %50 = arith.select %47, %48, %49 : vector<32x128xi1>, vector<32x128xf32>
    %cst_34 = arith.constant dense<0.000000e+00> : vector<32x128xf32>
    %51 = tpu.matmul %44, %50, %cst_34 {dimension_numbers = #tpu.dot_dimension_numbers<[1], [0], [0], [1], [0, 0, 1, 1], [], []>} : vector<32x32xf32>, vector<32x128xf32>, vector<32x128xf32> -> vector<32x128xf32>
    %52 = arith.addf %42, %51 : vector<32x128xf32>
    %c0_35 = arith.constant 0 : index
    %c0_36 = arith.constant 0 : index
    %53 = vector.load %arg5[%c0_35, %c0_36] : memref<32x1xf32, #tpu.memory_space<vmem>>, vector<32x1xf32>
    %54 = vector.broadcast %53 : vector<32x1xf32> to vector<32x128xf32>
    %55 = arith.addf %52, %54 : vector<32x128xf32>
    %c0_37 = arith.constant 0 : index
    %c0_38 = arith.constant 0 : index
    %56 = vector.load %arg6[%c0_37, %c0_38] : memref<32x32xf32, #tpu.memory_space<vmem>>, vector<32x32xf32>
    %cst_39 = arith.constant 0.000000e+00 : f32
    %57 = vector.broadcast %cst_39 : f32 to vector<32x128xf32>
    %58 = arith.maximumf %55, %57 : vector<32x128xf32>
    %cst_40 = arith.constant dense<0.000000e+00> : vector<32x128xf32>
    %59 = tpu.matmul %56, %58, %cst_40 {dimension_numbers = #tpu.dot_dimension_numbers<[1], [0], [0], [1], [0, 0, 1, 1], [], []>} : vector<32x32xf32>, vector<32x128xf32>, vector<32x128xf32> -> vector<32x128xf32>
    %c0_41 = arith.constant 0 : index
    %c0_42 = arith.constant 0 : index
    %60 = vector.load %arg7[%c0_41, %c0_42] : memref<32x1xf32, #tpu.memory_space<vmem>>, vector<32x1xf32>
    %61 = vector.broadcast %60 : vector<32x1xf32> to vector<32x128xf32>
    %62 = arith.addf %59, %61 : vector<32x128xf32>
    %63 = arith.addf %27, %62 : vector<32x128xf32>
    %cst_43 = arith.constant 0.000000e+00 : f32
    %64 = vector.broadcast %cst_43 : f32 to vector<32x128xf32>
    %65 = arith.maximumf %63, %64 : vector<32x128xf32>
    %c1_44 = arith.constant 1 : index
    %c0_45 = arith.constant 0 : index
    %c0_46 = arith.constant 0 : index
    %66 = vector.load %arg8[%c1_44, %c0_45, %c0_46] : memref<3x32x32xf32, #tpu.memory_space<vmem>>, vector<1x32x32xf32>
    %67 = vector.shape_cast %66 : vector<1x32x32xf32> to vector<32x32xf32>
    %cst_47 = arith.constant dense<0.000000e+00> : vector<32x128xf32>
    %68 = tpu.matmul %67, %65, %cst_47 {dimension_numbers = #tpu.dot_dimension_numbers<[1], [0], [0], [1], [0, 0, 1, 1], [], []>} : vector<32x32xf32>, vector<32x128xf32>, vector<32x128xf32> -> vector<32x128xf32>
    %c0_48 = arith.constant 0 : index
    %c0_49 = arith.constant 0 : index
    %c0_50 = arith.constant 0 : index
    %69 = vector.load %arg8[%c0_48, %c0_49, %c0_50] : memref<3x32x32xf32, #tpu.memory_space<vmem>>, vector<1x32x32xf32>
    %70 = vector.shape_cast %69 : vector<1x32x32xf32> to vector<32x32xf32>
    %71 = tpu.iota {dimensions = array<i32: 1>} : vector<32x128xi32>
    %c0_i32_51 = arith.constant 0 : i32
    %72 = vector.broadcast %c0_i32_51 : i32 to vector<32x128xi32>
    %73 = arith.cmpi sgt, %71, %72 : vector<32x128xi32>
    %c1_i32_52 = arith.constant 1 : i32
    %74 = tpu.dynamic_rotate %65 by %c1_i32_52 dim 1 : vector<32x128xf32>, i32 -> vector<32x128xf32>
    %cst_53 = arith.constant 0.000000e+00 : f32
    %75 = vector.broadcast %cst_53 : f32 to vector<32x128xf32>
    %76 = arith.select %73, %74, %75 : vector<32x128xi1>, vector<32x128xf32>
    %cst_54 = arith.constant dense<0.000000e+00> : vector<32x128xf32>
    %77 = tpu.matmul %70, %76, %cst_54 {dimension_numbers = #tpu.dot_dimension_numbers<[1], [0], [0], [1], [0, 0, 1, 1], [], []>} : vector<32x32xf32>, vector<32x128xf32>, vector<32x128xf32> -> vector<32x128xf32>
    %78 = arith.addf %68, %77 : vector<32x128xf32>
    %c2_55 = arith.constant 2 : index
    %c0_56 = arith.constant 0 : index
    %c0_57 = arith.constant 0 : index
    %79 = vector.load %arg8[%c2_55, %c0_56, %c0_57] : memref<3x32x32xf32, #tpu.memory_space<vmem>>, vector<1x32x32xf32>
    %80 = vector.shape_cast %79 : vector<1x32x32xf32> to vector<32x32xf32>
    %81 = tpu.iota {dimensions = array<i32: 1>} : vector<32x128xi32>
    %c127_i32_58 = arith.constant 127 : i32
    %82 = vector.broadcast %c127_i32_58 : i32 to vector<32x128xi32>
    %83 = arith.cmpi slt, %81, %82 : vector<32x128xi32>
    %c127_i32_59 = arith.constant 127 : i32
    %84 = tpu.dynamic_rotate %65 by %c127_i32_59 dim 1 : vector<32x128xf32>, i32 -> vector<32x128xf32>
    %cst_60 = arith.constant 0.000000e+00 : f32
    %85 = vector.broadcast %cst_60 : f32 to vector<32x128xf32>
    %86 = arith.select %83, %84, %85 : vector<32x128xi1>, vector<32x128xf32>
    %cst_61 = arith.constant dense<0.000000e+00> : vector<32x128xf32>
    %87 = tpu.matmul %80, %86, %cst_61 {dimension_numbers = #tpu.dot_dimension_numbers<[1], [0], [0], [1], [0, 0, 1, 1], [], []>} : vector<32x32xf32>, vector<32x128xf32>, vector<32x128xf32> -> vector<32x128xf32>
    %88 = arith.addf %78, %87 : vector<32x128xf32>
    %c0_62 = arith.constant 0 : index
    %c0_63 = arith.constant 0 : index
    %89 = vector.load %arg9[%c0_62, %c0_63] : memref<32x1xf32, #tpu.memory_space<vmem>>, vector<32x1xf32>
    %90 = vector.broadcast %89 : vector<32x1xf32> to vector<32x128xf32>
    %91 = arith.addf %88, %90 : vector<32x128xf32>
    %c0_64 = arith.constant 0 : index
    %c0_65 = arith.constant 0 : index
    %92 = vector.load %arg10[%c0_64, %c0_65] : memref<32x32xf32, #tpu.memory_space<vmem>>, vector<32x32xf32>
    %cst_66 = arith.constant 0.000000e+00 : f32
    %93 = vector.broadcast %cst_66 : f32 to vector<32x128xf32>
    %94 = arith.maximumf %91, %93 : vector<32x128xf32>
    %cst_67 = arith.constant dense<0.000000e+00> : vector<32x128xf32>
    %95 = tpu.matmul %92, %94, %cst_67 {dimension_numbers = #tpu.dot_dimension_numbers<[1], [0], [0], [1], [0, 0, 1, 1], [], []>} : vector<32x32xf32>, vector<32x128xf32>, vector<32x128xf32> -> vector<32x128xf32>
    %c0_68 = arith.constant 0 : index
    %c0_69 = arith.constant 0 : index
    %96 = vector.load %arg11[%c0_68, %c0_69] : memref<32x1xf32, #tpu.memory_space<vmem>>, vector<32x1xf32>
    %97 = vector.broadcast %96 : vector<32x1xf32> to vector<32x128xf32>
    %98 = arith.addf %95, %97 : vector<32x128xf32>
    %99 = arith.addf %63, %98 : vector<32x128xf32>
    %cst_70 = arith.constant 0.000000e+00 : f32
    %100 = vector.broadcast %cst_70 : f32 to vector<32x128xf32>
    %101 = arith.maximumf %99, %100 : vector<32x128xf32>
    %c1_71 = arith.constant 1 : index
    %c0_72 = arith.constant 0 : index
    %c0_73 = arith.constant 0 : index
    %102 = vector.load %arg12[%c1_71, %c0_72, %c0_73] : memref<3x32x32xf32, #tpu.memory_space<vmem>>, vector<1x32x32xf32>
    %103 = vector.shape_cast %102 : vector<1x32x32xf32> to vector<32x32xf32>
    %cst_74 = arith.constant dense<0.000000e+00> : vector<32x128xf32>
    %104 = tpu.matmul %103, %101, %cst_74 {dimension_numbers = #tpu.dot_dimension_numbers<[1], [0], [0], [1], [0, 0, 1, 1], [], []>} : vector<32x32xf32>, vector<32x128xf32>, vector<32x128xf32> -> vector<32x128xf32>
    %c0_75 = arith.constant 0 : index
    %c0_76 = arith.constant 0 : index
    %c0_77 = arith.constant 0 : index
    %105 = vector.load %arg12[%c0_75, %c0_76, %c0_77] : memref<3x32x32xf32, #tpu.memory_space<vmem>>, vector<1x32x32xf32>
    %106 = vector.shape_cast %105 : vector<1x32x32xf32> to vector<32x32xf32>
    %107 = tpu.iota {dimensions = array<i32: 1>} : vector<32x128xi32>
    %c0_i32_78 = arith.constant 0 : i32
    %108 = vector.broadcast %c0_i32_78 : i32 to vector<32x128xi32>
    %109 = arith.cmpi sgt, %107, %108 : vector<32x128xi32>
    %c1_i32_79 = arith.constant 1 : i32
    %110 = tpu.dynamic_rotate %101 by %c1_i32_79 dim 1 : vector<32x128xf32>, i32 -> vector<32x128xf32>
    %cst_80 = arith.constant 0.000000e+00 : f32
    %111 = vector.broadcast %cst_80 : f32 to vector<32x128xf32>
    %112 = arith.select %109, %110, %111 : vector<32x128xi1>, vector<32x128xf32>
    %cst_81 = arith.constant dense<0.000000e+00> : vector<32x128xf32>
    %113 = tpu.matmul %106, %112, %cst_81 {dimension_numbers = #tpu.dot_dimension_numbers<[1], [0], [0], [1], [0, 0, 1, 1], [], []>} : vector<32x32xf32>, vector<32x128xf32>, vector<32x128xf32> -> vector<32x128xf32>
    %114 = arith.addf %104, %113 : vector<32x128xf32>
    %c2_82 = arith.constant 2 : index
    %c0_83 = arith.constant 0 : index
    %c0_84 = arith.constant 0 : index
    %115 = vector.load %arg12[%c2_82, %c0_83, %c0_84] : memref<3x32x32xf32, #tpu.memory_space<vmem>>, vector<1x32x32xf32>
    %116 = vector.shape_cast %115 : vector<1x32x32xf32> to vector<32x32xf32>
    %117 = tpu.iota {dimensions = array<i32: 1>} : vector<32x128xi32>
    %c127_i32_85 = arith.constant 127 : i32
    %118 = vector.broadcast %c127_i32_85 : i32 to vector<32x128xi32>
    %119 = arith.cmpi slt, %117, %118 : vector<32x128xi32>
    %c127_i32_86 = arith.constant 127 : i32
    %120 = tpu.dynamic_rotate %101 by %c127_i32_86 dim 1 : vector<32x128xf32>, i32 -> vector<32x128xf32>
    %cst_87 = arith.constant 0.000000e+00 : f32
    %121 = vector.broadcast %cst_87 : f32 to vector<32x128xf32>
    %122 = arith.select %119, %120, %121 : vector<32x128xi1>, vector<32x128xf32>
    %cst_88 = arith.constant dense<0.000000e+00> : vector<32x128xf32>
    %123 = tpu.matmul %116, %122, %cst_88 {dimension_numbers = #tpu.dot_dimension_numbers<[1], [0], [0], [1], [0, 0, 1, 1], [], []>} : vector<32x32xf32>, vector<32x128xf32>, vector<32x128xf32> -> vector<32x128xf32>
    %124 = arith.addf %114, %123 : vector<32x128xf32>
    %c0_89 = arith.constant 0 : index
    %c0_90 = arith.constant 0 : index
    %125 = vector.load %arg13[%c0_89, %c0_90] : memref<32x1xf32, #tpu.memory_space<vmem>>, vector<32x1xf32>
    %126 = vector.broadcast %125 : vector<32x1xf32> to vector<32x128xf32>
    %127 = arith.addf %124, %126 : vector<32x128xf32>
    %c0_91 = arith.constant 0 : index
    %c0_92 = arith.constant 0 : index
    %128 = vector.load %arg14[%c0_91, %c0_92] : memref<32x32xf32, #tpu.memory_space<vmem>>, vector<32x32xf32>
    %cst_93 = arith.constant 0.000000e+00 : f32
    %129 = vector.broadcast %cst_93 : f32 to vector<32x128xf32>
    %130 = arith.maximumf %127, %129 : vector<32x128xf32>
    %cst_94 = arith.constant dense<0.000000e+00> : vector<32x128xf32>
    %131 = tpu.matmul %128, %130, %cst_94 {dimension_numbers = #tpu.dot_dimension_numbers<[1], [0], [0], [1], [0, 0, 1, 1], [], []>} : vector<32x32xf32>, vector<32x128xf32>, vector<32x128xf32> -> vector<32x128xf32>
    %c0_95 = arith.constant 0 : index
    %c0_96 = arith.constant 0 : index
    %132 = vector.load %arg15[%c0_95, %c0_96] : memref<32x1xf32, #tpu.memory_space<vmem>>, vector<32x1xf32>
    %133 = vector.broadcast %132 : vector<32x1xf32> to vector<32x128xf32>
    %134 = arith.addf %131, %133 : vector<32x128xf32>
    %135 = arith.addf %99, %134 : vector<32x128xf32>
    %c0_97 = arith.constant 0 : index
    %c0_98 = arith.constant 0 : index
    %136 = vector.load %arg17[%c0_97, %c0_98] : memref<16x1xf32, #tpu.memory_space<vmem>>, vector<16x1xf32>
    %c1_99 = arith.constant 1 : index
    %c0_100 = arith.constant 0 : index
    %c0_101 = arith.constant 0 : index
    %137 = vector.load %arg16[%c1_99, %c0_100, %c0_101] : memref<4x16x32xf32, #tpu.memory_space<vmem>>, vector<1x16x32xf32>
    %138 = vector.shape_cast %137 : vector<1x16x32xf32> to vector<16x32xf32>
    %cst_102 = arith.constant dense<0.000000e+00> : vector<16x128xf32>
    %139 = tpu.matmul %138, %135, %cst_102 {dimension_numbers = #tpu.dot_dimension_numbers<[1], [0], [0], [1], [0, 0, 1, 1], [], []>} : vector<16x32xf32>, vector<32x128xf32>, vector<16x128xf32> -> vector<16x128xf32>
    %c3 = arith.constant 3 : index
    %c0_103 = arith.constant 0 : index
    %c0_104 = arith.constant 0 : index
    %140 = vector.load %arg16[%c3, %c0_103, %c0_104] : memref<4x16x32xf32, #tpu.memory_space<vmem>>, vector<1x16x32xf32>
    %141 = vector.shape_cast %140 : vector<1x16x32xf32> to vector<16x32xf32>
    %142 = tpu.iota {dimensions = array<i32: 1>} : vector<32x128xi32>
    %c0_i32_105 = arith.constant 0 : i32
    %143 = vector.broadcast %c0_i32_105 : i32 to vector<32x128xi32>
    %144 = arith.cmpi sgt, %142, %143 : vector<32x128xi32>
    %c1_i32_106 = arith.constant 1 : i32
    %145 = tpu.dynamic_rotate %135 by %c1_i32_106 dim 1 : vector<32x128xf32>, i32 -> vector<32x128xf32>
    %cst_107 = arith.constant 0.000000e+00 : f32
    %146 = vector.broadcast %cst_107 : f32 to vector<32x128xf32>
    %147 = arith.select %144, %145, %146 : vector<32x128xi1>, vector<32x128xf32>
    %cst_108 = arith.constant dense<0.000000e+00> : vector<16x128xf32>
    %148 = tpu.matmul %141, %147, %cst_108 {dimension_numbers = #tpu.dot_dimension_numbers<[1], [0], [0], [1], [0, 0, 1, 1], [], []>} : vector<16x32xf32>, vector<32x128xf32>, vector<16x128xf32> -> vector<16x128xf32>
    %149 = arith.addf %139, %148 : vector<16x128xf32>
    %150 = vector.broadcast %136 : vector<16x1xf32> to vector<16x128xf32>
    %151 = arith.addf %149, %150 : vector<16x128xf32>
    %c2_109 = arith.constant 2 : index
    %c0_110 = arith.constant 0 : index
    %c0_111 = arith.constant 0 : index
    %152 = vector.load %arg16[%c2_109, %c0_110, %c0_111] : memref<4x16x32xf32, #tpu.memory_space<vmem>>, vector<1x16x32xf32>
    %153 = vector.shape_cast %152 : vector<1x16x32xf32> to vector<16x32xf32>
    %cst_112 = arith.constant dense<0.000000e+00> : vector<16x128xf32>
    %154 = tpu.matmul %153, %135, %cst_112 {dimension_numbers = #tpu.dot_dimension_numbers<[1], [0], [0], [1], [0, 0, 1, 1], [], []>} : vector<16x32xf32>, vector<32x128xf32>, vector<16x128xf32> -> vector<16x128xf32>
    %c0_113 = arith.constant 0 : index
    %c0_114 = arith.constant 0 : index
    %c0_115 = arith.constant 0 : index
    %155 = vector.load %arg16[%c0_113, %c0_114, %c0_115] : memref<4x16x32xf32, #tpu.memory_space<vmem>>, vector<1x16x32xf32>
    %156 = vector.shape_cast %155 : vector<1x16x32xf32> to vector<16x32xf32>
    %157 = tpu.iota {dimensions = array<i32: 1>} : vector<32x128xi32>
    %c127_i32_116 = arith.constant 127 : i32
    %158 = vector.broadcast %c127_i32_116 : i32 to vector<32x128xi32>
    %159 = arith.cmpi slt, %157, %158 : vector<32x128xi32>
    %c127_i32_117 = arith.constant 127 : i32
    %160 = tpu.dynamic_rotate %135 by %c127_i32_117 dim 1 : vector<32x128xf32>, i32 -> vector<32x128xf32>
    %cst_118 = arith.constant 0.000000e+00 : f32
    %161 = vector.broadcast %cst_118 : f32 to vector<32x128xf32>
    %162 = arith.select %159, %160, %161 : vector<32x128xi1>, vector<32x128xf32>
    %cst_119 = arith.constant dense<0.000000e+00> : vector<16x128xf32>
    %163 = tpu.matmul %156, %162, %cst_119 {dimension_numbers = #tpu.dot_dimension_numbers<[1], [0], [0], [1], [0, 0, 1, 1], [], []>} : vector<16x32xf32>, vector<32x128xf32>, vector<16x128xf32> -> vector<16x128xf32>
    %164 = arith.addf %154, %163 : vector<16x128xf32>
    %165 = vector.broadcast %136 : vector<16x1xf32> to vector<16x128xf32>
    %166 = arith.addf %164, %165 : vector<16x128xf32>
    %c0_120 = arith.constant 0 : index
    %c0_121 = arith.constant 0 : index
    %c0_122 = arith.constant 0 : index
    %167 = vector.load %arg18[%c0_120, %c0_121, %c0_122] : memref<1x32x128xf32, #tpu.memory_space<vmem>>, vector<1x16x128xf32>
    %168 = vector.shape_cast %167 : vector<1x16x128xf32> to vector<16x128xf32>
    %169 = vector.shape_cast %151 : vector<16x128xf32> to vector<1x16x128xf32>
    tpu.vector_store %arg18[%c0_120, %c0_121, %c0_122], %169 {strides = array<i32>} : memref<1x32x128xf32, #tpu.memory_space<vmem>>, vector<1x16x128xf32>,
    %c0_123 = arith.constant 0 : index
    %c16 = arith.constant 16 : index
    %c0_124 = arith.constant 0 : index
    %170 = vector.load %arg18[%c0_123, %c16, %c0_124] : memref<1x32x128xf32, #tpu.memory_space<vmem>>, vector<1x16x128xf32>
    %171 = vector.shape_cast %170 : vector<1x16x128xf32> to vector<16x128xf32>
    %172 = vector.shape_cast %166 : vector<16x128xf32> to vector<1x16x128xf32>
    tpu.vector_store %arg18[%c0_123, %c16, %c0_124], %172 {strides = array<i32>} : memref<1x32x128xf32, #tpu.memory_space<vmem>>, vector<1x16x128xf32>,
    return
  }
  func.func @transform_0(%arg0: i32) -> (i32, i32, i32) {
    %c0_i32 = arith.constant 0 : i32
    %c0_i32_0 = arith.constant 0 : i32
    %c0_i32_1 = arith.constant 0 : i32
    return %arg0, %c0_i32, %c0_i32_0 : i32, i32, i32
  }
  func.func @transform_1(%arg0: i32) -> (i32, i32, i32) {
    %c0_i32 = arith.constant 0 : i32
    %c0_i32_0 = arith.constant 0 : i32
    %c0_i32_1 = arith.constant 0 : i32
    %c0_i32_2 = arith.constant 0 : i32
    return %c0_i32, %c0_i32_0, %c0_i32_1 : i32, i32, i32
  }
  func.func @transform_2(%arg0: i32) -> (i32, i32) {
    %c0_i32 = arith.constant 0 : i32
    %c0_i32_0 = arith.constant 0 : i32
    %c0_i32_1 = arith.constant 0 : i32
    return %c0_i32, %c0_i32_0 : i32, i32
  }
  func.func @transform_3(%arg0: i32) -> (i32, i32, i32) {
    %c0_i32 = arith.constant 0 : i32
    %c0_i32_0 = arith.constant 0 : i32
    %c0_i32_1 = arith.constant 0 : i32
    %c0_i32_2 = arith.constant 0 : i32
    return %c0_i32, %c0_i32_0, %c0_i32_1 : i32, i32, i32
  }
  func.func @transform_4(%arg0: i32) -> (i32, i32) {
    %c0_i32 = arith.constant 0 : i32
    %c0_i32_0 = arith.constant 0 : i32
    %c0_i32_1 = arith.constant 0 : i32
    return %c0_i32, %c0_i32_0 : i32, i32
  }
  func.func @transform_5(%arg0: i32) -> (i32, i32) {
    %c0_i32 = arith.constant 0 : i32
    %c0_i32_0 = arith.constant 0 : i32
    %c0_i32_1 = arith.constant 0 : i32
    return %c0_i32, %c0_i32_0 : i32, i32
  }
  func.func @transform_6(%arg0: i32) -> (i32, i32) {
    %c0_i32 = arith.constant 0 : i32
    %c0_i32_0 = arith.constant 0 : i32
    %c0_i32_1 = arith.constant 0 : i32
    return %c0_i32, %c0_i32_0 : i32, i32
  }
  func.func @transform_7(%arg0: i32) -> (i32, i32, i32) {
    %c0_i32 = arith.constant 0 : i32
    %c0_i32_0 = arith.constant 0 : i32
    %c0_i32_1 = arith.constant 0 : i32
    %c0_i32_2 = arith.constant 0 : i32
    return %c0_i32, %c0_i32_0, %c0_i32_1 : i32, i32, i32
  }
  func.func @transform_8(%arg0: i32) -> (i32, i32) {
    %c0_i32 = arith.constant 0 : i32
    %c0_i32_0 = arith.constant 0 : i32
    %c0_i32_1 = arith.constant 0 : i32
    return %c0_i32, %c0_i32_0 : i32, i32
  }
  func.func @transform_9(%arg0: i32) -> (i32, i32) {
    %c0_i32 = arith.constant 0 : i32
    %c0_i32_0 = arith.constant 0 : i32
    %c0_i32_1 = arith.constant 0 : i32
    return %c0_i32, %c0_i32_0 : i32, i32
  }
  func.func @transform_10(%arg0: i32) -> (i32, i32) {
    %c0_i32 = arith.constant 0 : i32
    %c0_i32_0 = arith.constant 0 : i32
    %c0_i32_1 = arith.constant 0 : i32
    return %c0_i32, %c0_i32_0 : i32, i32
  }
  func.func @transform_11(%arg0: i32) -> (i32, i32, i32) {
    %c0_i32 = arith.constant 0 : i32
    %c0_i32_0 = arith.constant 0 : i32
    %c0_i32_1 = arith.constant 0 : i32
    %c0_i32_2 = arith.constant 0 : i32
    return %c0_i32, %c0_i32_0, %c0_i32_1 : i32, i32, i32
  }
  func.func @transform_12(%arg0: i32) -> (i32, i32) {
    %c0_i32 = arith.constant 0 : i32
    %c0_i32_0 = arith.constant 0 : i32
    %c0_i32_1 = arith.constant 0 : i32
    return %c0_i32, %c0_i32_0 : i32, i32
  }
  func.func @transform_13(%arg0: i32) -> (i32, i32) {
    %c0_i32 = arith.constant 0 : i32
    %c0_i32_0 = arith.constant 0 : i32
    %c0_i32_1 = arith.constant 0 : i32
    return %c0_i32, %c0_i32_0 : i32, i32
  }
  func.func @transform_14(%arg0: i32) -> (i32, i32) {
    %c0_i32 = arith.constant 0 : i32
    %c0_i32_0 = arith.constant 0 : i32
    %c0_i32_1 = arith.constant 0 : i32
    return %c0_i32, %c0_i32_0 : i32, i32
  }
  func.func @transform_15(%arg0: i32) -> (i32, i32, i32) {
    %c0_i32 = arith.constant 0 : i32
    %c0_i32_0 = arith.constant 0 : i32
    %c0_i32_1 = arith.constant 0 : i32
    %c0_i32_2 = arith.constant 0 : i32
    return %c0_i32, %c0_i32_0, %c0_i32_1 : i32, i32, i32
  }
  func.func @transform_16(%arg0: i32) -> (i32, i32) {
    %c0_i32 = arith.constant 0 : i32
    %c0_i32_0 = arith.constant 0 : i32
    %c0_i32_1 = arith.constant 0 : i32
    return %c0_i32, %c0_i32_0 : i32, i32
  }
  func.func @transform_17(%arg0: i32) -> (i32, i32, i32) {
    %c0_i32 = arith.constant 0 : i32
    %c0_i32_0 = arith.constant 0 : i32
    %c0_i32_1 = arith.constant 0 : i32
    return %arg0, %c0_i32, %c0_i32_0 : i32, i32, i32
  }
}

</mosaic_0001>

<llo_original>
// kernel: tpu_custom_call.1
$region0: #{tpu_custom_call.1}
  #allocation0 [shape = 'u32[]', space=smem, size = 0x4, offset = 0x4, fixed_abs, tag = 'smem constant byte address 0x4 - core index']
  #allocation1 [shape = 'u32[144,128]{1,0:T(1,128)}', space=vmem, size = 0x12000, scoped, tag = 'internal scratch']
  %s0 = inlined_call_operand.hbm [shape: f32[2,8,128], index: 0, kind: input, shape index: {}]
  %s1 = inlined_call_operand.vmem [shape: f32[3,32,8], index: 1, kind: input, shape index: {}]
  %s2 = inlined_call_operand.vmem [shape: f32[32,1], index: 2, kind: input, shape index: {}]
  %s3 = inlined_call_operand.vmem [shape: f32[3,32,32], index: 3, kind: input, shape index: {}]
  %s4 = inlined_call_operand.vmem [shape: f32[32,1], index: 4, kind: input, shape index: {}]
  %s5 = inlined_call_operand.hbm [shape: f32[32,32], index: 5, kind: input, shape index: {}]
  %s6 = inlined_call_operand.vmem [shape: f32[32,1], index: 6, kind: input, shape index: {}]
  %s7 = inlined_call_operand.vmem [shape: f32[3,32,32], index: 7, kind: input, shape index: {}]
  %s8 = inlined_call_operand.vmem [shape: f32[32,1], index: 8, kind: input, shape index: {}]
  %s9 = inlined_call_operand.vmem [shape: f32[32,32], index: 9, kind: input, shape index: {}]
  %s10 = inlined_call_operand.vmem [shape: f32[32,1], index: 10, kind: input, shape index: {}]
  %s11 = inlined_call_operand.vmem [shape: f32[3,32,32], index: 11, kind: input, shape index: {}]
  %s12 = inlined_call_operand.vmem [shape: f32[32,1], index: 12, kind: input, shape index: {}]
  %s13 = inlined_call_operand.hbm [shape: f32[32,32], index: 13, kind: input, shape index: {}]
  %s14 = inlined_call_operand.vmem [shape: f32[32,1], index: 14, kind: input, shape index: {}]
  %s15 = inlined_call_operand.vmem [shape: f32[4,16,32], index: 15, kind: input, shape index: {}]
  %s16 = inlined_call_operand.vmem [shape: f32[16,1], index: 16, kind: input, shape index: {}]
  %s17 = inlined_call_operand.hbm [shape: f32[2,32,128], index: 17, kind: output, shape index: {}]
  %s18 = sld [smem:[#allocation0]]
  $region113: #{tpu_custom_call.1} parent=0
    _
  %s20 = ssub.s32 1, %s18
  %s21 = scalar_select 0, %s20, %s18
  $region1: #{tpu_custom_call.1} parent=0
    #allocation2 [shape = 'u8[8192]{0}', space=vmem, size = 0x2000, scoped, tag = 'input window, operand 0']
    #allocation3 [shape = 's32[2]{0}', space=sflag, size = 0x8, scoped, tag = 'scoped memory for tpu_custom_call.1']
    #allocation4 [shape = 's32[2]{0}', space=sflag, size = 0x8, scoped, tag = 'scoped memory for tpu_custom_call.1']
    #allocation5 [shape = 'u8[16384]{0}', space=vmem, size = 0x4000, scoped, tag = 'input window, operand 5, single buffered']
    #allocation6 [shape = 's32[1]{0}', space=sflag, size = 0x4, scoped, tag = 'scoped memory for tpu_custom_call.1']
    #allocation7 [shape = 'u8[16384]{0}', space=vmem, size = 0x4000, scoped, tag = 'input window, operand 13, single buffered']
    #allocation8 [shape = 'u8[32768]{0}', space=vmem, size = 0x8000, scoped, tag = 'output window, operand 0']
    %22 = vsyncpa [#allocation3], 0
    %s23 = scalar_lea.sflag [#allocation3], 1
    %24 = vsyncpa %s23, 0
    %25 = vsyncpa [#allocation6], 0
    %26 = vsyncpa [#allocation4], 0
    %s27 = scalar_lea.sflag [#allocation4], 1
    %28 = vsyncpa %s27, 0
    loop: start=0, step=1, limit=4
    $region2: #{tpu_custom_call.1} parent=1 // loop_pre_header
      _
    $region3: #{tpu_custom_call.1} parent=1 // loop_header
      %s30 = sphi 0, %s34
      %p31 = scmp.ge.s32.totalorder %s30, 4
      %s40 = sphi 0, %s42
      %s43 = sphi 0, %s40
      %s44 = sphi 0, %s43
      %s60 = sphi 0, %s44
      %s64 = sphi 0, %s64
      %s66 = sphi 0, %s64
      %s67 = sphi 0, %s66
      %s81 = sphi 0, %s67
      %s85 = sphi 0, %s85
      %s87 = sphi 0, %s85
      %s88 = sphi 0, %s87
      %s102 = sphi 0, %s88
      %s106 = sphi 0, %s106
      %s108 = sphi 0, %s106
      %s109 = sphi 0, %s108
      %s123 = sphi 0, %s109
      %s127 = sphi 0, %s127
      %s129 = sphi 0, %s127
      %s130 = sphi 0, %s129
      %s144 = sphi 0, %s130
      %s148 = sphi 0, %s148
      %s150 = sphi 0, %s148
      %s151 = sphi 0, %s150
      %s165 = sphi 0, %s151
      %s169 = sphi 0, %s169
      %s171 = sphi 0, %s169
      %s172 = sphi 0, %s171
      %s186 = sphi 0, %s172
      %s190 = sphi 0, %s190
      %s192 = sphi 0, %s190
      %s193 = sphi 0, %s192
      %s207 = sphi 0, %s193
      %s211 = sphi 0, %s211
      %s213 = sphi 0, %s211
      %s214 = sphi 0, %s213
      %s228 = sphi 0, %s214
      %s232 = sphi 0, %s232
      %s234 = sphi 0, %s232
      %s235 = sphi 0, %s234
      %s249 = sphi 0, %s235
      %s253 = sphi 0, %s253
      %s255 = sphi 0, %s253
      %s256 = sphi 0, %s255
      %s270 = sphi 0, %s256
      %s274 = sphi 0, %s274
      %s276 = sphi 0, %s274
      %s277 = sphi 0, %s276
      %s291 = sphi 0, %s277
      %s295 = sphi 0, %s295
      %s297 = sphi 0, %s295
      %s298 = sphi 0, %s297
      %s312 = sphi 0, %s298
      %s316 = sphi 0, %s316
      %s318 = sphi 0, %s316
      %s319 = sphi 0, %s318
      %s333 = sphi 0, %s319
      %s337 = sphi 0, %s337
      %s339 = sphi 0, %s337
      %s340 = sphi 0, %s339
      %s354 = sphi 0, %s340
      %s358 = sphi 0, %s358
      %s360 = sphi 0, %s358
      %s361 = sphi 0, %s360
      %s375 = sphi 0, %s361
      %s379 = sphi 0, %s379
      %s381 = sphi 0, %s379
      %s382 = sphi 0, %s381
      %s396 = sphi 0, %s382
      %s402 = sphi 0, %s404
      %s405 = sphi 0, %s402
      %s406 = sphi 0, %s405
      %s422 = sphi 0, %s406
    $region4: #{tpu_custom_call.1} parent=1 // loop_header_branch
      %33 = sbr.rel (%p31) target = $region8
    $region5: #{tpu_custom_call.1} parent=1 // loop_body
      %s35 = ssub.s32 %s30, 1
      %s36 = ssub.s32 %s30, 2
      %s37 = sadd.s32 %s30, 1
      %s38 = ssub.s32 %s30, %s37
      %p39 = scmp.eq.s32.totalorder %s38, 0
      %s41 = sadd.s32 %s40, 1
      %s42 = scalar_select %p39, %s40, %s41
      %p45 = pneg %p39
      %p46 = scmp.eq.s32.totalorder %s30, 1
      %p47 = por %p45, %p46
      %p48 = scmp.ne.s32.totalorder %s40, %s43
      %p49 = scmp.eq.s32.totalorder %s30, 0
      %p50 = por %p48, %p49
      %p51 = scmp.ne.s32.totalorder %s40, %s43
      %p52 = scmp.eq.s32.totalorder %s35, 1
      %p53 = por %p51, %p52
      %p54 = scmp.ne.s32.totalorder %s43, %s44
      %p55 = scmp.eq.s32.totalorder %s35, 0
      %p56 = por %p54, %p55
      %p57 = scmp.ne.s32.totalorder %s43, %s44
      %p58 = scmp.eq.s32.totalorder %s36, 1
      %p59 = por %p57, %p58
      %p61 = scmp.ne.s32.totalorder %s44, %s60
      %p62 = scmp.eq.s32.totalorder %s36, 0
      %p63 = por %p61, %p62
      %s65 = sadd.s32 %s64, 1
      %p68 = scmp.eq.s32.totalorder %s30, 1
      %p69 = scmp.ne.s32.totalorder %s64, %s66
      %p70 = scmp.eq.s32.totalorder %s30, 0
      %p71 = por %p69, %p70
      %p72 = scmp.ne.s32.totalorder %s64, %s66
      %p73 = scmp.eq.s32.totalorder %s35, 1
      %p74 = por %p72, %p73
      %p75 = scmp.ne.s32.totalorder %s66, %s67
      %p76 = scmp.eq.s32.totalorder %s35, 0
      %p77 = por %p75, %p76
      %p78 = scmp.ne.s32.totalorder %s66, %s67
      %p79 = scmp.eq.s32.totalorder %s36, 1
      %p80 = por %p78, %p79
      %p82 = scmp.ne.s32.totalorder %s67, %s81
      %p83 = scmp.eq.s32.totalorder %s36, 0
      %p84 = por %p82, %p83
      %s86 = sadd.s32 %s85, 1
      %p89 = scmp.eq.s32.totalorder %s30, 1
      %p90 = scmp.ne.s32.totalorder %s85, %s87
      %p91 = scmp.eq.s32.totalorder %s30, 0
      %p92 = por %p90, %p91
      %p93 = scmp.ne.s32.totalorder %s85, %s87
      %p94 = scmp.eq.s32.totalorder %s35, 1
      %p95 = por %p93, %p94
      %p96 = scmp.ne.s32.totalorder %s87, %s88
      %p97 = scmp.eq.s32.totalorder %s35, 0
      %p98 = por %p96, %p97
      %p99 = scmp.ne.s32.totalorder %s87, %s88
      %p100 = scmp.eq.s32.totalorder %s36, 1
      %p101 = por %p99, %p100
      %p103 = scmp.ne.s32.totalorder %s88, %s102
      %p104 = scmp.eq.s32.totalorder %s36, 0
      %p105 = por %p103, %p104
      %s107 = sadd.s32 %s106, 1
      %p110 = scmp.eq.s32.totalorder %s30, 1
      %p111 = scmp.ne.s32.totalorder %s106, %s108
      %p112 = scmp.eq.s32.totalorder %s30, 0
      %p113 = por %p111, %p112
      %p114 = scmp.ne.s32.totalorder %s106, %s108
      %p115 = scmp.eq.s32.totalorder %s35, 1
      %p116 = por %p114, %p115
      %p117 = scmp.ne.s32.totalorder %s108, %s109
      %p118 = scmp.eq.s32.totalorder %s35, 0
      %p119 = por %p117, %p118
      %p120 = scmp.ne.s32.totalorder %s108, %s109
      %p121 = scmp.eq.s32.totalorder %s36, 1
      %p122 = por %p120, %p121
      %p124 = scmp.ne.s32.totalorder %s109, %s123
      %p125 = scmp.eq.s32.totalorder %s36, 0
      %p126 = por %p124, %p125
      %s128 = sadd.s32 %s127, 1
      %p131 = scmp.eq.s32.totalorder %s30, 1
      %p132 = scmp.ne.s32.totalorder %s127, %s129
      %p133 = scmp.eq.s32.totalorder %s30, 0
      %p134 = por %p132, %p133
      %p135 = scmp.ne.s32.totalorder %s127, %s129
      %p136 = scmp.eq.s32.totalorder %s35, 1
      %p137 = por %p135, %p136
      %p138 = scmp.ne.s32.totalorder %s129, %s130
      %p139 = scmp.eq.s32.totalorder %s35, 0
      %p140 = por %p138, %p139
      %p141 = scmp.ne.s32.totalorder %s129, %s130
      %p142 = scmp.eq.s32.totalorder %s36, 1
      %p143 = por %p141, %p142
      %p145 = scmp.ne.s32.totalorder %s130, %s144
      %p146 = scmp.eq.s32.totalorder %s36, 0
      %p147 = por %p145, %p146
      %s149 = sadd.s32 %s148, 1
      %p152 = scmp.eq.s32.totalorder %s30, 1
      %p153 = scmp.ne.s32.totalorder %s148, %s150
      %p154 = scmp.eq.s32.totalorder %s30, 0
      %p155 = por %p153, %p154
      %p156 = scmp.ne.s32.totalorder %s148, %s150
      %p157 = scmp.eq.s32.totalorder %s35, 1
      %p158 = por %p156, %p157
      %p159 = scmp.ne.s32.totalorder %s150, %s151
      %p160 = scmp.eq.s32.totalorder %s35, 0
      %p161 = por %p159, %p160
      %p162 = scmp.ne.s32.totalorder %s150, %s151
      %p163 = scmp.eq.s32.totalorder %s36, 1
      %p164 = por %p162, %p163
      %p166 = scmp.ne.s32.totalorder %s151, %s165
      %p167 = scmp.eq.s32.totalorder %s36, 0
      %p168 = por %p166, %p167
      %s170 = sadd.s32 %s169, 1
      %p173 = scmp.eq.s32.totalorder %s30, 1
      %p174 = scmp.ne.s32.totalorder %s169, %s171
      %p175 = scmp.eq.s32.totalorder %s30, 0
      %p176 = por %p174, %p175
      %p177 = scmp.ne.s32.totalorder %s169, %s171
      %p178 = scmp.eq.s32.totalorder %s35, 1
      %p179 = por %p177, %p178
      %p180 = scmp.ne.s32.totalorder %s171, %s172
      %p181 = scmp.eq.s32.totalorder %s35, 0
      %p182 = por %p180, %p181
      %p183 = scmp.ne.s32.totalorder %s171, %s172
      %p184 = scmp.eq.s32.totalorder %s36, 1
      %p185 = por %p183, %p184
      %p187 = scmp.ne.s32.totalorder %s172, %s186
      %p188 = scmp.eq.s32.totalorder %s36, 0
      %p189 = por %p187, %p188
      %s191 = sadd.s32 %s190, 1
      %p194 = scmp.eq.s32.totalorder %s30, 1
      %p195 = scmp.ne.s32.totalorder %s190, %s192
      %p196 = scmp.eq.s32.totalorder %s30, 0
      %p197 = por %p195, %p196
      %p198 = scmp.ne.s32.totalorder %s190, %s192
      %p199 = scmp.eq.s32.totalorder %s35, 1
      %p200 = por %p198, %p199
      %p201 = scmp.ne.s32.totalorder %s192, %s193
      %p202 = scmp.eq.s32.totalorder %s35, 0
      %p203 = por %p201, %p202
      %p204 = scmp.ne.s32.totalorder %s192, %s193
      %p205 = scmp.eq.s32.totalorder %s36, 1
      %p206 = por %p204, %p205
      %p208 = scmp.ne.s32.totalorder %s193, %s207
      %p209 = scmp.eq.s32.totalorder %s36, 0
      %p210 = por %p208, %p209
      %s212 = sadd.s32 %s211, 1
      %p215 = scmp.eq.s32.totalorder %s30, 1
      %p216 = scmp.ne.s32.totalorder %s211, %s213
      %p217 = scmp.eq.s32.totalorder %s30, 0
      %p218 = por %p216, %p217
      %p219 = scmp.ne.s32.totalorder %s211, %s213
      %p220 = scmp.eq.s32.totalorder %s35, 1
      %p221 = por %p219, %p220
      %p222 = scmp.ne.s32.totalorder %s213, %s214
      %p223 = scmp.eq.s32.totalorder %s35, 0
      %p224 = por %p222, %p223
      %p225 = scmp.ne.s32.totalorder %s213, %s214
      %p226 = scmp.eq.s32.totalorder %s36, 1
      %p227 = por %p225, %p226
      %p229 = scmp.ne.s32.totalorder %s214, %s228
      %p230 = scmp.eq.s32.totalorder %s36, 0
      %p231 = por %p229, %p230
      %s233 = sadd.s32 %s232, 1
      %p236 = scmp.eq.s32.totalorder %s30, 1
      %p237 = scmp.ne.s32.totalorder %s232, %s234
      %p238 = scmp.eq.s32.totalorder %s30, 0
      %p239 = por %p237, %p238
      %p240 = scmp.ne.s32.totalorder %s232, %s234
      %p241 = scmp.eq.s32.totalorder %s35, 1
      %p242 = por %p240, %p241
      %p243 = scmp.ne.s32.totalorder %s234, %s235
      %p244 = scmp.eq.s32.totalorder %s35, 0
      %p245 = por %p243, %p244
      %p246 = scmp.ne.s32.totalorder %s234, %s235
      %p247 = scmp.eq.s32.totalorder %s36, 1
      %p248 = por %p246, %p247
      %p250 = scmp.ne.s32.totalorder %s235, %s249
      %p251 = scmp.eq.s32.totalorder %s36, 0
      %p252 = por %p250, %p251
      %s254 = sadd.s32 %s253, 1
      %p257 = scmp.eq.s32.totalorder %s30, 1
      %p258 = scmp.ne.s32.totalorder %s253, %s255
      %p259 = scmp.eq.s32.totalorder %s30, 0
      %p260 = por %p258, %p259
      %p261 = scmp.ne.s32.totalorder %s253, %s255
      %p262 = scmp.eq.s32.totalorder %s35, 1
      %p263 = por %p261, %p262
      %p264 = scmp.ne.s32.totalorder %s255, %s256
      %p265 = scmp.eq.s32.totalorder %s35, 0
      %p266 = por %p264, %p265
      %p267 = scmp.ne.s32.totalorder %s255, %s256
      %p268 = scmp.eq.s32.totalorder %s36, 1
      %p269 = por %p267, %p268
      %p271 = scmp.ne.s32.totalorder %s256, %s270
      %p272 = scmp.eq.s32.totalorder %s36, 0
      %p273 = por %p271, %p272
      %s275 = sadd.s32 %s274, 1
      %p278 = scmp.eq.s32.totalorder %s30, 1
      %p279 = scmp.ne.s32.totalorder %s274, %s276
      %p280 = scmp.eq.s32.totalorder %s30, 0
      %p281 = por %p279, %p280
      %p282 = scmp.ne.s32.totalorder %s274, %s276
      %p283 = scmp.eq.s32.totalorder %s35, 1
      %p284 = por %p282, %p283
      %p285 = scmp.ne.s32.totalorder %s276, %s277
      %p286 = scmp.eq.s32.totalorder %s35, 0
      %p287 = por %p285, %p286
      %p288 = scmp.ne.s32.totalorder %s276, %s277
      %p289 = scmp.eq.s32.totalorder %s36, 1
      %p290 = por %p288, %p289
      %p292 = scmp.ne.s32.totalorder %s277, %s291
      %p293 = scmp.eq.s32.totalorder %s36, 0
      %p294 = por %p292, %p293
      %s296 = sadd.s32 %s295, 1
      %p299 = scmp.eq.s32.totalorder %s30, 1
      %p300 = scmp.ne.s32.totalorder %s295, %s297
      %p301 = scmp.eq.s32.totalorder %s30, 0
      %p302 = por %p300, %p301
      %p303 = scmp.ne.s32.totalorder %s295, %s297
      %p304 = scmp.eq.s32.totalorder %s35, 1
      %p305 = por %p303, %p304
      %p306 = scmp.ne.s32.totalorder %s297, %s298
      %p307 = scmp.eq.s32.totalorder %s35, 0
      %p308 = por %p306, %p307
      %p309 = scmp.ne.s32.totalorder %s297, %s298
      %p310 = scmp.eq.s32.totalorder %s36, 1
      %p311 = por %p309, %p310
      %p313 = scmp.ne.s32.totalorder %s298, %s312
      %p314 = scmp.eq.s32.totalorder %s36, 0
      %p315 = por %p313, %p314
      %s317 = sadd.s32 %s316, 1
      %p320 = scmp.eq.s32.totalorder %s30, 1
      %p321 = scmp.ne.s32.totalorder %s316, %s318
      %p322 = scmp.eq.s32.totalorder %s30, 0
      %p323 = por %p321, %p322
      %p324 = scmp.ne.s32.totalorder %s316, %s318
      %p325 = scmp.eq.s32.totalorder %s35, 1
      %p326 = por %p324, %p325
      %p327 = scmp.ne.s32.totalorder %s318, %s319
      %p328 = scmp.eq.s32.totalorder %s35, 0
      %p329 = por %p327, %p328
      %p330 = scmp.ne.s32.totalorder %s318, %s319
      %p331 = scmp.eq.s32.totalorder %s36, 1
      %p332 = por %p330, %p331
      %p334 = scmp.ne.s32.totalorder %s319, %s333
      %p335 = scmp.eq.s32.totalorder %s36, 0
      %p336 = por %p334, %p335
      %s338 = sadd.s32 %s337, 1
      %p341 = scmp.eq.s32.totalorder %s30, 1
      %p342 = scmp.ne.s32.totalorder %s337, %s339
      %p343 = scmp.eq.s32.totalorder %s30, 0
      %p344 = por %p342, %p343
      %p345 = scmp.ne.s32.totalorder %s337, %s339
      %p346 = scmp.eq.s32.totalorder %s35, 1
      %p347 = por %p345, %p346
      %p348 = scmp.ne.s32.totalorder %s339, %s340
      %p349 = scmp.eq.s32.totalorder %s35, 0
      %p350 = por %p348, %p349
      %p351 = scmp.ne.s32.totalorder %s339, %s340
      %p352 = scmp.eq.s32.totalorder %s36, 1
      %p353 = por %p351, %p352
      %p355 = scmp.ne.s32.totalorder %s340, %s354
      %p356 = scmp.eq.s32.totalorder %s36, 0
      %p357 = por %p355, %p356
      %s359 = sadd.s32 %s358, 1
      %p362 = scmp.eq.s32.totalorder %s30, 1
      %p363 = scmp.ne.s32.totalorder %s358, %s360
      %p364 = scmp.eq.s32.totalorder %s30, 0
      %p365 = por %p363, %p364
      %p366 = scmp.ne.s32.totalorder %s358, %s360
      %p367 = scmp.eq.s32.totalorder %s35, 1
      %p368 = por %p366, %p367
      %p369 = scmp.ne.s32.totalorder %s360, %s361
      %p370 = scmp.eq.s32.totalorder %s35, 0
      %p371 = por %p369, %p370
      %p372 = scmp.ne.s32.totalorder %s360, %s361
      %p373 = scmp.eq.s32.totalorder %s36, 1
      %p374 = por %p372, %p373
      %p376 = scmp.ne.s32.totalorder %s361, %s375
      %p377 = scmp.eq.s32.totalorder %s36, 0
      %p378 = por %p376, %p377
      %s380 = sadd.s32 %s379, 1
      %p383 = scmp.eq.s32.totalorder %s30, 1
      %p384 = scmp.ne.s32.totalorder %s379, %s381
      %p385 = scmp.eq.s32.totalorder %s30, 0
      %p386 = por %p384, %p385
      %p387 = scmp.ne.s32.totalorder %s379, %s381
      %p388 = scmp.eq.s32.totalorder %s35, 1
      %p389 = por %p387, %p388
      %p390 = scmp.ne.s32.totalorder %s381, %s382
      %p391 = scmp.eq.s32.totalorder %s35, 0
      %p392 = por %p390, %p391
      %p393 = scmp.ne.s32.totalorder %s381, %s382
      %p394 = scmp.eq.s32.totalorder %s36, 1
      %p395 = por %p393, %p394
      %p397 = scmp.ne.s32.totalorder %s382, %s396
      %p398 = scmp.eq.s32.totalorder %s36, 0
      %p399 = por %p397, %p398
      %s400 = ssub.s32 %s30, %s37
      %p401 = scmp.eq.s32.totalorder %s400, 0
      %s403 = sadd.s32 %s402, 1
      %s404 = scalar_select %p401, %s402, %s403
      %p407 = pneg %p401
      %p408 = scmp.eq.s32.totalorder %s30, 1
      %p409 = por %p407, %p408
      %p410 = scmp.ne.s32.totalorder %s402, %s405
      %p411 = scmp.eq.s32.totalorder %s30, 0
      %p412 = por %p410, %p411
      %p413 = scmp.ne.s32.totalorder %s402, %s405
      %p414 = scmp.eq.s32.totalorder %s35, 1
      %p415 = por %p413, %p414
      %p416 = scmp.ne.s32.totalorder %s405, %s406
      %p417 = scmp.eq.s32.totalorder %s35, 0
      %p418 = por %p416, %p417
      %p419 = scmp.ne.s32.totalorder %s405, %s406
      %p420 = scmp.eq.s32.totalorder %s36, 1
      %p421 = por %p419, %p420
      %p423 = scmp.ne.s32.totalorder %s406, %s422
      %p424 = scmp.eq.s32.totalorder %s36, 0
      %p425 = por %p423, %p424
      %p426 = scmp.le.s32.totalorder 1, %s30
      %p427 = scmp.lt.s32.totalorder %s30, 3
      %p428 = pnand %p426, %p427
      %p429 = pneg %p428
      // Predicated region
      $region9: #{tpu_custom_call.1} parent=5 // pred_check
        _
      $region10: #{tpu_custom_call.1} parent=5 // pred_check_branch
        %431 = sbr.rel (%p428) target = $region12
      $region11: #{tpu_custom_call.1} parent=5 // pred_region
        %s432 = ssub.s32 %s30, 1
        // Predicated region
        $region13: #{tpu_custom_call.1} parent=11 // pred_check
          %p433 = pneg %p77
        $region14: #{tpu_custom_call.1} parent=11 // pred_check_branch
          %435 = sbr.rel (%p433) target = $region16
        $region15: #{tpu_custom_call.1} parent=11 // pred_region
          _
        $region16: #{tpu_custom_call.1} parent=11 // pred_fallthru
          _
        // Predicated region
        $region17: #{tpu_custom_call.1} parent=11 // pred_check
          %p436 = pneg %p98
        $region18: #{tpu_custom_call.1} parent=11 // pred_check_branch
          %438 = sbr.rel (%p436) target = $region20
        $region19: #{tpu_custom_call.1} parent=11 // pred_region
          _
        $region20: #{tpu_custom_call.1} parent=11 // pred_fallthru
          _
        // Predicated region
        $region21: #{tpu_custom_call.1} parent=11 // pred_check
          %p439 = pneg %p119
        $region22: #{tpu_custom_call.1} parent=11 // pred_check_branch
          %441 = sbr.rel (%p439) target = $region24
        $region23: #{tpu_custom_call.1} parent=11 // pred_region
          _
        $region24: #{tpu_custom_call.1} parent=11 // pred_fallthru
          _
        // Predicated region
        $region25: #{tpu_custom_call.1} parent=11 // pred_check
          %p442 = pneg %p140
        $region26: #{tpu_custom_call.1} parent=11 // pred_check_branch
          %444 = sbr.rel (%p442) target = $region28
        $region27: #{tpu_custom_call.1} parent=11 // pred_region
          _
        $region28: #{tpu_custom_call.1} parent=11 // pred_fallthru
          _
        // Predicated region
        $region29: #{tpu_custom_call.1} parent=11 // pred_check
          %p445 = pneg %p161
        $region30: #{tpu_custom_call.1} parent=11 // pred_check_branch
          %447 = sbr.rel (%p445) target = $region32
        $region31: #{tpu_custom_call.1} parent=11 // pred_region
          %s449 = ssub.s32 512, 512
          %450 = vsyncadd [#allocation6], %s449
          %s451 = sshll.u32 [#allocation5], 4
          %s452 = int_to_ptr.vmem [resolvable:$true] %s451
          %457 = dma.hbm_to_vmem [thread:$0]  %s5, 512, %s452, [#allocation6], 128, 128, 8
        $region32: #{tpu_custom_call.1} parent=11 // pred_fallthru
          _
        // Predicated region
        $region33: #{tpu_custom_call.1} parent=11 // pred_check
          %p458 = pneg %p182
        $region34: #{tpu_custom_call.1} parent=11 // pred_check_branch
          %460 = sbr.rel (%p458) target = $region36
        $region35: #{tpu_custom_call.1} parent=11 // pred_region
          _
        $region36: #{tpu_custom_call.1} parent=11 // pred_fallthru
          _
        // Predicated region
        $region37: #{tpu_custom_call.1} parent=11 // pred_check
          %p461 = pneg %p203
        $region38: #{tpu_custom_call.1} parent=11 // pred_check_branch
          %463 = sbr.rel (%p461) target = $region40
        $region39: #{tpu_custom_call.1} parent=11 // pred_region
          _
        $region40: #{tpu_custom_call.1} parent=11 // pred_fallthru
          _
        // Predicated region
        $region41: #{tpu_custom_call.1} parent=11 // pred_check
          %p464 = pneg %p224
        $region42: #{tpu_custom_call.1} parent=11 // pred_check_branch
          %466 = sbr.rel (%p464) target = $region44
        $region43: #{tpu_custom_call.1} parent=11 // pred_region
          _
        $region44: #{tpu_custom_call.1} parent=11 // pred_fallthru
          _
        // Predicated region
        $region45: #{tpu_custom_call.1} parent=11 // pred_check
          %p467 = pneg %p245
        $region46: #{tpu_custom_call.1} parent=11 // pred_check_branch
          %469 = sbr.rel (%p467) target = $region48
        $region47: #{tpu_custom_call.1} parent=11 // pred_region
          _
        $region48: #{tpu_custom_call.1} parent=11 // pred_fallthru
          _
        // Predicated region
        $region49: #{tpu_custom_call.1} parent=11 // pred_check
          %p470 = pneg %p266
        $region50: #{tpu_custom_call.1} parent=11 // pred_check_branch
          %472 = sbr.rel (%p470) target = $region52
        $region51: #{tpu_custom_call.1} parent=11 // pred_region
          _
        $region52: #{tpu_custom_call.1} parent=11 // pred_fallthru
          _
        // Predicated region
        $region53: #{tpu_custom_call.1} parent=11 // pred_check
          %p473 = pneg %p287
        $region54: #{tpu_custom_call.1} parent=11 // pred_check_branch
          %475 = sbr.rel (%p473) target = $region56
        $region55: #{tpu_custom_call.1} parent=11 // pred_region
          _
        $region56: #{tpu_custom_call.1} parent=11 // pred_fallthru
          _
        // Predicated region
        $region57: #{tpu_custom_call.1} parent=11 // pred_check
          %p476 = pneg %p308
        $region58: #{tpu_custom_call.1} parent=11 // pred_check_branch
          %478 = sbr.rel (%p476) target = $region60
        $region59: #{tpu_custom_call.1} parent=11 // pred_region
          _
        $region60: #{tpu_custom_call.1} parent=11 // pred_fallthru
          _
        // Predicated region
        $region61: #{tpu_custom_call.1} parent=11 // pred_check
          %p479 = pneg %p329
        $region62: #{tpu_custom_call.1} parent=11 // pred_check_branch
          %481 = sbr.rel (%p479) target = $region64
        $region63: #{tpu_custom_call.1} parent=11 // pred_region
          %s483 = ssub.s32 512, 512
          %484 = vsyncadd [#allocation6], %s483
          %s485 = sshll.u32 [#allocation7], 4
          %s486 = int_to_ptr.vmem [resolvable:$true] %s485
          %491 = dma.hbm_to_vmem [thread:$0]  %s13, 512, %s486, [#allocation6], 128, 128, 8
        $region64: #{tpu_custom_call.1} parent=11 // pred_fallthru
          _
        // Predicated region
        $region65: #{tpu_custom_call.1} parent=11 // pred_check
          %p492 = pneg %p350
        $region66: #{tpu_custom_call.1} parent=11 // pred_check_branch
          %494 = sbr.rel (%p492) target = $region68
        $region67: #{tpu_custom_call.1} parent=11 // pred_region
          _
        $region68: #{tpu_custom_call.1} parent=11 // pred_fallthru
          _
        // Predicated region
        $region69: #{tpu_custom_call.1} parent=11 // pred_check
          %p495 = pneg %p371
        $region70: #{tpu_custom_call.1} parent=11 // pred_check_branch
          %497 = sbr.rel (%p495) target = $region72
        $region71: #{tpu_custom_call.1} parent=11 // pred_region
          _
        $region72: #{tpu_custom_call.1} parent=11 // pred_fallthru
          _
        // Predicated region
        $region73: #{tpu_custom_call.1} parent=11 // pred_check
          %p498 = pneg %p392
        $region74: #{tpu_custom_call.1} parent=11 // pred_check_branch
          %500 = sbr.rel (%p498) target = $region76
        $region75: #{tpu_custom_call.1} parent=11 // pred_region
          _
        $region76: #{tpu_custom_call.1} parent=11 // pred_fallthru
          _
      $region12: #{tpu_custom_call.1} parent=5 // pred_fallthru
        _
      %p501 = scmp.lt.s32.totalorder %s30, 2
      // Predicated region
      $region77: #{tpu_custom_call.1} parent=5 // pred_check
        %p502 = pneg %p501
      $region78: #{tpu_custom_call.1} parent=5 // pred_check_branch
        %504 = sbr.rel (%p502) target = $region80
      $region79: #{tpu_custom_call.1} parent=5 // pred_region
        // Predicated region
        $region81: #{tpu_custom_call.1} parent=79 // pred_check
          %p505 = pneg %p50
        $region82: #{tpu_custom_call.1} parent=79 // pred_check_branch
          %507 = sbr.rel (%p505) target = $region84
        $region83: #{tpu_custom_call.1} parent=79 // pred_region
          %s508 = sand.u32 %s40, 1
          %s509 = scalar_lea.sflag [#allocation3], %s508
          %s510 = sand.u32 %s40, 1
          %s511 = smul.addr %s510, 8
          %s512 = scalar_lea.vmem [#allocation2], %s511
          %s514 = ssub.s32 128, 128
          %515 = vsyncadd %s509, %s514
          %s516 = smul.addr %s30, 128
          %s517 = scalar_lea.hbm %s0, %s516
          %s519 = sshll.u32 %s512, 4
          %s520 = int_to_ptr.vmem [resolvable:$true] %s519
          %522 = dma.hbm_to_vmem [thread:$0]  %s517, 128, %s520, %s509
        $region84: #{tpu_custom_call.1} parent=79 // pred_fallthru
          _
      $region80: #{tpu_custom_call.1} parent=5 // pred_fallthru
        _
      %p523 = scmp.le.s32.totalorder 1, %s30
      %p524 = scmp.lt.s32.totalorder %s30, 3
      %p525 = pnand %p523, %p524
      %p526 = pneg %p525
      // Predicated region
      $region85: #{tpu_custom_call.1} parent=5 // pred_check
        _
      $region86: #{tpu_custom_call.1} parent=5 // pred_check_branch
        %528 = sbr.rel (%p525) target = $region88
      $region87: #{tpu_custom_call.1} parent=5 // pred_region
        %s529 = ssub.s32 %s30, 1
        %s530 = sand.u32 %s43, 1
        %s531 = scalar_lea.sflag [#allocation3], %s530
        %s532 = sand.u32 %s43, 1
        %s533 = smul.addr %s532, 8
        %s534 = scalar_lea.vmem [#allocation2], %s533
        // Predicated region
        $region89: #{tpu_custom_call.1} parent=87 // pred_check
          %p535 = pneg %p56
        $region90: #{tpu_custom_call.1} parent=87 // pred_check_branch
          %537 = sbr.rel (%p535) target = $region92
        $region91: #{tpu_custom_call.1} parent=87 // pred_region
          %538 = dma.done %s531, 128
        $region92: #{tpu_custom_call.1} parent=87 // pred_fallthru
          _
        // Predicated region
        $region93: #{tpu_custom_call.1} parent=87 // pred_check
          %p539 = pneg %p161
        $region94: #{tpu_custom_call.1} parent=87 // pred_check_branch
          %541 = sbr.rel (%p539) target = $region96
        $region95: #{tpu_custom_call.1} parent=87 // pred_region
          %542 = dma.done [#allocation6], 512
        $region96: #{tpu_custom_call.1} parent=87 // pred_fallthru
          _
        // Predicated region
        $region97: #{tpu_custom_call.1} parent=87 // pred_check
          %p543 = pneg %p329
        $region98: #{tpu_custom_call.1} parent=87 // pred_check_branch
          %545 = sbr.rel (%p543) target = $region100
        $region99: #{tpu_custom_call.1} parent=87 // pred_region
          %546 = dma.done [#allocation6], 512
        $region100: #{tpu_custom_call.1} parent=87 // pred_fallthru
          _
        %s547 = sand.u32 %s43, 1
        %s548 = scalar_lea.sflag [#allocation3], %s547
        %s549 = sand.u32 %s43, 1
        %s550 = smul.addr %s549, 8
        %s551 = scalar_lea.vmem [#allocation2], %s550
        %p552 = pneg %p56
        %p553 = pneg %p53
        %p554 = pneg %p77
        %p555 = pneg %p74
        %p556 = pneg %p98
        %p557 = pneg %p95
        %p558 = pneg %p119
        %p559 = pneg %p116
        %p560 = pneg %p140
        %p561 = pneg %p137
        %p562 = pneg %p161
        %p563 = pneg %p158
        %p564 = pneg %p182
        %p565 = pneg %p179
        %p566 = pneg %p203
        %p567 = pneg %p200
        %p568 = pneg %p224
        %p569 = pneg %p221
        %p570 = pneg %p245
        %p571 = pneg %p242
        %p572 = pneg %p266
        %p573 = pneg %p263
        %p574 = pneg %p287
        %p575 = pneg %p284
        %p576 = pneg %p308
        %p577 = pneg %p305
        %p578 = pneg %p329
        %p579 = pneg %p326
        %p580 = pneg %p350
        %p581 = pneg %p347
        %p582 = pneg %p371
        %p583 = pneg %p368
        %p584 = pneg %p392
        %p585 = pneg %p389
        %p586 = pneg %p418
        %p587 = pneg %p415
        %s588 = sand.u32 %s405, 1
        %s589 = scalar_lea.sflag [#allocation4], %s588
        %s590 = sand.u32 %s405, 1
        %s591 = smul.addr %s590, 32
        %s592 = scalar_lea.vmem [#allocation8], %s591
        %v593 = vld [vmem:[%s534] sm:$0xff]
        %s594 = scalar_lea.vmem %s1, 32
        %v595 = vld [vmem:[%s594] sm:$0xff]
        %v596 = vld [vmem:[%s594 + $0x8] sm:$0xff]
        %v597 = vld [vmem:[%s594 + $0x10] sm:$0xff]
        %v598 = vld [vmem:[%s594 + $0x18] sm:$0xff]
        %v599 = vld [vmem:[%s1] sm:$0xff]
        %v600 = vld [vmem:[%s1 + $0x8] sm:$0xff]
        %v601 = vld [vmem:[%s1 + $0x10] sm:$0xff]
        %v602 = vld [vmem:[%s1 + $0x18] sm:$0xff]
        %v603 = vlaneseq
        %v604 = vand.u32 %v603, 127
        %vm605 = vcmp.gt.s32.totalorder %v604, 0
        %606 = vrot.lane.b32.xlu0 %v593, 1
        %v607 = vpop.permute.xlu0 %606
        %v608 = vsel %vm605, %v607, 0.0
        %vm609 = vcmask 64512
        %v611 = vsel %vm609, %v599, 0
        %v614 = vsel %vm609, %v600, 0
        %v617 = vsel %vm609, %v601, 0
        %v620 = vsel %vm609, %v602, 0
        %622 = vmatprep.subr.mxu0 0.0
        %623 = vmatpush1.msra.mxu0 %v608
        %624 = vmatprep.subr.mxu0 0.0
        %625 = vmatpush1.msra.mxu0 0.0
        %626 = vmatprep.subr.mxu0 0.0
        %627 = vmatpush1.msra.mxu0 0.0
        %628 = vmatprep.subr.mxu0 0.0
        %629 = vmatpush1.msra.mxu0 0.0
        %630 = vmatprep.subr.mxu0 0.0
        %631 = vmatpush1.msra.mxu0 0.0
        %632 = vmatprep.subr.mxu0 0.0
        %633 = vmatpush1.msra.mxu0 0.0
        %634 = vmatprep.subr.mxu0 0.0
        %635 = vmatpush1.msra.mxu0 0.0
        %636 = vmatprep.subr.mxu0 0.0
        %637 = vmatpush1.msra.mxu0 0.0
        %638 = vmatprep.subr.mxu0 0.0
        %639 = vmatpush1.msra.mxu0 0.0
        %640 = vmatprep.subr.mxu0 0.0
        %641 = vmatpush1.msra.mxu0 0.0
        %642 = vmatprep.subr.mxu0 0.0
        %643 = vmatpush1.msra.mxu0 0.0
        %644 = vmatprep.subr.mxu0 0.0
        %645 = vmatpush1.msra.mxu0 0.0
        %646 = vmatprep.subr.mxu0 0.0
        %647 = vmatpush1.msra.mxu0 0.0
        %648 = vmatprep.subr.mxu0 0.0
        %649 = vmatpush1.msra.mxu0 0.0
        %650 = vmatprep.subr.mxu0 0.0
        %651 = vmatpush1.msra.mxu0 0.0
        %652 = vmatprep.subr.mxu0 0.0
        %653 = vmatpush1.msra.mxu0 0.0
        %654 = vmatprep.subr.mxu0 0.0
        %655 = vmatpush1.msra.mxu0 0.0
        %656 = vmatprep.subr.mxu0 0.0
        %657 = vmatpush1.msra.mxu0 0.0
        %658 = vmatprep.subr.mxu0 0.0
        %659 = vmatpush1.msra.mxu0 0.0
        %660 = vmatprep.subr.mxu0 0.0
        %661 = vmatpush1.msra.mxu0 0.0
        %662 = vmatprep.subr.mxu0 0.0
        %663 = vmatpush1.msra.mxu0 0.0
        %664 = vmatprep.subr.mxu0 0.0
        %665 = vmatpush1.msra.mxu0 0.0
        %666 = vmatprep.subr.mxu0 0.0
        %667 = vmatpush1.msra.mxu0 0.0
        %668 = vmatprep.subr.mxu0 0.0
        %669 = vmatpush1.msra.mxu0 0.0
        %670 = vmatprep.subr.mxu0 0.0
        %671 = vmatpush1.msra.mxu0 0.0
        %672 = vmatprep.subr.mxu0 0.0
        %673 = vmatpush1.msra.mxu0 0.0
        %674 = vmatprep.subr.mxu0 0.0
        %675 = vmatpush1.msra.mxu0 0.0
        %676 = vmatprep.subr.mxu0 0.0
        %677 = vmatpush1.msra.mxu0 0.0
        %678 = vmatprep.subr.mxu0 0.0
        %679 = vmatpush1.msra.mxu0 0.0
        %680 = vmatprep.subr.mxu0 0.0
        %681 = vmatpush1.msra.mxu0 0.0
        %682 = vmatprep.subr.mxu0 0.0
        %683 = vmatpush1.msra.mxu0 0.0
        %684 = vmatprep.subr.mxu0 0.0
        %685 = vmatpush1.msra.mxu0 0.0
        %686 = vmatprep.mubr.f32.mxu0 0.0
        %687 = vmatmul.mubr.f32.gmra.mrb[0].mxu0 %v611
        %v688 = vpop.f32.mrb[0].mxu0
        %v689 = vadd.f32 0.0, %v688
        %v690 = vpop.f32.mrb[0].mxu0
        %691 = vmatprep.mubr.f32.mxu0 0.0
        %692 = vmatmul.mubr.f32.gmra.mrb[0].mxu0 %v614
        %v693 = vpop.f32.mrb[0].mxu0
        %v694 = vadd.f32 0.0, %v693
        %v695 = vpop.f32.mrb[0].mxu0
        %696 = vmatprep.mubr.f32.mxu0 0.0
        %697 = vmatmul.mubr.f32.gmra.mrb[0].mxu0 %v617
        %v698 = vpop.f32.mrb[0].mxu0
        %v699 = vadd.f32 0.0, %v698
        %v700 = vpop.f32.mrb[0].mxu0
        %701 = vmatprep.mubr.f32.mxu0 0.0
        %702 = vmatmul.mubr.f32.gmra.mrb[0].mxu0 %v620
        %v703 = vpop.f32.mrb[0].mxu0
        %v704 = vadd.f32 0.0, %v703
        %v705 = vpop.f32.mrb[0].mxu0
        %706 = vdwg.mxu0
        %v708 = vsel %vm609, %v595, 0
        %v711 = vsel %vm609, %v596, 0
        %v714 = vsel %vm609, %v597, 0
        %v717 = vsel %vm609, %v598, 0
        %719 = vmatprep.subr.mxu0 0.0
        %720 = vmatpush1.msra.mxu0 %v593
        %721 = vmatprep.subr.mxu0 0.0
        %722 = vmatpush1.msra.mxu0 0.0
        %723 = vmatprep.subr.mxu0 0.0
        %724 = vmatpush1.msra.mxu0 0.0
        %725 = vmatprep.subr.mxu0 0.0
        %726 = vmatpush1.msra.mxu0 0.0
        %727 = vmatprep.subr.mxu0 0.0
        %728 = vmatpush1.msra.mxu0 0.0
        %729 = vmatprep.subr.mxu0 0.0
        %730 = vmatpush1.msra.mxu0 0.0
        %731 = vmatprep.subr.mxu0 0.0
        %732 = vmatpush1.msra.mxu0 0.0
        %733 = vmatprep.subr.mxu0 0.0
        %734 = vmatpush1.msra.mxu0 0.0
        %735 = vmatprep.subr.mxu0 0.0
        %736 = vmatpush1.msra.mxu0 0.0
        %737 = vmatprep.subr.mxu0 0.0
        %738 = vmatpush1.msra.mxu0 0.0
        %739 = vmatprep.subr.mxu0 0.0
        %740 = vmatpush1.msra.mxu0 0.0
        %741 = vmatprep.subr.mxu0 0.0
        %742 = vmatpush1.msra.mxu0 0.0
        %743 = vmatprep.subr.mxu0 0.0
        %744 = vmatpush1.msra.mxu0 0.0
        %745 = vmatprep.subr.mxu0 0.0
        %746 = vmatpush1.msra.mxu0 0.0
        %747 = vmatprep.subr.mxu0 0.0
        %748 = vmatpush1.msra.mxu0 0.0
        %749 = vmatprep.subr.mxu0 0.0
        %750 = vmatpush1.msra.mxu0 0.0
        %751 = vmatprep.subr.mxu0 0.0
        %752 = vmatpush1.msra.mxu0 0.0
        %753 = vmatprep.subr.mxu0 0.0
        %754 = vmatpush1.msra.mxu0 0.0
        %755 = vmatprep.subr.mxu0 0.0
        %756 = vmatpush1.msra.mxu0 0.0
        %757 = vmatprep.subr.mxu0 0.0
        %758 = vmatpush1.msra.mxu0 0.0
        %759 = vmatprep.subr.mxu0 0.0
        %760 = vmatpush1.msra.mxu0 0.0
        %761 = vmatprep.subr.mxu0 0.0
        %762 = vmatpush1.msra.mxu0 0.0
        %763 = vmatprep.subr.mxu0 0.0
        %764 = vmatpush1.msra.mxu0 0.0
        %765 = vmatprep.subr.mxu0 0.0
        %766 = vmatpush1.msra.mxu0 0.0
        %767 = vmatprep.subr.mxu0 0.0
        %768 = vmatpush1.msra.mxu0 0.0
        %769 = vmatprep.subr.mxu0 0.0
        %770 = vmatpush1.msra.mxu0 0.0
        %771 = vmatprep.subr.mxu0 0.0
        %772 = vmatpush1.msra.mxu0 0.0
        %773 = vmatprep.subr.mxu0 0.0
        %774 = vmatpush1.msra.mxu0 0.0
        %775 = vmatprep.subr.mxu0 0.0
        %776 = vmatpush1.msra.mxu0 0.0
        %777 = vmatprep.subr.mxu0 0.0
        %778 = vmatpush1.msra.mxu0 0.0
        %779 = vmatprep.subr.mxu0 0.0
        %780 = vmatpush1.msra.mxu0 0.0
        %781 = vmatprep.subr.mxu0 0.0
        %782 = vmatpush1.msra.mxu0 0.0
        %783 = vmatprep.mubr.f32.mxu0 0.0
        %784 = vmatmul.mubr.f32.gmra.mrb[0].mxu0 %v708
        %v785 = vpop.f32.mrb[0].mxu0
        %v786 = vadd.f32 %v689, %v785
        %v787 = vpop.f32.mrb[0].mxu0
        %788 = vmatprep.mubr.f32.mxu0 0.0
        %789 = vmatmul.mubr.f32.gmra.mrb[0].mxu0 %v711
        %v790 = vpop.f32.mrb[0].mxu0
        %v791 = vadd.f32 %v694, %v790
        %v792 = vpop.f32.mrb[0].mxu0
        %793 = vmatprep.mubr.f32.mxu0 0.0
        %794 = vmatmul.mubr.f32.gmra.mrb[0].mxu0 %v714
        %v795 = vpop.f32.mrb[0].mxu0
        %v796 = vadd.f32 %v699, %v795
        %v797 = vpop.f32.mrb[0].mxu0
        %798 = vmatprep.mubr.f32.mxu0 0.0
        %799 = vmatmul.mubr.f32.gmra.mrb[0].mxu0 %v717
        %v800 = vpop.f32.mrb[0].mxu0
        %v801 = vadd.f32 %v704, %v800
        %v802 = vpop.f32.mrb[0].mxu0
        %803 = vdwg.mxu0
        %s804 = scalar_lea.vmem %s1, 64
        %v805 = vld [vmem:[%s804] sm:$0xff]
        %v806 = vld [vmem:[%s804 + $0x8] sm:$0xff]
        %v807 = vld [vmem:[%s804 + $0x10] sm:$0xff]
        %v808 = vld [vmem:[%s804 + $0x18] sm:$0xff]
        %vm809 = vcmp.lt.s32.totalorder %v604, 127
        %810 = vrot.lane.b32.xlu0 %v593, 127
        %v811 = vpop.permute.xlu0 %810
        %v812 = vsel %vm809, %v811, 0.0
        %v814 = vsel %vm609, %v805, 0
        %v817 = vsel %vm609, %v806, 0
        %v820 = vsel %vm609, %v807, 0
        %v823 = vsel %vm609, %v808, 0
        %825 = vmatprep.subr.mxu0 0.0
        %826 = vmatpush1.msra.mxu0 %v812
        %827 = vmatprep.subr.mxu0 0.0
        %828 = vmatpush1.msra.mxu0 0.0
        %829 = vmatprep.subr.mxu0 0.0
        %830 = vmatpush1.msra.mxu0 0.0
        %831 = vmatprep.subr.mxu0 0.0
        %832 = vmatpush1.msra.mxu0 0.0
        %833 = vmatprep.subr.mxu0 0.0
        %834 = vmatpush1.msra.mxu0 0.0
        %835 = vmatprep.subr.mxu0 0.0
        %836 = vmatpush1.msra.mxu0 0.0
        %837 = vmatprep.subr.mxu0 0.0
        %838 = vmatpush1.msra.mxu0 0.0
        %839 = vmatprep.subr.mxu0 0.0
        %840 = vmatpush1.msra.mxu0 0.0
        %841 = vmatprep.subr.mxu0 0.0
        %842 = vmatpush1.msra.mxu0 0.0
        %843 = vmatprep.subr.mxu0 0.0
        %844 = vmatpush1.msra.mxu0 0.0
        %845 = vmatprep.subr.mxu0 0.0
        %846 = vmatpush1.msra.mxu0 0.0
        %847 = vmatprep.subr.mxu0 0.0
        %848 = vmatpush1.msra.mxu0 0.0
        %849 = vmatprep.subr.mxu0 0.0
        %850 = vmatpush1.msra.mxu0 0.0
        %851 = vmatprep.subr.mxu0 0.0
        %852 = vmatpush1.msra.mxu0 0.0
        %853 = vmatprep.subr.mxu0 0.0
        %854 = vmatpush1.msra.mxu0 0.0
        %855 = vmatprep.subr.mxu0 0.0
        %856 = vmatpush1.msra.mxu0 0.0
        %857 = vmatprep.subr.mxu0 0.0
        %858 = vmatpush1.msra.mxu0 0.0
        %859 = vmatprep.subr.mxu0 0.0
        %860 = vmatpush1.msra.mxu0 0.0
        %861 = vmatprep.subr.mxu0 0.0
        %862 = vmatpush1.msra.mxu0 0.0
        %863 = vmatprep.subr.mxu0 0.0
        %864 = vmatpush1.msra.mxu0 0.0
        %865 = vmatprep.subr.mxu0 0.0
        %866 = vmatpush1.msra.mxu0 0.0
        %867 = vmatprep.subr.mxu0 0.0
        %868 = vmatpush1.msra.mxu0 0.0
        %869 = vmatprep.subr.mxu0 0.0
        %870 = vmatpush1.msra.mxu0 0.0
        %871 = vmatprep.subr.mxu0 0.0
        %872 = vmatpush1.msra.mxu0 0.0
        %873 = vmatprep.subr.mxu0 0.0
        %874 = vmatpush1.msra.mxu0 0.0
        %875 = vmatprep.subr.mxu0 0.0
        %876 = vmatpush1.msra.mxu0 0.0
        %877 = vmatprep.subr.mxu0 0.0
        %878 = vmatpush1.msra.mxu0 0.0
        %879 = vmatprep.subr.mxu0 0.0
        %880 = vmatpush1.msra.mxu0 0.0
        %881 = vmatprep.subr.mxu0 0.0
        %882 = vmatpush1.msra.mxu0 0.0
        %883 = vmatprep.subr.mxu0 0.0
        %884 = vmatpush1.msra.mxu0 0.0
        %885 = vmatprep.subr.mxu0 0.0
        %886 = vmatpush1.msra.mxu0 0.0
        %887 = vmatprep.subr.mxu0 0.0
        %888 = vmatpush1.msra.mxu0 0.0
        %889 = vmatprep.mubr.f32.mxu0 0.0
        %890 = vmatmul.mubr.f32.gmra.mrb[0].mxu0 %v814
        %v891 = vpop.f32.mrb[0].mxu0
        %v892 = vadd.f32 0.0, %v891
        %v893 = vpop.f32.mrb[0].mxu0
        %894 = vmatprep.mubr.f32.mxu0 0.0
        %895 = vmatmul.mubr.f32.gmra.mrb[0].mxu0 %v817
        %v896 = vpop.f32.mrb[0].mxu0
        %v897 = vadd.f32 0.0, %v896
        %v898 = vpop.f32.mrb[0].mxu0
        %899 = vmatprep.mubr.f32.mxu0 0.0
        %900 = vmatmul.mubr.f32.gmra.mrb[0].mxu0 %v820
        %v901 = vpop.f32.mrb[0].mxu0
        %v902 = vadd.f32 0.0, %v901
        %v903 = vpop.f32.mrb[0].mxu0
        %904 = vmatprep.mubr.f32.mxu0 0.0
        %905 = vmatmul.mubr.f32.gmra.mrb[0].mxu0 %v823
        %v906 = vpop.f32.mrb[0].mxu0
        %v907 = vadd.f32 0.0, %v906
        %v908 = vpop.f32.mrb[0].mxu0
        %909 = vdwg.mxu0
        %v910 = vadd.f32 %v786, %v892
        %v911 = vadd.f32 %v791, %v897
        %v912 = vadd.f32 %v796, %v902
        %v913 = vadd.f32 %v801, %v907
        %v914 = vld [vmem:[%s2] sm:$0xff]
        %v915 = vld [vmem:[%s2 + $0x8] sm:$0xff]
        %v916 = vld [vmem:[%s2 + $0x10] sm:$0xff]
        %v917 = vld [vmem:[%s2 + $0x18] sm:$0xff]
        %919 = vset.pattern.permute.xlu0 0
        %920 = vperm.xlu0 %919, %v914
        %v921 = vpop.permute.xlu0 %920
        %924 = vset.pattern.permute.xlu0 0
        %925 = vperm.xlu0 %924, %v915
        %v926 = vpop.permute.xlu0 %925
        %929 = vset.pattern.permute.xlu0 0
        %930 = vperm.xlu0 %929, %v916
        %v931 = vpop.permute.xlu0 %930
        %934 = vset.pattern.permute.xlu0 0
        %935 = vperm.xlu0 %934, %v917
        %v936 = vpop.permute.xlu0 %935
        %v938 = vadd.f32 %v910, %v921
        %v939 = vadd.f32 %v911, %v926
        %v940 = vadd.f32 %v912, %v931
        %v941 = vadd.f32 %v913, %v936
        %v942 = vmax.f32 %v938, 0.0
        %v943 = vmax.f32 %v939, 0.0
        %v944 = vmax.f32 %v940, 0.0
        %v945 = vmax.f32 %v941, 0.0
        %s946 = scalar_lea.vmem %s3, 32
        %v947 = vld [vmem:[%s946] sm:$0xff]
        %v948 = vld [vmem:[%s946 + $0x8] sm:$0xff]
        %v949 = vld [vmem:[%s946 + $0x10] sm:$0xff]
        %v950 = vld [vmem:[%s946 + $0x18] sm:$0xff]
        %v951 = vld [vmem:[%s3] sm:$0xff]
        %v952 = vld [vmem:[%s3 + $0x8] sm:$0xff]
        %v953 = vld [vmem:[%s3 + $0x10] sm:$0xff]
        %v954 = vld [vmem:[%s3 + $0x18] sm:$0xff]
        %955 = vrot.lane.b32.xlu0 %v942, 1
        %v956 = vpop.permute.xlu0 %955
        %957 = vrot.lane.b32.xlu0 %v943, 1
        %v958 = vpop.permute.xlu0 %957
        %959 = vrot.lane.b32.xlu0 %v944, 1
        %v960 = vpop.permute.xlu0 %959
        %961 = vrot.lane.b32.xlu0 %v945, 1
        %v962 = vpop.permute.xlu0 %961
        %v963 = vsel %vm605, %v956, 0.0
        %v964 = vsel %vm605, %v958, 0.0
        %v965 = vsel %vm605, %v960, 0.0
        %v966 = vsel %vm605, %v962, 0.0
        %vm967 = vcmask 261120
        %v969 = vsel %vm967, %v951, 0
        %v972 = vsel %vm967, %v952, 0
        %v975 = vsel %vm967, %v953, 0
        %v978 = vsel %vm967, %v954, 0
        %980 = vmatprep.subr.mxu0 0.0
        %981 = vmatpush1.msra.mxu0 %v963
        %982 = vmatprep.subr.mxu0 0.0
        %983 = vmatpush1.msra.mxu0 %v964
        %984 = vmatprep.subr.mxu0 0.0
        %985 = vmatpush1.msra.mxu0 %v965
        %986 = vmatprep.subr.mxu0 0.0
        %987 = vmatpush1.msra.mxu0 %v966
        %988 = vmatprep.subr.mxu0 0.0
        %989 = vmatpush1.msra.mxu0 0.0
        %990 = vmatprep.subr.mxu0 0.0
        %991 = vmatpush1.msra.mxu0 0.0
        %992 = vmatprep.subr.mxu0 0.0
        %993 = vmatpush1.msra.mxu0 0.0
        %994 = vmatprep.subr.mxu0 0.0
        %995 = vmatpush1.msra.mxu0 0.0
        %996 = vmatprep.subr.mxu0 0.0
        %997 = vmatpush1.msra.mxu0 0.0
        %998 = vmatprep.subr.mxu0 0.0
        %999 = vmatpush1.msra.mxu0 0.0
        %1000 = vmatprep.subr.mxu0 0.0
        %1001 = vmatpush1.msra.mxu0 0.0
        %1002 = vmatprep.subr.mxu0 0.0
        %1003 = vmatpush1.msra.mxu0 0.0
        %1004 = vmatprep.subr.mxu0 0.0
        %1005 = vmatpush1.msra.mxu0 0.0
        %1006 = vmatprep.subr.mxu0 0.0
        %1007 = vmatpush1.msra.mxu0 0.0
        %1008 = vmatprep.subr.mxu0 0.0
        %1009 = vmatpush1.msra.mxu0 0.0
        %1010 = vmatprep.subr.mxu0 0.0
        %1011 = vmatpush1.msra.mxu0 0.0
        %1012 = vmatprep.subr.mxu0 0.0
        %1013 = vmatpush1.msra.mxu0 0.0
        %1014 = vmatprep.subr.mxu0 0.0
        %1015 = vmatpush1.msra.mxu0 0.0
        %1016 = vmatprep.subr.mxu0 0.0
        %1017 = vmatpush1.msra.mxu0 0.0
        %1018 = vmatprep.subr.mxu0 0.0
        %1019 = vmatpush1.msra.mxu0 0.0
        %1020 = vmatprep.subr.mxu0 0.0
        %1021 = vmatpush1.msra.mxu0 0.0
        %1022 = vmatprep.subr.mxu0 0.0
        %1023 = vmatpush1.msra.mxu0 0.0
        %1024 = vmatprep.subr.mxu0 0.0
        %1025 = vmatpush1.msra.mxu0 0.0
        %1026 = vmatprep.subr.mxu0 0.0
        %1027 = vmatpush1.msra.mxu0 0.0
        %1028 = vmatprep.subr.mxu0 0.0
        %1029 = vmatpush1.msra.mxu0 0.0
        %1030 = vmatprep.subr.mxu0 0.0
        %1031 = vmatpush1.msra.mxu0 0.0
        %1032 = vmatprep.subr.mxu0 0.0
        %1033 = vmatpush1.msra.mxu0 0.0
        %1034 = vmatprep.subr.mxu0 0.0
        %1035 = vmatpush1.msra.mxu0 0.0
        %1036 = vmatprep.subr.mxu0 0.0
        %1037 = vmatpush1.msra.mxu0 0.0
        %1038 = vmatprep.subr.mxu0 0.0
        %1039 = vmatpush1.msra.mxu0 0.0
        %1040 = vmatprep.subr.mxu0 0.0
        %1041 = vmatpush1.msra.mxu0 0.0
        %1042 = vmatprep.subr.mxu0 0.0
        %1043 = vmatpush1.msra.mxu0 0.0
        %1044 = vmatprep.mubr.f32.mxu0 0.0
        %1045 = vmatmul.mubr.f32.gmra.mrb[0].mxu0 %v969
        %v1046 = vpop.f32.mrb[0].mxu0
        %v1047 = vadd.f32 0.0, %v1046
        %v1048 = vpop.f32.mrb[0].mxu0
        %1049 = vmatprep.mubr.f32.mxu0 0.0
        %1050 = vmatmul.mubr.f32.gmra.mrb[0].mxu0 %v972
        %v1051 = vpop.f32.mrb[0].mxu0
        %v1052 = vadd.f32 0.0, %v1051
        %v1053 = vpop.f32.mrb[0].mxu0
        %1054 = vmatprep.mubr.f32.mxu0 0.0
        %1055 = vmatmul.mubr.f32.gmra.mrb[0].mxu0 %v975
        %v1056 = vpop.f32.mrb[0].mxu0
        %v1057 = vadd.f32 0.0, %v1056
        %v1058 = vpop.f32.mrb[0].mxu0
        %1059 = vmatprep.mubr.f32.mxu0 0.0
        %1060 = vmatmul.mubr.f32.gmra.mrb[0].mxu0 %v978
        %v1061 = vpop.f32.mrb[0].mxu0
        %v1062 = vadd.f32 0.0, %v1061
        %v1063 = vpop.f32.mrb[0].mxu0
        %1064 = vdwg.mxu0
        %v1066 = vsel %vm967, %v947, 0
        %v1069 = vsel %vm967, %v948, 0
        %v1072 = vsel %vm967, %v949, 0
        %v1075 = vsel %vm967, %v950, 0
        %1077 = vmatprep.subr.mxu0 0.0
        %1078 = vmatpush1.msra.mxu0 %v942
        %1079 = vmatprep.subr.mxu0 0.0
        %1080 = vmatpush1.msra.mxu0 %v943
        %1081 = vmatprep.subr.mxu0 0.0
        %1082 = vmatpush1.msra.mxu0 %v944
        %1083 = vmatprep.subr.mxu0 0.0
        %1084 = vmatpush1.msra.mxu0 %v945
        %1085 = vmatprep.subr.mxu0 0.0
        %1086 = vmatpush1.msra.mxu0 0.0
        %1087 = vmatprep.subr.mxu0 0.0
        %1088 = vmatpush1.msra.mxu0 0.0
        %1089 = vmatprep.subr.mxu0 0.0
        %1090 = vmatpush1.msra.mxu0 0.0
        %1091 = vmatprep.subr.mxu0 0.0
        %1092 = vmatpush1.msra.mxu0 0.0
        %1093 = vmatprep.subr.mxu0 0.0
        %1094 = vmatpush1.msra.mxu0 0.0
        %1095 = vmatprep.subr.mxu0 0.0
        %1096 = vmatpush1.msra.mxu0 0.0
        %1097 = vmatprep.subr.mxu0 0.0
        %1098 = vmatpush1.msra.mxu0 0.0
        %1099 = vmatprep.subr.mxu0 0.0
        %1100 = vmatpush1.msra.mxu0 0.0
        %1101 = vmatprep.subr.mxu0 0.0
        %1102 = vmatpush1.msra.mxu0 0.0
        %1103 = vmatprep.subr.mxu0 0.0
        %1104 = vmatpush1.msra.mxu0 0.0
        %1105 = vmatprep.subr.mxu0 0.0
        %1106 = vmatpush1.msra.mxu0 0.0
        %1107 = vmatprep.subr.mxu0 0.0
        %1108 = vmatpush1.msra.mxu0 0.0
        %1109 = vmatprep.subr.mxu0 0.0
        %1110 = vmatpush1.msra.mxu0 0.0
        %1111 = vmatprep.subr.mxu0 0.0
        %1112 = vmatpush1.msra.mxu0 0.0
        %1113 = vmatprep.subr.mxu0 0.0
        %1114 = vmatpush1.msra.mxu0 0.0
        %1115 = vmatprep.subr.mxu0 0.0
        %1116 = vmatpush1.msra.mxu0 0.0
        %1117 = vmatprep.subr.mxu0 0.0
        %1118 = vmatpush1.msra.mxu0 0.0
        %1119 = vmatprep.subr.mxu0 0.0
        %1120 = vmatpush1.msra.mxu0 0.0
        %1121 = vmatprep.subr.mxu0 0.0
        %1122 = vmatpush1.msra.mxu0 0.0
        %1123 = vmatprep.subr.mxu0 0.0
        %1124 = vmatpush1.msra.mxu0 0.0
        %1125 = vmatprep.subr.mxu0 0.0
        %1126 = vmatpush1.msra.mxu0 0.0
        %1127 = vmatprep.subr.mxu0 0.0
        %1128 = vmatpush1.msra.mxu0 0.0
        %1129 = vmatprep.subr.mxu0 0.0
        %1130 = vmatpush1.msra.mxu0 0.0
        %1131 = vmatprep.subr.mxu0 0.0
        %1132 = vmatpush1.msra.mxu0 0.0
        %1133 = vmatprep.subr.mxu0 0.0
        %1134 = vmatpush1.msra.mxu0 0.0
        %1135 = vmatprep.subr.mxu0 0.0
        %1136 = vmatpush1.msra.mxu0 0.0
        %1137 = vmatprep.subr.mxu0 0.0
        %1138 = vmatpush1.msra.mxu0 0.0
        %1139 = vmatprep.subr.mxu0 0.0
        %1140 = vmatpush1.msra.mxu0 0.0
        %1141 = vmatprep.mubr.f32.mxu0 0.0
        %1142 = vmatmul.mubr.f32.gmra.mrb[0].mxu0 %v1066
        %v1143 = vpop.f32.mrb[0].mxu0
        %v1144 = vadd.f32 %v1047, %v1143
        %v1145 = vpop.f32.mrb[0].mxu0
        %1146 = vmatprep.mubr.f32.mxu0 0.0
        %1147 = vmatmul.mubr.f32.gmra.mrb[0].mxu0 %v1069
        %v1148 = vpop.f32.mrb[0].mxu0
        %v1149 = vadd.f32 %v1052, %v1148
        %v1150 = vpop.f32.mrb[0].mxu0
        %1151 = vmatprep.mubr.f32.mxu0 0.0
        %1152 = vmatmul.mubr.f32.gmra.mrb[0].mxu0 %v1072
        %v1153 = vpop.f32.mrb[0].mxu0
        %v1154 = vadd.f32 %v1057, %v1153
        %v1155 = vpop.f32.mrb[0].mxu0
        %1156 = vmatprep.mubr.f32.mxu0 0.0
        %1157 = vmatmul.mubr.f32.gmra.mrb[0].mxu0 %v1075
        %v1158 = vpop.f32.mrb[0].mxu0
        %v1159 = vadd.f32 %v1062, %v1158
        %v1160 = vpop.f32.mrb[0].mxu0
        %1161 = vdwg.mxu0
        %s1162 = scalar_lea.vmem %s3, 64
        %v1163 = vld [vmem:[%s1162] sm:$0xff]
        %v1164 = vld [vmem:[%s1162 + $0x8] sm:$0xff]
        %v1165 = vld [vmem:[%s1162 + $0x10] sm:$0xff]
        %v1166 = vld [vmem:[%s1162 + $0x18] sm:$0xff]
        %1167 = vrot.lane.b32.xlu0 %v942, 127
        %v1168 = vpop.permute.xlu0 %1167
        %1169 = vrot.lane.b32.xlu0 %v943, 127
        %v1170 = vpop.permute.xlu0 %1169
        %1171 = vrot.lane.b32.xlu0 %v944, 127
        %v1172 = vpop.permute.xlu0 %1171
        %1173 = vrot.lane.b32.xlu0 %v945, 127
        %v1174 = vpop.permute.xlu0 %1173
        %v1175 = vsel %vm809, %v1168, 0.0
        %v1176 = vsel %vm809, %v1170, 0.0
        %v1177 = vsel %vm809, %v1172, 0.0
        %v1178 = vsel %vm809, %v1174, 0.0
        %v1180 = vsel %vm967, %v1163, 0
        %v1183 = vsel %vm967, %v1164, 0
        %v1186 = vsel %vm967, %v1165, 0
        %v1189 = vsel %vm967, %v1166, 0
        %1191 = vmatprep.subr.mxu0 0.0
        %1192 = vmatpush1.msra.mxu0 %v1175
        %1193 = vmatprep.subr.mxu0 0.0
        %1194 = vmatpush1.msra.mxu0 %v1176
        %1195 = vmatprep.subr.mxu0 0.0
        %1196 = vmatpush1.msra.mxu0 %v1177
        %1197 = vmatprep.subr.mxu0 0.0
        %1198 = vmatpush1.msra.mxu0 %v1178
        %1199 = vmatprep.subr.mxu0 0.0
        %1200 = vmatpush1.msra.mxu0 0.0
        %1201 = vmatprep.subr.mxu0 0.0
        %1202 = vmatpush1.msra.mxu0 0.0
        %1203 = vmatprep.subr.mxu0 0.0
        %1204 = vmatpush1.msra.mxu0 0.0
        %1205 = vmatprep.subr.mxu0 0.0
        %1206 = vmatpush1.msra.mxu0 0.0
        %1207 = vmatprep.subr.mxu0 0.0
        %1208 = vmatpush1.msra.mxu0 0.0
        %1209 = vmatprep.subr.mxu0 0.0
        %1210 = vmatpush1.msra.mxu0 0.0
        %1211 = vmatprep.subr.mxu0 0.0
        %1212 = vmatpush1.msra.mxu0 0.0
        %1213 = vmatprep.subr.mxu0 0.0
        %1214 = vmatpush1.msra.mxu0 0.0
        %1215 = vmatprep.subr.mxu0 0.0
        %1216 = vmatpush1.msra.mxu0 0.0
        %1217 = vmatprep.subr.mxu0 0.0
        %1218 = vmatpush1.msra.mxu0 0.0
        %1219 = vmatprep.subr.mxu0 0.0
        %1220 = vmatpush1.msra.mxu0 0.0
        %1221 = vmatprep.subr.mxu0 0.0
        %1222 = vmatpush1.msra.mxu0 0.0
        %1223 = vmatprep.subr.mxu0 0.0
        %1224 = vmatpush1.msra.mxu0 0.0
        %1225 = vmatprep.subr.mxu0 0.0
        %1226 = vmatpush1.msra.mxu0 0.0
        %1227 = vmatprep.subr.mxu0 0.0
        %1228 = vmatpush1.msra.mxu0 0.0
        %1229 = vmatprep.subr.mxu0 0.0
        %1230 = vmatpush1.msra.mxu0 0.0
        %1231 = vmatprep.subr.mxu0 0.0
        %1232 = vmatpush1.msra.mxu0 0.0
        %1233 = vmatprep.subr.mxu0 0.0
        %1234 = vmatpush1.msra.mxu0 0.0
        %1235 = vmatprep.subr.mxu0 0.0
        %1236 = vmatpush1.msra.mxu0 0.0
        %1237 = vmatprep.subr.mxu0 0.0
        %1238 = vmatpush1.msra.mxu0 0.0
        %1239 = vmatprep.subr.mxu0 0.0
        %1240 = vmatpush1.msra.mxu0 0.0
        %1241 = vmatprep.subr.mxu0 0.0
        %1242 = vmatpush1.msra.mxu0 0.0
        %1243 = vmatprep.subr.mxu0 0.0
        %1244 = vmatpush1.msra.mxu0 0.0
        %1245 = vmatprep.subr.mxu0 0.0
        %1246 = vmatpush1.msra.mxu0 0.0
        %1247 = vmatprep.subr.mxu0 0.0
        %1248 = vmatpush1.msra.mxu0 0.0
        %1249 = vmatprep.subr.mxu0 0.0
        %1250 = vmatpush1.msra.mxu0 0.0
        %1251 = vmatprep.subr.mxu0 0.0
        %1252 = vmatpush1.msra.mxu0 0.0
        %1253 = vmatprep.subr.mxu0 0.0
        %1254 = vmatpush1.msra.mxu0 0.0
        %1255 = vmatprep.mubr.f32.mxu0 0.0
        %1256 = vmatmul.mubr.f32.gmra.mrb[0].mxu0 %v1180
        %v1257 = vpop.f32.mrb[0].mxu0
        %v1258 = vadd.f32 0.0, %v1257
        %v1259 = vpop.f32.mrb[0].mxu0
        %1260 = vmatprep.mubr.f32.mxu0 0.0
        %1261 = vmatmul.mubr.f32.gmra.mrb[0].mxu0 %v1183
        %v1262 = vpop.f32.mrb[0].mxu0
        %v1263 = vadd.f32 0.0, %v1262
        %v1264 = vpop.f32.mrb[0].mxu0
        %1265 = vmatprep.mubr.f32.mxu0 0.0
        %1266 = vmatmul.mubr.f32.gmra.mrb[0].mxu0 %v1186
        %v1267 = vpop.f32.mrb[0].mxu0
        %v1268 = vadd.f32 0.0, %v1267
        %v1269 = vpop.f32.mrb[0].mxu0
        %1270 = vmatprep.mubr.f32.mxu0 0.0
        %1271 = vmatmul.mubr.f32.gmra.mrb[0].mxu0 %v1189
        %v1272 = vpop.f32.mrb[0].mxu0
        %v1273 = vadd.f32 0.0, %v1272
        %v1274 = vpop.f32.mrb[0].mxu0
        %1275 = vdwg.mxu0
        %v1276 = vadd.f32 %v1144, %v1258
        %v1277 = vadd.f32 %v1149, %v1263
        %v1278 = vadd.f32 %v1154, %v1268
        %v1279 = vadd.f32 %v1159, %v1273
        %v1280 = vld [vmem:[%s4] sm:$0xff]
        %v1281 = vld [vmem:[%s4 + $0x8] sm:$0xff]
        %v1282 = vld [vmem:[%s4 + $0x10] sm:$0xff]
        %v1283 = vld [vmem:[%s4 + $0x18] sm:$0xff]
        %1285 = vset.pattern.permute.xlu0 0
        %1286 = vperm.xlu0 %1285, %v1280
        %v1287 = vpop.permute.xlu0 %1286
        %1290 = vset.pattern.permute.xlu0 0
        %1291 = vperm.xlu0 %1290, %v1281
        %v1292 = vpop.permute.xlu0 %1291
        %1295 = vset.pattern.permute.xlu0 0
        %1296 = vperm.xlu0 %1295, %v1282
        %v1297 = vpop.permute.xlu0 %1296
        %1300 = vset.pattern.permute.xlu0 0
        %1301 = vperm.xlu0 %1300, %v1283
        %v1302 = vpop.permute.xlu0 %1301
        %v1304 = vadd.f32 %v1276, %v1287
        %v1305 = vadd.f32 %v1277, %v1292
        %v1306 = vadd.f32 %v1278, %v1297
        %v1307 = vadd.f32 %v1279, %v1302
        %v1308 = vld [vmem:[#allocation5] sm:$0xff]
        %v1309 = vld [vmem:[#allocation5 + $0x8] sm:$0xff]
        %v1310 = vld [vmem:[#allocation5 + $0x10] sm:$0xff]
        %v1311 = vld [vmem:[#allocation5 + $0x18] sm:$0xff]
        %v1312 = vmax.f32 %v1304, 0.0
        %v1313 = vmax.f32 %v1305, 0.0
        %v1314 = vmax.f32 %v1306, 0.0
        %v1315 = vmax.f32 %v1307, 0.0
        %v1316 = vld [vmem:[%s6] sm:$0xff]
        %v1317 = vld [vmem:[%s6 + $0x8] sm:$0xff]
        %v1318 = vld [vmem:[%s6 + $0x10] sm:$0xff]
        %v1319 = vld [vmem:[%s6 + $0x18] sm:$0xff]
        %1321 = vset.pattern.permute.xlu0 0
        %1322 = vperm.xlu0 %1321, %v1316
        %v1323 = vpop.permute.xlu0 %1322
        %1326 = vset.pattern.permute.xlu0 0
        %1327 = vperm.xlu0 %1326, %v1317
        %v1328 = vpop.permute.xlu0 %1327
        %1331 = vset.pattern.permute.xlu0 0
        %1332 = vperm.xlu0 %1331, %v1318
        %v1333 = vpop.permute.xlu0 %1332
        %1336 = vset.pattern.permute.xlu0 0
        %1337 = vperm.xlu0 %1336, %v1319
        %v1338 = vpop.permute.xlu0 %1337
        %v1341 = vsel %vm967, %v1308, 0
        %v1344 = vsel %vm967, %v1309, 0
        %v1347 = vsel %vm967, %v1310, 0
        %v1350 = vsel %vm967, %v1311, 0
        %1352 = vmatprep.subr.mxu0 0.0
        %1353 = vmatpush1.msra.mxu0 %v1312
        %1354 = vmatprep.subr.mxu0 0.0
        %1355 = vmatpush1.msra.mxu0 %v1313
        %1356 = vmatprep.subr.mxu0 0.0
        %1357 = vmatpush1.msra.mxu0 %v1314
        %1358 = vmatprep.subr.mxu0 0.0
        %1359 = vmatpush1.msra.mxu0 %v1315
        %1360 = vmatprep.subr.mxu0 0.0
        %1361 = vmatpush1.msra.mxu0 0.0
        %1362 = vmatprep.subr.mxu0 0.0
        %1363 = vmatpush1.msra.mxu0 0.0
        %1364 = vmatprep.subr.mxu0 0.0
        %1365 = vmatpush1.msra.mxu0 0.0
        %1366 = vmatprep.subr.mxu0 0.0
        %1367 = vmatpush1.msra.mxu0 0.0
        %1368 = vmatprep.subr.mxu0 0.0
        %1369 = vmatpush1.msra.mxu0 0.0
        %1370 = vmatprep.subr.mxu0 0.0
        %1371 = vmatpush1.msra.mxu0 0.0
        %1372 = vmatprep.subr.mxu0 0.0
        %1373 = vmatpush1.msra.mxu0 0.0
        %1374 = vmatprep.subr.mxu0 0.0
        %1375 = vmatpush1.msra.mxu0 0.0
        %1376 = vmatprep.subr.mxu0 0.0
        %1377 = vmatpush1.msra.mxu0 0.0
        %1378 = vmatprep.subr.mxu0 0.0
        %1379 = vmatpush1.msra.mxu0 0.0
        %1380 = vmatprep.subr.mxu0 0.0
        %1381 = vmatpush1.msra.mxu0 0.0
        %1382 = vmatprep.subr.mxu0 0.0
        %1383 = vmatpush1.msra.mxu0 0.0
        %1384 = vmatprep.subr.mxu0 0.0
        %1385 = vmatpush1.msra.mxu0 0.0
        %1386 = vmatprep.subr.mxu0 0.0
        %1387 = vmatpush1.msra.mxu0 0.0
        %1388 = vmatprep.subr.mxu0 0.0
        %1389 = vmatpush1.msra.mxu0 0.0
        %1390 = vmatprep.subr.mxu0 0.0
        %1391 = vmatpush1.msra.mxu0 0.0
        %1392 = vmatprep.subr.mxu0 0.0
        %1393 = vmatpush1.msra.mxu0 0.0
        %1394 = vmatprep.subr.mxu0 0.0
        %1395 = vmatpush1.msra.mxu0 0.0
        %1396 = vmatprep.subr.mxu0 0.0
        %1397 = vmatpush1.msra.mxu0 0.0
        %1398 = vmatprep.subr.mxu0 0.0
        %1399 = vmatpush1.msra.mxu0 0.0
        %1400 = vmatprep.subr.mxu0 0.0
        %1401 = vmatpush1.msra.mxu0 0.0
        %1402 = vmatprep.subr.mxu0 0.0
        %1403 = vmatpush1.msra.mxu0 0.0
        %1404 = vmatprep.subr.mxu0 0.0
        %1405 = vmatpush1.msra.mxu0 0.0
        %1406 = vmatprep.subr.mxu0 0.0
        %1407 = vmatpush1.msra.mxu0 0.0
        %1408 = vmatprep.subr.mxu0 0.0
        %1409 = vmatpush1.msra.mxu0 0.0
        %1410 = vmatprep.subr.mxu0 0.0
        %1411 = vmatpush1.msra.mxu0 0.0
        %1412 = vmatprep.subr.mxu0 0.0
        %1413 = vmatpush1.msra.mxu0 0.0
        %1414 = vmatprep.subr.mxu0 0.0
        %1415 = vmatpush1.msra.mxu0 0.0
        %1416 = vmatprep.mubr.f32.mxu0 0.0
        %1417 = vmatmul.mubr.f32.gmra.mrb[0].mxu0 %v1341
        %v1418 = vpop.f32.mrb[0].mxu0
        %v1419 = vadd.f32 %v1323, %v1418
        %v1420 = vpop.f32.mrb[0].mxu0
        %1421 = vmatprep.mubr.f32.mxu0 0.0
        %1422 = vmatmul.mubr.f32.gmra.mrb[0].mxu0 %v1344
        %v1423 = vpop.f32.mrb[0].mxu0
        %v1424 = vadd.f32 %v1328, %v1423
        %v1425 = vpop.f32.mrb[0].mxu0
        %1426 = vmatprep.mubr.f32.mxu0 0.0
        %1427 = vmatmul.mubr.f32.gmra.mrb[0].mxu0 %v1347
        %v1428 = vpop.f32.mrb[0].mxu0
        %v1429 = vadd.f32 %v1333, %v1428
        %v1430 = vpop.f32.mrb[0].mxu0
        %1431 = vmatprep.mubr.f32.mxu0 0.0
        %1432 = vmatmul.mubr.f32.gmra.mrb[0].mxu0 %v1350
        %v1433 = vpop.f32.mrb[0].mxu0
        %v1434 = vadd.f32 %v1338, %v1433
        %v1435 = vpop.f32.mrb[0].mxu0
        %1436 = vdwg.mxu0
        %v1437 = vadd.f32 %v938, %v1419
        %v1438 = vadd.f32 %v939, %v1424
        %v1439 = vadd.f32 %v940, %v1429
        %v1440 = vadd.f32 %v941, %v1434
        %v1441 = vmax.f32 %v1437, 0.0
        %v1442 = vmax.f32 %v1438, 0.0
        %v1443 = vmax.f32 %v1439, 0.0
        %v1444 = vmax.f32 %v1440, 0.0
        %s1445 = scalar_lea.vmem %s7, 32
        %v1446 = vld [vmem:[%s1445] sm:$0xff]
        %v1447 = vld [vmem:[%s1445 + $0x8] sm:$0xff]
        %v1448 = vld [vmem:[%s1445 + $0x10] sm:$0xff]
        %v1449 = vld [vmem:[%s1445 + $0x18] sm:$0xff]
        %v1450 = vld [vmem:[%s7] sm:$0xff]
        %v1451 = vld [vmem:[%s7 + $0x8] sm:$0xff]
        %v1452 = vld [vmem:[%s7 + $0x10] sm:$0xff]
        %v1453 = vld [vmem:[%s7 + $0x18] sm:$0xff]
        %1454 = vrot.lane.b32.xlu0 %v1441, 1
        %v1455 = vpop.permute.xlu0 %1454
        %1456 = vrot.lane.b32.xlu0 %v1442, 1
        %v1457 = vpop.permute.xlu0 %1456
        %1458 = vrot.lane.b32.xlu0 %v1443, 1
        %v1459 = vpop.permute.xlu0 %1458
        %1460 = vrot.lane.b32.xlu0 %v1444, 1
        %v1461 = vpop.permute.xlu0 %1460
        %v1462 = vsel %vm605, %v1455, 0.0
        %v1463 = vsel %vm605, %v1457, 0.0
        %v1464 = vsel %vm605, %v1459, 0.0
        %v1465 = vsel %vm605, %v1461, 0.0
        %v1467 = vsel %vm967, %v1450, 0
        %v1470 = vsel %vm967, %v1451, 0
        %v1473 = vsel %vm967, %v1452, 0
        %v1476 = vsel %vm967, %v1453, 0
        %1478 = vmatprep.subr.mxu0 0.0
        %1479 = vmatpush1.msra.mxu0 %v1462
        %1480 = vmatprep.subr.mxu0 0.0
        %1481 = vmatpush1.msra.mxu0 %v1463
        %1482 = vmatprep.subr.mxu0 0.0
        %1483 = vmatpush1.msra.mxu0 %v1464
        %1484 = vmatprep.subr.mxu0 0.0
        %1485 = vmatpush1.msra.mxu0 %v1465
        %1486 = vmatprep.subr.mxu0 0.0
        %1487 = vmatpush1.msra.mxu0 0.0
        %1488 = vmatprep.subr.mxu0 0.0
        %1489 = vmatpush1.msra.mxu0 0.0
        %1490 = vmatprep.subr.mxu0 0.0
        %1491 = vmatpush1.msra.mxu0 0.0
        %1492 = vmatprep.subr.mxu0 0.0
        %1493 = vmatpush1.msra.mxu0 0.0
        %1494 = vmatprep.subr.mxu0 0.0
        %1495 = vmatpush1.msra.mxu0 0.0
        %1496 = vmatprep.subr.mxu0 0.0
        %1497 = vmatpush1.msra.mxu0 0.0
        %1498 = vmatprep.subr.mxu0 0.0
        %1499 = vmatpush1.msra.mxu0 0.0
        %1500 = vmatprep.subr.mxu0 0.0
        %1501 = vmatpush1.msra.mxu0 0.0
        %1502 = vmatprep.subr.mxu0 0.0
        %1503 = vmatpush1.msra.mxu0 0.0
        %1504 = vmatprep.subr.mxu0 0.0
        %1505 = vmatpush1.msra.mxu0 0.0
        %1506 = vmatprep.subr.mxu0 0.0
        %1507 = vmatpush1.msra.mxu0 0.0
        %1508 = vmatprep.subr.mxu0 0.0
        %1509 = vmatpush1.msra.mxu0 0.0
        %1510 = vmatprep.subr.mxu0 0.0
        %1511 = vmatpush1.msra.mxu0 0.0
        %1512 = vmatprep.subr.mxu0 0.0
        %1513 = vmatpush1.msra.mxu0 0.0
        %1514 = vmatprep.subr.mxu0 0.0
        %1515 = vmatpush1.msra.mxu0 0.0
        %1516 = vmatprep.subr.mxu0 0.0
        %1517 = vmatpush1.msra.mxu0 0.0
        %1518 = vmatprep.subr.mxu0 0.0
        %1519 = vmatpush1.msra.mxu0 0.0
        %1520 = vmatprep.subr.mxu0 0.0
        %1521 = vmatpush1.msra.mxu0 0.0
        %1522 = vmatprep.subr.mxu0 0.0
        %1523 = vmatpush1.msra.mxu0 0.0
        %1524 = vmatprep.subr.mxu0 0.0
        %1525 = vmatpush1.msra.mxu0 0.0
        %1526 = vmatprep.subr.mxu0 0.0
        %1527 = vmatpush1.msra.mxu0 0.0
        %1528 = vmatprep.subr.mxu0 0.0
        %1529 = vmatpush1.msra.mxu0 0.0
        %1530 = vmatprep.subr.mxu0 0.0
        %1531 = vmatpush1.msra.mxu0 0.0
        %1532 = vmatprep.subr.mxu0 0.0
        %1533 = vmatpush1.msra.mxu0 0.0
        %1534 = vmatprep.subr.mxu0 0.0
        %1535 = vmatpush1.msra.mxu0 0.0
        %1536 = vmatprep.subr.mxu0 0.0
        %1537 = vmatpush1.msra.mxu0 0.0
        %1538 = vmatprep.subr.mxu0 0.0
        %1539 = vmatpush1.msra.mxu0 0.0
        %1540 = vmatprep.subr.mxu0 0.0
        %1541 = vmatpush1.msra.mxu0 0.0
        %1542 = vmatprep.mubr.f32.mxu0 0.0
        %1543 = vmatmul.mubr.f32.gmra.mrb[0].mxu0 %v1467
        %v1544 = vpop.f32.mrb[0].mxu0
        %v1545 = vadd.f32 0.0, %v1544
        %v1546 = vpop.f32.mrb[0].mxu0
        %1547 = vmatprep.mubr.f32.mxu0 0.0
        %1548 = vmatmul.mubr.f32.gmra.mrb[0].mxu0 %v1470
        %v1549 = vpop.f32.mrb[0].mxu0
        %v1550 = vadd.f32 0.0, %v1549
        %v1551 = vpop.f32.mrb[0].mxu0
        %1552 = vmatprep.mubr.f32.mxu0 0.0
        %1553 = vmatmul.mubr.f32.gmra.mrb[0].mxu0 %v1473
        %v1554 = vpop.f32.mrb[0].mxu0
        %v1555 = vadd.f32 0.0, %v1554
        %v1556 = vpop.f32.mrb[0].mxu0
        %1557 = vmatprep.mubr.f32.mxu0 0.0
        %1558 = vmatmul.mubr.f32.gmra.mrb[0].mxu0 %v1476
        %v1559 = vpop.f32.mrb[0].mxu0
        %v1560 = vadd.f32 0.0, %v1559
        %v1561 = vpop.f32.mrb[0].mxu0
        %1562 = vdwg.mxu0
        %v1564 = vsel %vm967, %v1446, 0
        %v1567 = vsel %vm967, %v1447, 0
        %v1570 = vsel %vm967, %v1448, 0
        %v1573 = vsel %vm967, %v1449, 0
        %1575 = vmatprep.subr.mxu0 0.0
        %1576 = vmatpush1.msra.mxu0 %v1441
        %1577 = vmatprep.subr.mxu0 0.0
        %1578 = vmatpush1.msra.mxu0 %v1442
        %1579 = vmatprep.subr.mxu0 0.0
        %1580 = vmatpush1.msra.mxu0 %v1443
        %1581 = vmatprep.subr.mxu0 0.0
        %1582 = vmatpush1.msra.mxu0 %v1444
        %1583 = vmatprep.subr.mxu0 0.0
        %1584 = vmatpush1.msra.mxu0 0.0
        %1585 = vmatprep.subr.mxu0 0.0
        %1586 = vmatpush1.msra.mxu0 0.0
        %1587 = vmatprep.subr.mxu0 0.0
        %1588 = vmatpush1.msra.mxu0 0.0
        %1589 = vmatprep.subr.mxu0 0.0
        %1590 = vmatpush1.msra.mxu0 0.0
        %1591 = vmatprep.subr.mxu0 0.0
        %1592 = vmatpush1.msra.mxu0 0.0
        %1593 = vmatprep.subr.mxu0 0.0
        %1594 = vmatpush1.msra.mxu0 0.0
        %1595 = vmatprep.subr.mxu0 0.0
        %1596 = vmatpush1.msra.mxu0 0.0
        %1597 = vmatprep.subr.mxu0 0.0
        %1598 = vmatpush1.msra.mxu0 0.0
        %1599 = vmatprep.subr.mxu0 0.0
        %1600 = vmatpush1.msra.mxu0 0.0
        %1601 = vmatprep.subr.mxu0 0.0
        %1602 = vmatpush1.msra.mxu0 0.0
        %1603 = vmatprep.subr.mxu0 0.0
        %1604 = vmatpush1.msra.mxu0 0.0
        %1605 = vmatprep.subr.mxu0 0.0
        %1606 = vmatpush1.msra.mxu0 0.0
        %1607 = vmatprep.subr.mxu0 0.0
        %1608 = vmatpush1.msra.mxu0 0.0
        %1609 = vmatprep.subr.mxu0 0.0
        %1610 = vmatpush1.msra.mxu0 0.0
        %1611 = vmatprep.subr.mxu0 0.0
        %1612 = vmatpush1.msra.mxu0 0.0
        %1613 = vmatprep.subr.mxu0 0.0
        %1614 = vmatpush1.msra.mxu0 0.0
        %1615 = vmatprep.subr.mxu0 0.0
        %1616 = vmatpush1.msra.mxu0 0.0
        %1617 = vmatprep.subr.mxu0 0.0
        %1618 = vmatpush1.msra.mxu0 0.0
        %1619 = vmatprep.subr.mxu0 0.0
        %1620 = vmatpush1.msra.mxu0 0.0
        %1621 = vmatprep.subr.mxu0 0.0
        %1622 = vmatpush1.msra.mxu0 0.0
        %1623 = vmatprep.subr.mxu0 0.0
        %1624 = vmatpush1.msra.mxu0 0.0
        %1625 = vmatprep.subr.mxu0 0.0
        %1626 = vmatpush1.msra.mxu0 0.0
        %1627 = vmatprep.subr.mxu0 0.0
        %1628 = vmatpush1.msra.mxu0 0.0
        %1629 = vmatprep.subr.mxu0 0.0
        %1630 = vmatpush1.msra.mxu0 0.0
        %1631 = vmatprep.subr.mxu0 0.0
        %1632 = vmatpush1.msra.mxu0 0.0
        %1633 = vmatprep.subr.mxu0 0.0
        %1634 = vmatpush1.msra.mxu0 0.0
        %1635 = vmatprep.subr.mxu0 0.0
        %1636 = vmatpush1.msra.mxu0 0.0
        %1637 = vmatprep.subr.mxu0 0.0
        %1638 = vmatpush1.msra.mxu0 0.0
        %1639 = vmatprep.mubr.f32.mxu0 0.0
        %1640 = vmatmul.mubr.f32.gmra.mrb[0].mxu0 %v1564
        %v1641 = vpop.f32.mrb[0].mxu0
        %v1642 = vadd.f32 %v1545, %v1641
        %v1643 = vpop.f32.mrb[0].mxu0
        %1644 = vmatprep.mubr.f32.mxu0 0.0
        %1645 = vmatmul.mubr.f32.gmra.mrb[0].mxu0 %v1567
        %v1646 = vpop.f32.mrb[0].mxu0
        %v1647 = vadd.f32 %v1550, %v1646
        %v1648 = vpop.f32.mrb[0].mxu0
        %1649 = vmatprep.mubr.f32.mxu0 0.0
        %1650 = vmatmul.mubr.f32.gmra.mrb[0].mxu0 %v1570
        %v1651 = vpop.f32.mrb[0].mxu0
        %v1652 = vadd.f32 %v1555, %v1651
        %v1653 = vpop.f32.mrb[0].mxu0
        %1654 = vmatprep.mubr.f32.mxu0 0.0
        %1655 = vmatmul.mubr.f32.gmra.mrb[0].mxu0 %v1573
        %v1656 = vpop.f32.mrb[0].mxu0
        %v1657 = vadd.f32 %v1560, %v1656
        %v1658 = vpop.f32.mrb[0].mxu0
        %1659 = vdwg.mxu0
        %s1660 = scalar_lea.vmem %s7, 64
        %v1661 = vld [vmem:[%s1660] sm:$0xff]
        %v1662 = vld [vmem:[%s1660 + $0x8] sm:$0xff]
        %v1663 = vld [vmem:[%s1660 + $0x10] sm:$0xff]
        %v1664 = vld [vmem:[%s1660 + $0x18] sm:$0xff]
        %1665 = vrot.lane.b32.xlu0 %v1441, 127
        %v1666 = vpop.permute.xlu0 %1665
        %1667 = vrot.lane.b32.xlu0 %v1442, 127
        %v1668 = vpop.permute.xlu0 %1667
        %1669 = vrot.lane.b32.xlu0 %v1443, 127
        %v1670 = vpop.permute.xlu0 %1669
        %1671 = vrot.lane.b32.xlu0 %v1444, 127
        %v1672 = vpop.permute.xlu0 %1671
        %v1673 = vsel %vm809, %v1666, 0.0
        %v1674 = vsel %vm809, %v1668, 0.0
        %v1675 = vsel %vm809, %v1670, 0.0
        %v1676 = vsel %vm809, %v1672, 0.0
        %v1678 = vsel %vm967, %v1661, 0
        %v1681 = vsel %vm967, %v1662, 0
        %v1684 = vsel %vm967, %v1663, 0
        %v1687 = vsel %vm967, %v1664, 0
        %1689 = vmatprep.subr.mxu0 0.0
        %1690 = vmatpush1.msra.mxu0 %v1673
        %1691 = vmatprep.subr.mxu0 0.0
        %1692 = vmatpush1.msra.mxu0 %v1674
        %1693 = vmatprep.subr.mxu0 0.0
        %1694 = vmatpush1.msra.mxu0 %v1675
        %1695 = vmatprep.subr.mxu0 0.0
        %1696 = vmatpush1.msra.mxu0 %v1676
        %1697 = vmatprep.subr.mxu0 0.0
        %1698 = vmatpush1.msra.mxu0 0.0
        %1699 = vmatprep.subr.mxu0 0.0
        %1700 = vmatpush1.msra.mxu0 0.0
        %1701 = vmatprep.subr.mxu0 0.0
        %1702 = vmatpush1.msra.mxu0 0.0
        %1703 = vmatprep.subr.mxu0 0.0
        %1704 = vmatpush1.msra.mxu0 0.0
        %1705 = vmatprep.subr.mxu0 0.0
        %1706 = vmatpush1.msra.mxu0 0.0
        %1707 = vmatprep.subr.mxu0 0.0
        %1708 = vmatpush1.msra.mxu0 0.0
        %1709 = vmatprep.subr.mxu0 0.0
        %1710 = vmatpush1.msra.mxu0 0.0
        %1711 = vmatprep.subr.mxu0 0.0
        %1712 = vmatpush1.msra.mxu0 0.0
        %1713 = vmatprep.subr.mxu0 0.0
        %1714 = vmatpush1.msra.mxu0 0.0
        %1715 = vmatprep.subr.mxu0 0.0
        %1716 = vmatpush1.msra.mxu0 0.0
        %1717 = vmatprep.subr.mxu0 0.0
        %1718 = vmatpush1.msra.mxu0 0.0
        %1719 = vmatprep.subr.mxu0 0.0
        %1720 = vmatpush1.msra.mxu0 0.0
        %1721 = vmatprep.subr.mxu0 0.0
        %1722 = vmatpush1.msra.mxu0 0.0
        %1723 = vmatprep.subr.mxu0 0.0
        %1724 = vmatpush1.msra.mxu0 0.0
        %1725 = vmatprep.subr.mxu0 0.0
        %1726 = vmatpush1.msra.mxu0 0.0
        %1727 = vmatprep.subr.mxu0 0.0
        %1728 = vmatpush1.msra.mxu0 0.0
        %1729 = vmatprep.subr.mxu0 0.0
        %1730 = vmatpush1.msra.mxu0 0.0
        %1731 = vmatprep.subr.mxu0 0.0
        %1732 = vmatpush1.msra.mxu0 0.0
        %1733 = vmatprep.subr.mxu0 0.0
        %1734 = vmatpush1.msra.mxu0 0.0
        %1735 = vmatprep.subr.mxu0 0.0
        %1736 = vmatpush1.msra.mxu0 0.0
        %1737 = vmatprep.subr.mxu0 0.0
        %1738 = vmatpush1.msra.mxu0 0.0
        %1739 = vmatprep.subr.mxu0 0.0
        %1740 = vmatpush1.msra.mxu0 0.0
        %1741 = vmatprep.subr.mxu0 0.0
        %1742 = vmatpush1.msra.mxu0 0.0
        %1743 = vmatprep.subr.mxu0 0.0
        %1744 = vmatpush1.msra.mxu0 0.0
        %1745 = vmatprep.subr.mxu0 0.0
        %1746 = vmatpush1.msra.mxu0 0.0
        %1747 = vmatprep.subr.mxu0 0.0
        %1748 = vmatpush1.msra.mxu0 0.0
        %1749 = vmatprep.subr.mxu0 0.0
        %1750 = vmatpush1.msra.mxu0 0.0
        %1751 = vmatprep.subr.mxu0 0.0
        %1752 = vmatpush1.msra.mxu0 0.0
        %1753 = vmatprep.mubr.f32.mxu0 0.0
        %1754 = vmatmul.mubr.f32.gmra.mrb[0].mxu0 %v1678
        %v1755 = vpop.f32.mrb[0].mxu0
        %v1756 = vadd.f32 0.0, %v1755
        %v1757 = vpop.f32.mrb[0].mxu0
        %1758 = vmatprep.mubr.f32.mxu0 0.0
        %1759 = vmatmul.mubr.f32.gmra.mrb[0].mxu0 %v1681
        %v1760 = vpop.f32.mrb[0].mxu0
        %v1761 = vadd.f32 0.0, %v1760
        %v1762 = vpop.f32.mrb[0].mxu0
        %1763 = vmatprep.mubr.f32.mxu0 0.0
        %1764 = vmatmul.mubr.f32.gmra.mrb[0].mxu0 %v1684
        %v1765 = vpop.f32.mrb[0].mxu0
        %v1766 = vadd.f32 0.0, %v1765
        %v1767 = vpop.f32.mrb[0].mxu0
        %1768 = vmatprep.mubr.f32.mxu0 0.0
        %1769 = vmatmul.mubr.f32.gmra.mrb[0].mxu0 %v1687
        %v1770 = vpop.f32.mrb[0].mxu0
        %v1771 = vadd.f32 0.0, %v1770
        %v1772 = vpop.f32.mrb[0].mxu0
        %1773 = vdwg.mxu0
        %v1774 = vadd.f32 %v1642, %v1756
        %v1775 = vadd.f32 %v1647, %v1761
        %v1776 = vadd.f32 %v1652, %v1766
        %v1777 = vadd.f32 %v1657, %v1771
        %v1778 = vld [vmem:[%s8] sm:$0xff]
        %v1779 = vld [vmem:[%s8 + $0x8] sm:$0xff]
        %v1780 = vld [vmem:[%s8 + $0x10] sm:$0xff]
        %v1781 = vld [vmem:[%s8 + $0x18] sm:$0xff]
        %1783 = vset.pattern.permute.xlu0 0
        %1784 = vperm.xlu0 %1783, %v1778
        %v1785 = vpop.permute.xlu0 %1784
        %1788 = vset.pattern.permute.xlu0 0
        %1789 = vperm.xlu0 %1788, %v1779
        %v1790 = vpop.permute.xlu0 %1789
        %1793 = vset.pattern.permute.xlu0 0
        %1794 = vperm.xlu0 %1793, %v1780
        %v1795 = vpop.permute.xlu0 %1794
        %1798 = vset.pattern.permute.xlu0 0
        %1799 = vperm.xlu0 %1798, %v1781
        %v1800 = vpop.permute.xlu0 %1799
        %v1802 = vadd.f32 %v1774, %v1785
        %v1803 = vadd.f32 %v1775, %v1790
        %v1804 = vadd.f32 %v1776, %v1795
        %v1805 = vadd.f32 %v1777, %v1800
        %v1806 = vld [vmem:[%s9] sm:$0xff]
        %v1807 = vld [vmem:[%s9 + $0x8] sm:$0xff]
        %v1808 = vld [vmem:[%s9 + $0x10] sm:$0xff]
        %v1809 = vld [vmem:[%s9 + $0x18] sm:$0xff]
        %v1810 = vmax.f32 %v1802, 0.0
        %v1811 = vmax.f32 %v1803, 0.0
        %v1812 = vmax.f32 %v1804, 0.0
        %v1813 = vmax.f32 %v1805, 0.0
        %v1814 = vld [vmem:[%s10] sm:$0xff]
        %v1815 = vld [vmem:[%s10 + $0x8] sm:$0xff]
        %v1816 = vld [vmem:[%s10 + $0x10] sm:$0xff]
        %v1817 = vld [vmem:[%s10 + $0x18] sm:$0xff]
        %1819 = vset.pattern.permute.xlu0 0
        %1820 = vperm.xlu0 %1819, %v1814
        %v1821 = vpop.permute.xlu0 %1820
        %1824 = vset.pattern.permute.xlu0 0
        %1825 = vperm.xlu0 %1824, %v1815
        %v1826 = vpop.permute.xlu0 %1825
        %1829 = vset.pattern.permute.xlu0 0
        %1830 = vperm.xlu0 %1829, %v1816
        %v1831 = vpop.permute.xlu0 %1830
        %1834 = vset.pattern.permute.xlu0 0
        %1835 = vperm.xlu0 %1834, %v1817
        %v1836 = vpop.permute.xlu0 %1835
        %v1839 = vsel %vm967, %v1806, 0
        %v1842 = vsel %vm967, %v1807, 0
        %v1845 = vsel %vm967, %v1808, 0
        %v1848 = vsel %vm967, %v1809, 0
        %1850 = vmatprep.subr.mxu0 0.0
        %1851 = vmatpush1.msra.mxu0 %v1810
        %1852 = vmatprep.subr.mxu0 0.0
        %1853 = vmatpush1.msra.mxu0 %v1811
        %1854 = vmatprep.subr.mxu0 0.0
        %1855 = vmatpush1.msra.mxu0 %v1812
        %1856 = vmatprep.subr.mxu0 0.0
        %1857 = vmatpush1.msra.mxu0 %v1813
        %1858 = vmatprep.subr.mxu0 0.0
        %1859 = vmatpush1.msra.mxu0 0.0
        %1860 = vmatprep.subr.mxu0 0.0
        %1861 = vmatpush1.msra.mxu0 0.0
        %1862 = vmatprep.subr.mxu0 0.0
        %1863 = vmatpush1.msra.mxu0 0.0
        %1864 = vmatprep.subr.mxu0 0.0
        %1865 = vmatpush1.msra.mxu0 0.0
        %1866 = vmatprep.subr.mxu0 0.0
        %1867 = vmatpush1.msra.mxu0 0.0
        %1868 = vmatprep.subr.mxu0 0.0
        %1869 = vmatpush1.msra.mxu0 0.0
        %1870 = vmatprep.subr.mxu0 0.0
        %1871 = vmatpush1.msra.mxu0 0.0
        %1872 = vmatprep.subr.mxu0 0.0
        %1873 = vmatpush1.msra.mxu0 0.0
        %1874 = vmatprep.subr.mxu0 0.0
        %1875 = vmatpush1.msra.mxu0 0.0
        %1876 = vmatprep.subr.mxu0 0.0
        %1877 = vmatpush1.msra.mxu0 0.0
        %1878 = vmatprep.subr.mxu0 0.0
        %1879 = vmatpush1.msra.mxu0 0.0
        %1880 = vmatprep.subr.mxu0 0.0
        %1881 = vmatpush1.msra.mxu0 0.0
        %1882 = vmatprep.subr.mxu0 0.0
        %1883 = vmatpush1.msra.mxu0 0.0
        %1884 = vmatprep.subr.mxu0 0.0
        %1885 = vmatpush1.msra.mxu0 0.0
        %1886 = vmatprep.subr.mxu0 0.0
        %1887 = vmatpush1.msra.mxu0 0.0
        %1888 = vmatprep.subr.mxu0 0.0
        %1889 = vmatpush1.msra.mxu0 0.0
        %1890 = vmatprep.subr.mxu0 0.0
        %1891 = vmatpush1.msra.mxu0 0.0
        %1892 = vmatprep.subr.mxu0 0.0
        %1893 = vmatpush1.msra.mxu0 0.0
        %1894 = vmatprep.subr.mxu0 0.0
        %1895 = vmatpush1.msra.mxu0 0.0
        %1896 = vmatprep.subr.mxu0 0.0
        %1897 = vmatpush1.msra.mxu0 0.0
        %1898 = vmatprep.subr.mxu0 0.0
        %1899 = vmatpush1.msra.mxu0 0.0
        %1900 = vmatprep.subr.mxu0 0.0
        %1901 = vmatpush1.msra.mxu0 0.0
        %1902 = vmatprep.subr.mxu0 0.0
        %1903 = vmatpush1.msra.mxu0 0.0
        %1904 = vmatprep.subr.mxu0 0.0
        %1905 = vmatpush1.msra.mxu0 0.0
        %1906 = vmatprep.subr.mxu0 0.0
        %1907 = vmatpush1.msra.mxu0 0.0
        %1908 = vmatprep.subr.mxu0 0.0
        %1909 = vmatpush1.msra.mxu0 0.0
        %1910 = vmatprep.subr.mxu0 0.0
        %1911 = vmatpush1.msra.mxu0 0.0
        %1912 = vmatprep.subr.mxu0 0.0
        %1913 = vmatpush1.msra.mxu0 0.0
        %1914 = vmatprep.mubr.f32.mxu0 0.0
        %1915 = vmatmul.mubr.f32.gmra.mrb[0].mxu0 %v1839
        %v1916 = vpop.f32.mrb[0].mxu0
        %v1917 = vadd.f32 %v1821, %v1916
        %v1918 = vpop.f32.mrb[0].mxu0
        %1919 = vmatprep.mubr.f32.mxu0 0.0
        %1920 = vmatmul.mubr.f32.gmra.mrb[0].mxu0 %v1842
        %v1921 = vpop.f32.mrb[0].mxu0
        %v1922 = vadd.f32 %v1826, %v1921
        %v1923 = vpop.f32.mrb[0].mxu0
        %1924 = vmatprep.mubr.f32.mxu0 0.0
        %1925 = vmatmul.mubr.f32.gmra.mrb[0].mxu0 %v1845
        %v1926 = vpop.f32.mrb[0].mxu0
        %v1927 = vadd.f32 %v1831, %v1926
        %v1928 = vpop.f32.mrb[0].mxu0
        %1929 = vmatprep.mubr.f32.mxu0 0.0
        %1930 = vmatmul.mubr.f32.gmra.mrb[0].mxu0 %v1848
        %v1931 = vpop.f32.mrb[0].mxu0
        %v1932 = vadd.f32 %v1836, %v1931
        %v1933 = vpop.f32.mrb[0].mxu0
        %1934 = vdwg.mxu0
        %v1935 = vadd.f32 %v1437, %v1917
        %v1936 = vadd.f32 %v1438, %v1922
        %v1937 = vadd.f32 %v1439, %v1927
        %v1938 = vadd.f32 %v1440, %v1932
        %v1939 = vmax.f32 %v1935, 0.0
        %v1940 = vmax.f32 %v1936, 0.0
        %v1941 = vmax.f32 %v1937, 0.0
        %v1942 = vmax.f32 %v1938, 0.0
        %s1943 = scalar_lea.vmem %s11, 32
        %v1944 = vld [vmem:[%s1943] sm:$0xff]
        %v1945 = vld [vmem:[%s1943 + $0x8] sm:$0xff]
        %v1946 = vld [vmem:[%s1943 + $0x10] sm:$0xff]
        %v1947 = vld [vmem:[%s1943 + $0x18] sm:$0xff]
        %v1948 = vld [vmem:[%s11] sm:$0xff]
        %v1949 = vld [vmem:[%s11 + $0x8] sm:$0xff]
        %v1950 = vld [vmem:[%s11 + $0x10] sm:$0xff]
        %v1951 = vld [vmem:[%s11 + $0x18] sm:$0xff]
        %1952 = vrot.lane.b32.xlu0 %v1939, 1
        %v1953 = vpop.permute.xlu0 %1952
        %1954 = vrot.lane.b32.xlu0 %v1940, 1
        %v1955 = vpop.permute.xlu0 %1954
        %1956 = vrot.lane.b32.xlu0 %v1941, 1
        %v1957 = vpop.permute.xlu0 %1956
        %1958 = vrot.lane.b32.xlu0 %v1942, 1
        %v1959 = vpop.permute.xlu0 %1958
        %v1960 = vsel %vm605, %v1953, 0.0
        %v1961 = vsel %vm605, %v1955, 0.0
        %v1962 = vsel %vm605, %v1957, 0.0
        %v1963 = vsel %vm605, %v1959, 0.0
        %v1965 = vsel %vm967, %v1948, 0
        %v1968 = vsel %vm967, %v1949, 0
        %v1971 = vsel %vm967, %v1950, 0
        %v1974 = vsel %vm967, %v1951, 0
        %1976 = vmatprep.subr.mxu0 0.0
        %1977 = vmatpush1.msra.mxu0 %v1960
        %1978 = vmatprep.subr.mxu0 0.0
        %1979 = vmatpush1.msra.mxu0 %v1961
        %1980 = vmatprep.subr.mxu0 0.0
        %1981 = vmatpush1.msra.mxu0 %v1962
        %1982 = vmatprep.subr.mxu0 0.0
        %1983 = vmatpush1.msra.mxu0 %v1963
        %1984 = vmatprep.subr.mxu0 0.0
        %1985 = vmatpush1.msra.mxu0 0.0
        %1986 = vmatprep.subr.mxu0 0.0
        %1987 = vmatpush1.msra.mxu0 0.0
        %1988 = vmatprep.subr.mxu0 0.0
        %1989 = vmatpush1.msra.mxu0 0.0
        %1990 = vmatprep.subr.mxu0 0.0
        %1991 = vmatpush1.msra.mxu0 0.0
        %1992 = vmatprep.subr.mxu0 0.0
        %1993 = vmatpush1.msra.mxu0 0.0
        %1994 = vmatprep.subr.mxu0 0.0
        %1995 = vmatpush1.msra.mxu0 0.0
        %1996 = vmatprep.subr.mxu0 0.0
        %1997 = vmatpush1.msra.mxu0 0.0
        %1998 = vmatprep.subr.mxu0 0.0
        %1999 = vmatpush1.msra.mxu0 0.0
        %2000 = vmatprep.subr.mxu0 0.0
        %2001 = vmatpush1.msra.mxu0 0.0
        %2002 = vmatprep.subr.mxu0 0.0
        %2003 = vmatpush1.msra.mxu0 0.0
        %2004 = vmatprep.subr.mxu0 0.0
        %2005 = vmatpush1.msra.mxu0 0.0
        %2006 = vmatprep.subr.mxu0 0.0
        %2007 = vmatpush1.msra.mxu0 0.0
        %2008 = vmatprep.subr.mxu0 0.0
        %2009 = vmatpush1.msra.mxu0 0.0
        %2010 = vmatprep.subr.mxu0 0.0
        %2011 = vmatpush1.msra.mxu0 0.0
        %2012 = vmatprep.subr.mxu0 0.0
        %2013 = vmatpush1.msra.mxu0 0.0
        %2014 = vmatprep.subr.mxu0 0.0
        %2015 = vmatpush1.msra.mxu0 0.0
        %2016 = vmatprep.subr.mxu0 0.0
        %2017 = vmatpush1.msra.mxu0 0.0
        %2018 = vmatprep.subr.mxu0 0.0
        %2019 = vmatpush1.msra.mxu0 0.0
        %2020 = vmatprep.subr.mxu0 0.0
        %2021 = vmatpush1.msra.mxu0 0.0
        %2022 = vmatprep.subr.mxu0 0.0
        %2023 = vmatpush1.msra.mxu0 0.0
        %2024 = vmatprep.subr.mxu0 0.0
        %2025 = vmatpush1.msra.mxu0 0.0
        %2026 = vmatprep.subr.mxu0 0.0
        %2027 = vmatpush1.msra.mxu0 0.0
        %2028 = vmatprep.subr.mxu0 0.0
        %2029 = vmatpush1.msra.mxu0 0.0
        %2030 = vmatprep.subr.mxu0 0.0
        %2031 = vmatpush1.msra.mxu0 0.0
        %2032 = vmatprep.subr.mxu0 0.0
        %2033 = vmatpush1.msra.mxu0 0.0
        %2034 = vmatprep.subr.mxu0 0.0
        %2035 = vmatpush1.msra.mxu0 0.0
        %2036 = vmatprep.subr.mxu0 0.0
        %2037 = vmatpush1.msra.mxu0 0.0
        %2038 = vmatprep.subr.mxu0 0.0
        %2039 = vmatpush1.msra.mxu0 0.0
        %2040 = vmatprep.mubr.f32.mxu0 0.0
        %2041 = vmatmul.mubr.f32.gmra.mrb[0].mxu0 %v1965
        %v2042 = vpop.f32.mrb[0].mxu0
        %v2043 = vadd.f32 0.0, %v2042
        %v2044 = vpop.f32.mrb[0].mxu0
        %2045 = vmatprep.mubr.f32.mxu0 0.0
        %2046 = vmatmul.mubr.f32.gmra.mrb[0].mxu0 %v1968
        %v2047 = vpop.f32.mrb[0].mxu0
        %v2048 = vadd.f32 0.0, %v2047
        %v2049 = vpop.f32.mrb[0].mxu0
        %2050 = vmatprep.mubr.f32.mxu0 0.0
        %2051 = vmatmul.mubr.f32.gmra.mrb[0].mxu0 %v1971
        %v2052 = vpop.f32.mrb[0].mxu0
        %v2053 = vadd.f32 0.0, %v2052
        %v2054 = vpop.f32.mrb[0].mxu0
        %2055 = vmatprep.mubr.f32.mxu0 0.0
        %2056 = vmatmul.mubr.f32.gmra.mrb[0].mxu0 %v1974
        %v2057 = vpop.f32.mrb[0].mxu0
        %v2058 = vadd.f32 0.0, %v2057
        %v2059 = vpop.f32.mrb[0].mxu0
        %2060 = vdwg.mxu0
        %v2062 = vsel %vm967, %v1944, 0
        %v2065 = vsel %vm967, %v1945, 0
        %v2068 = vsel %vm967, %v1946, 0
        %v2071 = vsel %vm967, %v1947, 0
        %2073 = vmatprep.subr.mxu0 0.0
        %2074 = vmatpush1.msra.mxu0 %v1939
        %2075 = vmatprep.subr.mxu0 0.0
        %2076 = vmatpush1.msra.mxu0 %v1940
        %2077 = vmatprep.subr.mxu0 0.0
        %2078 = vmatpush1.msra.mxu0 %v1941
        %2079 = vmatprep.subr.mxu0 0.0
        %2080 = vmatpush1.msra.mxu0 %v1942
        %2081 = vmatprep.subr.mxu0 0.0
        %2082 = vmatpush1.msra.mxu0 0.0
        %2083 = vmatprep.subr.mxu0 0.0
        %2084 = vmatpush1.msra.mxu0 0.0
        %2085 = vmatprep.subr.mxu0 0.0
        %2086 = vmatpush1.msra.mxu0 0.0
        %2087 = vmatprep.subr.mxu0 0.0
        %2088 = vmatpush1.msra.mxu0 0.0
        %2089 = vmatprep.subr.mxu0 0.0
        %2090 = vmatpush1.msra.mxu0 0.0
        %2091 = vmatprep.subr.mxu0 0.0
        %2092 = vmatpush1.msra.mxu0 0.0
        %2093 = vmatprep.subr.mxu0 0.0
        %2094 = vmatpush1.msra.mxu0 0.0
        %2095 = vmatprep.subr.mxu0 0.0
        %2096 = vmatpush1.msra.mxu0 0.0
        %2097 = vmatprep.subr.mxu0 0.0
        %2098 = vmatpush1.msra.mxu0 0.0
        %2099 = vmatprep.subr.mxu0 0.0
        %2100 = vmatpush1.msra.mxu0 0.0
        %2101 = vmatprep.subr.mxu0 0.0
        %2102 = vmatpush1.msra.mxu0 0.0
        %2103 = vmatprep.subr.mxu0 0.0
        %2104 = vmatpush1.msra.mxu0 0.0
        %2105 = vmatprep.subr.mxu0 0.0
        %2106 = vmatpush1.msra.mxu0 0.0
        %2107 = vmatprep.subr.mxu0 0.0
        %2108 = vmatpush1.msra.mxu0 0.0
        %2109 = vmatprep.subr.mxu0 0.0
        %2110 = vmatpush1.msra.mxu0 0.0
        %2111 = vmatprep.subr.mxu0 0.0
        %2112 = vmatpush1.msra.mxu0 0.0
        %2113 = vmatprep.subr.mxu0 0.0
        %2114 = vmatpush1.msra.mxu0 0.0
        %2115 = vmatprep.subr.mxu0 0.0
        %2116 = vmatpush1.msra.mxu0 0.0
        %2117 = vmatprep.subr.mxu0 0.0
        %2118 = vmatpush1.msra.mxu0 0.0
        %2119 = vmatprep.subr.mxu0 0.0
        %2120 = vmatpush1.msra.mxu0 0.0
        %2121 = vmatprep.subr.mxu0 0.0
        %2122 = vmatpush1.msra.mxu0 0.0
        %2123 = vmatprep.subr.mxu0 0.0
        %2124 = vmatpush1.msra.mxu0 0.0
        %2125 = vmatprep.subr.mxu0 0.0
        %2126 = vmatpush1.msra.mxu0 0.0
        %2127 = vmatprep.subr.mxu0 0.0
        %2128 = vmatpush1.msra.mxu0 0.0
        %2129 = vmatprep.subr.mxu0 0.0
        %2130 = vmatpush1.msra.mxu0 0.0
        %2131 = vmatprep.subr.mxu0 0.0
        %2132 = vmatpush1.msra.mxu0 0.0
        %2133 = vmatprep.subr.mxu0 0.0
        %2134 = vmatpush1.msra.mxu0 0.0
        %2135 = vmatprep.subr.mxu0 0.0
        %2136 = vmatpush1.msra.mxu0 0.0
        %2137 = vmatprep.mubr.f32.mxu0 0.0
        %2138 = vmatmul.mubr.f32.gmra.mrb[0].mxu0 %v2062
        %v2139 = vpop.f32.mrb[0].mxu0
        %v2140 = vadd.f32 %v2043, %v2139
        %v2141 = vpop.f32.mrb[0].mxu0
        %2142 = vmatprep.mubr.f32.mxu0 0.0
        %2143 = vmatmul.mubr.f32.gmra.mrb[0].mxu0 %v2065
        %v2144 = vpop.f32.mrb[0].mxu0
        %v2145 = vadd.f32 %v2048, %v2144
        %v2146 = vpop.f32.mrb[0].mxu0
        %2147 = vmatprep.mubr.f32.mxu0 0.0
        %2148 = vmatmul.mubr.f32.gmra.mrb[0].mxu0 %v2068
        %v2149 = vpop.f32.mrb[0].mxu0
        %v2150 = vadd.f32 %v2053, %v2149
        %v2151 = vpop.f32.mrb[0].mxu0
        %2152 = vmatprep.mubr.f32.mxu0 0.0
        %2153 = vmatmul.mubr.f32.gmra.mrb[0].mxu0 %v2071
        %v2154 = vpop.f32.mrb[0].mxu0
        %v2155 = vadd.f32 %v2058, %v2154
        %v2156 = vpop.f32.mrb[0].mxu0
        %2157 = vdwg.mxu0
        %s2158 = scalar_lea.vmem %s11, 64
        %v2159 = vld [vmem:[%s2158] sm:$0xff]
        %v2160 = vld [vmem:[%s2158 + $0x8] sm:$0xff]
        %v2161 = vld [vmem:[%s2158 + $0x10] sm:$0xff]
        %v2162 = vld [vmem:[%s2158 + $0x18] sm:$0xff]
        %2163 = vrot.lane.b32.xlu0 %v1939, 127
        %v2164 = vpop.permute.xlu0 %2163
        %2165 = vrot.lane.b32.xlu0 %v1940, 127
        %v2166 = vpop.permute.xlu0 %2165
        %2167 = vrot.lane.b32.xlu0 %v1941, 127
        %v2168 = vpop.permute.xlu0 %2167
        %2169 = vrot.lane.b32.xlu0 %v1942, 127
        %v2170 = vpop.permute.xlu0 %2169
        %v2171 = vsel %vm809, %v2164, 0.0
        %v2172 = vsel %vm809, %v2166, 0.0
        %v2173 = vsel %vm809, %v2168, 0.0
        %v2174 = vsel %vm809, %v2170, 0.0
        %v2176 = vsel %vm967, %v2159, 0
        %v2179 = vsel %vm967, %v2160, 0
        %v2182 = vsel %vm967, %v2161, 0
        %v2185 = vsel %vm967, %v2162, 0
        %2187 = vmatprep.subr.mxu0 0.0
        %2188 = vmatpush1.msra.mxu0 %v2171
        %2189 = vmatprep.subr.mxu0 0.0
        %2190 = vmatpush1.msra.mxu0 %v2172
        %2191 = vmatprep.subr.mxu0 0.0
        %2192 = vmatpush1.msra.mxu0 %v2173
        %2193 = vmatprep.subr.mxu0 0.0
        %2194 = vmatpush1.msra.mxu0 %v2174
        %2195 = vmatprep.subr.mxu0 0.0
        %2196 = vmatpush1.msra.mxu0 0.0
        %2197 = vmatprep.subr.mxu0 0.0
        %2198 = vmatpush1.msra.mxu0 0.0
        %2199 = vmatprep.subr.mxu0 0.0
        %2200 = vmatpush1.msra.mxu0 0.0
        %2201 = vmatprep.subr.mxu0 0.0
        %2202 = vmatpush1.msra.mxu0 0.0
        %2203 = vmatprep.subr.mxu0 0.0
        %2204 = vmatpush1.msra.mxu0 0.0
        %2205 = vmatprep.subr.mxu0 0.0
        %2206 = vmatpush1.msra.mxu0 0.0
        %2207 = vmatprep.subr.mxu0 0.0
        %2208 = vmatpush1.msra.mxu0 0.0
        %2209 = vmatprep.subr.mxu0 0.0
        %2210 = vmatpush1.msra.mxu0 0.0
        %2211 = vmatprep.subr.mxu0 0.0
        %2212 = vmatpush1.msra.mxu0 0.0
        %2213 = vmatprep.subr.mxu0 0.0
        %2214 = vmatpush1.msra.mxu0 0.0
        %2215 = vmatprep.subr.mxu0 0.0
        %2216 = vmatpush1.msra.mxu0 0.0
        %2217 = vmatprep.subr.mxu0 0.0
        %2218 = vmatpush1.msra.mxu0 0.0
        %2219 = vmatprep.subr.mxu0 0.0
        %2220 = vmatpush1.msra.mxu0 0.0
        %2221 = vmatprep.subr.mxu0 0.0
        %2222 = vmatpush1.msra.mxu0 0.0
        %2223 = vmatprep.subr.mxu0 0.0
        %2224 = vmatpush1.msra.mxu0 0.0
        %2225 = vmatprep.subr.mxu0 0.0
        %2226 = vmatpush1.msra.mxu0 0.0
        %2227 = vmatprep.subr.mxu0 0.0
        %2228 = vmatpush1.msra.mxu0 0.0
        %2229 = vmatprep.subr.mxu0 0.0
        %2230 = vmatpush1.msra.mxu0 0.0
        %2231 = vmatprep.subr.mxu0 0.0
        %2232 = vmatpush1.msra.mxu0 0.0
        %2233 = vmatprep.subr.mxu0 0.0
        %2234 = vmatpush1.msra.mxu0 0.0
        %2235 = vmatprep.subr.mxu0 0.0
        %2236 = vmatpush1.msra.mxu0 0.0
        %2237 = vmatprep.subr.mxu0 0.0
        %2238 = vmatpush1.msra.mxu0 0.0
        %2239 = vmatprep.subr.mxu0 0.0
        %2240 = vmatpush1.msra.mxu0 0.0
        %2241 = vmatprep.subr.mxu0 0.0
        %2242 = vmatpush1.msra.mxu0 0.0
        %2243 = vmatprep.subr.mxu0 0.0
        %2244 = vmatpush1.msra.mxu0 0.0
        %2245 = vmatprep.subr.mxu0 0.0
        %2246 = vmatpush1.msra.mxu0 0.0
        %2247 = vmatprep.subr.mxu0 0.0
        %2248 = vmatpush1.msra.mxu0 0.0
        %2249 = vmatprep.subr.mxu0 0.0
        %2250 = vmatpush1.msra.mxu0 0.0
        %2251 = vmatprep.mubr.f32.mxu0 0.0
        %2252 = vmatmul.mubr.f32.gmra.mrb[0].mxu0 %v2176
        %v2253 = vpop.f32.mrb[0].mxu0
        %v2254 = vadd.f32 0.0, %v2253
        %v2255 = vpop.f32.mrb[0].mxu0
        %2256 = vmatprep.mubr.f32.mxu0 0.0
        %2257 = vmatmul.mubr.f32.gmra.mrb[0].mxu0 %v2179
        %v2258 = vpop.f32.mrb[0].mxu0
        %v2259 = vadd.f32 0.0, %v2258
        %v2260 = vpop.f32.mrb[0].mxu0
        %2261 = vmatprep.mubr.f32.mxu0 0.0
        %2262 = vmatmul.mubr.f32.gmra.mrb[0].mxu0 %v2182
        %v2263 = vpop.f32.mrb[0].mxu0
        %v2264 = vadd.f32 0.0, %v2263
        %v2265 = vpop.f32.mrb[0].mxu0
        %2266 = vmatprep.mubr.f32.mxu0 0.0
        %2267 = vmatmul.mubr.f32.gmra.mrb[0].mxu0 %v2185
        %v2268 = vpop.f32.mrb[0].mxu0
        %v2269 = vadd.f32 0.0, %v2268
        %v2270 = vpop.f32.mrb[0].mxu0
        %2271 = vdwg.mxu0
        %v2272 = vadd.f32 %v2140, %v2254
        %v2273 = vadd.f32 %v2145, %v2259
        %v2274 = vadd.f32 %v2150, %v2264
        %v2275 = vadd.f32 %v2155, %v2269
        %v2276 = vld [vmem:[%s12] sm:$0xff]
        %v2277 = vld [vmem:[%s12 + $0x8] sm:$0xff]
        %v2278 = vld [vmem:[%s12 + $0x10] sm:$0xff]
        %v2279 = vld [vmem:[%s12 + $0x18] sm:$0xff]
        %2281 = vset.pattern.permute.xlu0 0
        %2282 = vperm.xlu0 %2281, %v2276
        %v2283 = vpop.permute.xlu0 %2282
        %2286 = vset.pattern.permute.xlu0 0
        %2287 = vperm.xlu0 %2286, %v2277
        %v2288 = vpop.permute.xlu0 %2287
        %2291 = vset.pattern.permute.xlu0 0
        %2292 = vperm.xlu0 %2291, %v2278
        %v2293 = vpop.permute.xlu0 %2292
        %2296 = vset.pattern.permute.xlu0 0
        %2297 = vperm.xlu0 %2296, %v2279
        %v2298 = vpop.permute.xlu0 %2297
        %v2300 = vadd.f32 %v2272, %v2283
        %v2301 = vadd.f32 %v2273, %v2288
        %v2302 = vadd.f32 %v2274, %v2293
        %v2303 = vadd.f32 %v2275, %v2298
        %v2304 = vld [vmem:[#allocation7] sm:$0xff]
        %v2305 = vld [vmem:[#allocation7 + $0x8] sm:$0xff]
        %v2306 = vld [vmem:[#allocation7 + $0x10] sm:$0xff]
        %v2307 = vld [vmem:[#allocation7 + $0x18] sm:$0xff]
        %v2308 = vmax.f32 %v2300, 0.0
        %v2309 = vmax.f32 %v2301, 0.0
        %v2310 = vmax.f32 %v2302, 0.0
        %v2311 = vmax.f32 %v2303, 0.0
        %v2312 = vld [vmem:[%s14] sm:$0xff]
        %v2313 = vld [vmem:[%s14 + $0x8] sm:$0xff]
        %v2314 = vld [vmem:[%s14 + $0x10] sm:$0xff]
        %v2315 = vld [vmem:[%s14 + $0x18] sm:$0xff]
        %2317 = vset.pattern.permute.xlu0 0
        %2318 = vperm.xlu0 %2317, %v2312
        %v2319 = vpop.permute.xlu0 %2318
        %2322 = vset.pattern.permute.xlu0 0
        %2323 = vperm.xlu0 %2322, %v2313
        %v2324 = vpop.permute.xlu0 %2323
        %2327 = vset.pattern.permute.xlu0 0
        %2328 = vperm.xlu0 %2327, %v2314
        %v2329 = vpop.permute.xlu0 %2328
        %2332 = vset.pattern.permute.xlu0 0
        %2333 = vperm.xlu0 %2332, %v2315
        %v2334 = vpop.permute.xlu0 %2333
        %v2337 = vsel %vm967, %v2304, 0
        %v2340 = vsel %vm967, %v2305, 0
        %v2343 = vsel %vm967, %v2306, 0
        %v2346 = vsel %vm967, %v2307, 0
        %2348 = vmatprep.subr.mxu0 0.0
        %2349 = vmatpush1.msra.mxu0 %v2308
        %2350 = vmatprep.subr.mxu0 0.0
        %2351 = vmatpush1.msra.mxu0 %v2309
        %2352 = vmatprep.subr.mxu0 0.0
        %2353 = vmatpush1.msra.mxu0 %v2310
        %2354 = vmatprep.subr.mxu0 0.0
        %2355 = vmatpush1.msra.mxu0 %v2311
        %2356 = vmatprep.subr.mxu0 0.0
        %2357 = vmatpush1.msra.mxu0 0.0
        %2358 = vmatprep.subr.mxu0 0.0
        %2359 = vmatpush1.msra.mxu0 0.0
        %2360 = vmatprep.subr.mxu0 0.0
        %2361 = vmatpush1.msra.mxu0 0.0
        %2362 = vmatprep.subr.mxu0 0.0
        %2363 = vmatpush1.msra.mxu0 0.0
        %2364 = vmatprep.subr.mxu0 0.0
        %2365 = vmatpush1.msra.mxu0 0.0
        %2366 = vmatprep.subr.mxu0 0.0
        %2367 = vmatpush1.msra.mxu0 0.0
        %2368 = vmatprep.subr.mxu0 0.0
        %2369 = vmatpush1.msra.mxu0 0.0
        %2370 = vmatprep.subr.mxu0 0.0
        %2371 = vmatpush1.msra.mxu0 0.0
        %2372 = vmatprep.subr.mxu0 0.0
        %2373 = vmatpush1.msra.mxu0 0.0
        %2374 = vmatprep.subr.mxu0 0.0
        %2375 = vmatpush1.msra.mxu0 0.0
        %2376 = vmatprep.subr.mxu0 0.0
        %2377 = vmatpush1.msra.mxu0 0.0
        %2378 = vmatprep.subr.mxu0 0.0
        %2379 = vmatpush1.msra.mxu0 0.0
        %2380 = vmatprep.subr.mxu0 0.0
        %2381 = vmatpush1.msra.mxu0 0.0
        %2382 = vmatprep.subr.mxu0 0.0
        %2383 = vmatpush1.msra.mxu0 0.0
        %2384 = vmatprep.subr.mxu0 0.0
        %2385 = vmatpush1.msra.mxu0 0.0
        %2386 = vmatprep.subr.mxu0 0.0
        %2387 = vmatpush1.msra.mxu0 0.0
        %2388 = vmatprep.subr.mxu0 0.0
        %2389 = vmatpush1.msra.mxu0 0.0
        %2390 = vmatprep.subr.mxu0 0.0
        %2391 = vmatpush1.msra.mxu0 0.0
        %2392 = vmatprep.subr.mxu0 0.0
        %2393 = vmatpush1.msra.mxu0 0.0
        %2394 = vmatprep.subr.mxu0 0.0
        %2395 = vmatpush1.msra.mxu0 0.0
        %2396 = vmatprep.subr.mxu0 0.0
        %2397 = vmatpush1.msra.mxu0 0.0
        %2398 = vmatprep.subr.mxu0 0.0
        %2399 = vmatpush1.msra.mxu0 0.0
        %2400 = vmatprep.subr.mxu0 0.0
        %2401 = vmatpush1.msra.mxu0 0.0
        %2402 = vmatprep.subr.mxu0 0.0
        %2403 = vmatpush1.msra.mxu0 0.0
        %2404 = vmatprep.subr.mxu0 0.0
        %2405 = vmatpush1.msra.mxu0 0.0
        %2406 = vmatprep.subr.mxu0 0.0
        %2407 = vmatpush1.msra.mxu0 0.0
        %2408 = vmatprep.subr.mxu0 0.0
        %2409 = vmatpush1.msra.mxu0 0.0
        %2410 = vmatprep.subr.mxu0 0.0
        %2411 = vmatpush1.msra.mxu0 0.0
        %2412 = vmatprep.mubr.f32.mxu0 0.0
        %2413 = vmatmul.mubr.f32.gmra.mrb[0].mxu0 %v2337
        %v2414 = vpop.f32.mrb[0].mxu0
        %v2415 = vadd.f32 %v2319, %v2414
        %v2416 = vpop.f32.mrb[0].mxu0
        %2417 = vmatprep.mubr.f32.mxu0 0.0
        %2418 = vmatmul.mubr.f32.gmra.mrb[0].mxu0 %v2340
        %v2419 = vpop.f32.mrb[0].mxu0
        %v2420 = vadd.f32 %v2324, %v2419
        %v2421 = vpop.f32.mrb[0].mxu0
        %2422 = vmatprep.mubr.f32.mxu0 0.0
        %2423 = vmatmul.mubr.f32.gmra.mrb[0].mxu0 %v2343
        %v2424 = vpop.f32.mrb[0].mxu0
        %v2425 = vadd.f32 %v2329, %v2424
        %v2426 = vpop.f32.mrb[0].mxu0
        %2427 = vmatprep.mubr.f32.mxu0 0.0
        %2428 = vmatmul.mubr.f32.gmra.mrb[0].mxu0 %v2346
        %v2429 = vpop.f32.mrb[0].mxu0
        %v2430 = vadd.f32 %v2334, %v2429
        %v2431 = vpop.f32.mrb[0].mxu0
        %2432 = vdwg.mxu0
        %v2433 = vadd.f32 %v1935, %v2415
        %v2434 = vadd.f32 %v1936, %v2420
        %v2435 = vadd.f32 %v1937, %v2425
        %v2436 = vadd.f32 %v1938, %v2430
        %v2437 = vld [vmem:[%s16] sm:$0xff]
        %v2438 = vld [vmem:[%s16 + $0x8] sm:$0xff]
        %s2439 = scalar_lea.vmem %s15, 16
        %v2440 = vld [vmem:[%s2439] sm:$0xff]
        %v2441 = vld [vmem:[%s2439 + $0x8] sm:$0xff]
        %s2442 = scalar_lea.vmem %s15, 48
        %v2443 = vld [vmem:[%s2442] sm:$0xff]
        %v2444 = vld [vmem:[%s2442 + $0x8] sm:$0xff]
        %2445 = vrot.lane.b32.xlu0 %v2433, 1
        %v2446 = vpop.permute.xlu0 %2445
        %2447 = vrot.lane.b32.xlu0 %v2434, 1
        %v2448 = vpop.permute.xlu0 %2447
        %2449 = vrot.lane.b32.xlu0 %v2435, 1
        %v2450 = vpop.permute.xlu0 %2449
        %2451 = vrot.lane.b32.xlu0 %v2436, 1
        %v2452 = vpop.permute.xlu0 %2451
        %v2453 = vsel %vm605, %v2446, 0.0
        %v2454 = vsel %vm605, %v2448, 0.0
        %v2455 = vsel %vm605, %v2450, 0.0
        %v2456 = vsel %vm605, %v2452, 0.0
        %v2458 = vsel %vm967, %v2443, 0
        %v2461 = vsel %vm967, %v2444, 0
        %2463 = vmatprep.subr.mxu0 0.0
        %2464 = vmatpush1.msra.mxu0 %v2453
        %2465 = vmatprep.subr.mxu0 0.0
        %2466 = vmatpush1.msra.mxu0 %v2454
        %2467 = vmatprep.subr.mxu0 0.0
        %2468 = vmatpush1.msra.mxu0 %v2455
        %2469 = vmatprep.subr.mxu0 0.0
        %2470 = vmatpush1.msra.mxu0 %v2456
        %2471 = vmatprep.subr.mxu0 0.0
        %2472 = vmatpush1.msra.mxu0 0.0
        %2473 = vmatprep.subr.mxu0 0.0
        %2474 = vmatpush1.msra.mxu0 0.0
        %2475 = vmatprep.subr.mxu0 0.0
        %2476 = vmatpush1.msra.mxu0 0.0
        %2477 = vmatprep.subr.mxu0 0.0
        %2478 = vmatpush1.msra.mxu0 0.0
        %2479 = vmatprep.subr.mxu0 0.0
        %2480 = vmatpush1.msra.mxu0 0.0
        %2481 = vmatprep.subr.mxu0 0.0
        %2482 = vmatpush1.msra.mxu0 0.0
        %2483 = vmatprep.subr.mxu0 0.0
        %2484 = vmatpush1.msra.mxu0 0.0
        %2485 = vmatprep.subr.mxu0 0.0
        %2486 = vmatpush1.msra.mxu0 0.0
        %2487 = vmatprep.subr.mxu0 0.0
        %2488 = vmatpush1.msra.mxu0 0.0
        %2489 = vmatprep.subr.mxu0 0.0
        %2490 = vmatpush1.msra.mxu0 0.0
        %2491 = vmatprep.subr.mxu0 0.0
        %2492 = vmatpush1.msra.mxu0 0.0
        %2493 = vmatprep.subr.mxu0 0.0
        %2494 = vmatpush1.msra.mxu0 0.0
        %2495 = vmatprep.subr.mxu0 0.0
        %2496 = vmatpush1.msra.mxu0 0.0
        %2497 = vmatprep.subr.mxu0 0.0
        %2498 = vmatpush1.msra.mxu0 0.0
        %2499 = vmatprep.subr.mxu0 0.0
        %2500 = vmatpush1.msra.mxu0 0.0
        %2501 = vmatprep.subr.mxu0 0.0
        %2502 = vmatpush1.msra.mxu0 0.0
        %2503 = vmatprep.subr.mxu0 0.0
        %2504 = vmatpush1.msra.mxu0 0.0
        %2505 = vmatprep.subr.mxu0 0.0
        %2506 = vmatpush1.msra.mxu0 0.0
        %2507 = vmatprep.subr.mxu0 0.0
        %2508 = vmatpush1.msra.mxu0 0.0
        %2509 = vmatprep.subr.mxu0 0.0
        %2510 = vmatpush1.msra.mxu0 0.0
        %2511 = vmatprep.subr.mxu0 0.0
        %2512 = vmatpush1.msra.mxu0 0.0
        %2513 = vmatprep.subr.mxu0 0.0
        %2514 = vmatpush1.msra.mxu0 0.0
        %2515 = vmatprep.subr.mxu0 0.0
        %2516 = vmatpush1.msra.mxu0 0.0
        %2517 = vmatprep.subr.mxu0 0.0
        %2518 = vmatpush1.msra.mxu0 0.0
        %2519 = vmatprep.subr.mxu0 0.0
        %2520 = vmatpush1.msra.mxu0 0.0
        %2521 = vmatprep.subr.mxu0 0.0
        %2522 = vmatpush1.msra.mxu0 0.0
        %2523 = vmatprep.subr.mxu0 0.0
        %2524 = vmatpush1.msra.mxu0 0.0
        %2525 = vmatprep.subr.mxu0 0.0
        %2526 = vmatpush1.msra.mxu0 0.0
        %2527 = vmatprep.mubr.f32.mxu0 0.0
        %2528 = vmatmul.mubr.f32.gmra.mrb[0].mxu0 %v2458
        %v2529 = vpop.f32.mrb[0].mxu0
        %v2530 = vadd.f32 0.0, %v2529
        %v2531 = vpop.f32.mrb[0].mxu0
        %2532 = vmatprep.mubr.f32.mxu0 0.0
        %2533 = vmatmul.mubr.f32.gmra.mrb[0].mxu0 %v2461
        %v2534 = vpop.f32.mrb[0].mxu0
        %v2535 = vadd.f32 0.0, %v2534
        %v2536 = vpop.f32.mrb[0].mxu0
        %2537 = vdwg.mxu0
        %v2539 = vsel %vm967, %v2440, 0
        %v2542 = vsel %vm967, %v2441, 0
        %2544 = vmatprep.subr.mxu0 0.0
        %2545 = vmatpush1.msra.mxu0 %v2433
        %2546 = vmatprep.subr.mxu0 0.0
        %2547 = vmatpush1.msra.mxu0 %v2434
        %2548 = vmatprep.subr.mxu0 0.0
        %2549 = vmatpush1.msra.mxu0 %v2435
        %2550 = vmatprep.subr.mxu0 0.0
        %2551 = vmatpush1.msra.mxu0 %v2436
        %2552 = vmatprep.subr.mxu0 0.0
        %2553 = vmatpush1.msra.mxu0 0.0
        %2554 = vmatprep.subr.mxu0 0.0
        %2555 = vmatpush1.msra.mxu0 0.0
        %2556 = vmatprep.subr.mxu0 0.0
        %2557 = vmatpush1.msra.mxu0 0.0
        %2558 = vmatprep.subr.mxu0 0.0
        %2559 = vmatpush1.msra.mxu0 0.0
        %2560 = vmatprep.subr.mxu0 0.0
        %2561 = vmatpush1.msra.mxu0 0.0
        %2562 = vmatprep.subr.mxu0 0.0
        %2563 = vmatpush1.msra.mxu0 0.0
        %2564 = vmatprep.subr.mxu0 0.0
        %2565 = vmatpush1.msra.mxu0 0.0
        %2566 = vmatprep.subr.mxu0 0.0
        %2567 = vmatpush1.msra.mxu0 0.0
        %2568 = vmatprep.subr.mxu0 0.0
        %2569 = vmatpush1.msra.mxu0 0.0
        %2570 = vmatprep.subr.mxu0 0.0
        %2571 = vmatpush1.msra.mxu0 0.0
        %2572 = vmatprep.subr.mxu0 0.0
        %2573 = vmatpush1.msra.mxu0 0.0
        %2574 = vmatprep.subr.mxu0 0.0
        %2575 = vmatpush1.msra.mxu0 0.0
        %2576 = vmatprep.subr.mxu0 0.0
        %2577 = vmatpush1.msra.mxu0 0.0
        %2578 = vmatprep.subr.mxu0 0.0
        %2579 = vmatpush1.msra.mxu0 0.0
        %2580 = vmatprep.subr.mxu0 0.0
        %2581 = vmatpush1.msra.mxu0 0.0
        %2582 = vmatprep.subr.mxu0 0.0
        %2583 = vmatpush1.msra.mxu0 0.0
        %2584 = vmatprep.subr.mxu0 0.0
        %2585 = vmatpush1.msra.mxu0 0.0
        %2586 = vmatprep.subr.mxu0 0.0
        %2587 = vmatpush1.msra.mxu0 0.0
        %2588 = vmatprep.subr.mxu0 0.0
        %2589 = vmatpush1.msra.mxu0 0.0
        %2590 = vmatprep.subr.mxu0 0.0
        %2591 = vmatpush1.msra.mxu0 0.0
        %2592 = vmatprep.subr.mxu0 0.0
        %2593 = vmatpush1.msra.mxu0 0.0
        %2594 = vmatprep.subr.mxu0 0.0
        %2595 = vmatpush1.msra.mxu0 0.0
        %2596 = vmatprep.subr.mxu0 0.0
        %2597 = vmatpush1.msra.mxu0 0.0
        %2598 = vmatprep.subr.mxu0 0.0
        %2599 = vmatpush1.msra.mxu0 0.0
        %2600 = vmatprep.subr.mxu0 0.0
        %2601 = vmatpush1.msra.mxu0 0.0
        %2602 = vmatprep.subr.mxu0 0.0
        %2603 = vmatpush1.msra.mxu0 0.0
        %2604 = vmatprep.subr.mxu0 0.0
        %2605 = vmatpush1.msra.mxu0 0.0
        %2606 = vmatprep.subr.mxu0 0.0
        %2607 = vmatpush1.msra.mxu0 0.0
        %2608 = vmatprep.mubr.f32.mxu0 0.0
        %2609 = vmatmul.mubr.f32.gmra.mrb[0].mxu0 %v2539
        %v2610 = vpop.f32.mrb[0].mxu0
        %v2611 = vadd.f32 %v2530, %v2610
        %v2612 = vpop.f32.mrb[0].mxu0
        %2613 = vmatprep.mubr.f32.mxu0 0.0
        %2614 = vmatmul.mubr.f32.gmra.mrb[0].mxu0 %v2542
        %v2615 = vpop.f32.mrb[0].mxu0
        %v2616 = vadd.f32 %v2535, %v2615
        %v2617 = vpop.f32.mrb[0].mxu0
        %2618 = vdwg.mxu0
        %2620 = vset.pattern.permute.xlu0 0
        %2621 = vperm.xlu0 %2620, %v2437
        %v2622 = vpop.permute.xlu0 %2621
        %2625 = vset.pattern.permute.xlu0 0
        %2626 = vperm.xlu0 %2625, %v2438
        %v2627 = vpop.permute.xlu0 %2626
        %v2629 = vadd.f32 %v2611, %v2622
        %v2630 = vadd.f32 %v2616, %v2627
        %s2631 = scalar_lea.vmem %s15, 32
        %v2632 = vld [vmem:[%s2631] sm:$0xff]
        %v2633 = vld [vmem:[%s2631 + $0x8] sm:$0xff]
        %v2634 = vld [vmem:[%s15] sm:$0xff]
        %v2635 = vld [vmem:[%s15 + $0x8] sm:$0xff]
        %2636 = vrot.lane.b32.xlu0 %v2433, 127
        %v2637 = vpop.permute.xlu0 %2636
        %2638 = vrot.lane.b32.xlu0 %v2434, 127
        %v2639 = vpop.permute.xlu0 %2638
        %2640 = vrot.lane.b32.xlu0 %v2435, 127
        %v2641 = vpop.permute.xlu0 %2640
        %2642 = vrot.lane.b32.xlu0 %v2436, 127
        %v2643 = vpop.permute.xlu0 %2642
        %v2644 = vsel %vm809, %v2637, 0.0
        %v2645 = vsel %vm809, %v2639, 0.0
        %v2646 = vsel %vm809, %v2641, 0.0
        %v2647 = vsel %vm809, %v2643, 0.0
        %v2649 = vsel %vm967, %v2634, 0
        %v2652 = vsel %vm967, %v2635, 0
        %2654 = vmatprep.subr.mxu0 0.0
        %2655 = vmatpush1.msra.mxu0 %v2644
        %2656 = vmatprep.subr.mxu0 0.0
        %2657 = vmatpush1.msra.mxu0 %v2645
        %2658 = vmatprep.subr.mxu0 0.0
        %2659 = vmatpush1.msra.mxu0 %v2646
        %2660 = vmatprep.subr.mxu0 0.0
        %2661 = vmatpush1.msra.mxu0 %v2647
        %2662 = vmatprep.subr.mxu0 0.0
        %2663 = vmatpush1.msra.mxu0 0.0
        %2664 = vmatprep.subr.mxu0 0.0
        %2665 = vmatpush1.msra.mxu0 0.0
        %2666 = vmatprep.subr.mxu0 0.0
        %2667 = vmatpush1.msra.mxu0 0.0
        %2668 = vmatprep.subr.mxu0 0.0
        %2669 = vmatpush1.msra.mxu0 0.0
        %2670 = vmatprep.subr.mxu0 0.0
        %2671 = vmatpush1.msra.mxu0 0.0
        %2672 = vmatprep.subr.mxu0 0.0
        %2673 = vmatpush1.msra.mxu0 0.0
        %2674 = vmatprep.subr.mxu0 0.0
        %2675 = vmatpush1.msra.mxu0 0.0
        %2676 = vmatprep.subr.mxu0 0.0
        %2677 = vmatpush1.msra.mxu0 0.0
        %2678 = vmatprep.subr.mxu0 0.0
        %2679 = vmatpush1.msra.mxu0 0.0
        %2680 = vmatprep.subr.mxu0 0.0
        %2681 = vmatpush1.msra.mxu0 0.0
        %2682 = vmatprep.subr.mxu0 0.0
        %2683 = vmatpush1.msra.mxu0 0.0
        %2684 = vmatprep.subr.mxu0 0.0
        %2685 = vmatpush1.msra.mxu0 0.0
        %2686 = vmatprep.subr.mxu0 0.0
        %2687 = vmatpush1.msra.mxu0 0.0
        %2688 = vmatprep.subr.mxu0 0.0
        %2689 = vmatpush1.msra.mxu0 0.0
        %2690 = vmatprep.subr.mxu0 0.0
        %2691 = vmatpush1.msra.mxu0 0.0
        %2692 = vmatprep.subr.mxu0 0.0
        %2693 = vmatpush1.msra.mxu0 0.0
        %2694 = vmatprep.subr.mxu0 0.0
        %2695 = vmatpush1.msra.mxu0 0.0
        %2696 = vmatprep.subr.mxu0 0.0
        %2697 = vmatpush1.msra.mxu0 0.0
        %2698 = vmatprep.subr.mxu0 0.0
        %2699 = vmatpush1.msra.mxu0 0.0
        %2700 = vmatprep.subr.mxu0 0.0
        %2701 = vmatpush1.msra.mxu0 0.0
        %2702 = vmatprep.subr.mxu0 0.0
        %2703 = vmatpush1.msra.mxu0 0.0
        %2704 = vmatprep.subr.mxu0 0.0
        %2705 = vmatpush1.msra.mxu0 0.0
        %2706 = vmatprep.subr.mxu0 0.0
        %2707 = vmatpush1.msra.mxu0 0.0
        %2708 = vmatprep.subr.mxu0 0.0
        %2709 = vmatpush1.msra.mxu0 0.0
        %2710 = vmatprep.subr.mxu0 0.0
        %2711 = vmatpush1.msra.mxu0 0.0
        %2712 = vmatprep.subr.mxu0 0.0
        %2713 = vmatpush1.msra.mxu0 0.0
        %2714 = vmatprep.subr.mxu0 0.0
        %2715 = vmatpush1.msra.mxu0 0.0
        %2716 = vmatprep.subr.mxu0 0.0
        %2717 = vmatpush1.msra.mxu0 0.0
        %2718 = vmatprep.mubr.f32.mxu0 0.0
        %2719 = vmatmul.mubr.f32.gmra.mrb[0].mxu0 %v2649
        %v2720 = vpop.f32.mrb[0].mxu0
        %v2721 = vadd.f32 0.0, %v2720
        %v2722 = vpop.f32.mrb[0].mxu0
        %2723 = vmatprep.mubr.f32.mxu0 0.0
        %2724 = vmatmul.mubr.f32.gmra.mrb[0].mxu0 %v2652
        %v2725 = vpop.f32.mrb[0].mxu0
        %v2726 = vadd.f32 0.0, %v2725
        %v2727 = vpop.f32.mrb[0].mxu0
        %2728 = vdwg.mxu0
        %v2730 = vsel %vm967, %v2632, 0
        %v2733 = vsel %vm967, %v2633, 0
        %2735 = vmatprep.subr.mxu0 0.0
        %2736 = vmatpush1.msra.mxu0 %v2433
        %2737 = vmatprep.subr.mxu0 0.0
        %2738 = vmatpush1.msra.mxu0 %v2434
        %2739 = vmatprep.subr.mxu0 0.0
        %2740 = vmatpush1.msra.mxu0 %v2435
        %2741 = vmatprep.subr.mxu0 0.0
        %2742 = vmatpush1.msra.mxu0 %v2436
        %2743 = vmatprep.subr.mxu0 0.0
        %2744 = vmatpush1.msra.mxu0 0.0
        %2745 = vmatprep.subr.mxu0 0.0
        %2746 = vmatpush1.msra.mxu0 0.0
        %2747 = vmatprep.subr.mxu0 0.0
        %2748 = vmatpush1.msra.mxu0 0.0
        %2749 = vmatprep.subr.mxu0 0.0
        %2750 = vmatpush1.msra.mxu0 0.0
        %2751 = vmatprep.subr.mxu0 0.0
        %2752 = vmatpush1.msra.mxu0 0.0
        %2753 = vmatprep.subr.mxu0 0.0
        %2754 = vmatpush1.msra.mxu0 0.0
        %2755 = vmatprep.subr.mxu0 0.0
        %2756 = vmatpush1.msra.mxu0 0.0
        %2757 = vmatprep.subr.mxu0 0.0
        %2758 = vmatpush1.msra.mxu0 0.0
        %2759 = vmatprep.subr.mxu0 0.0
        %2760 = vmatpush1.msra.mxu0 0.0
        %2761 = vmatprep.subr.mxu0 0.0
        %2762 = vmatpush1.msra.mxu0 0.0
        %2763 = vmatprep.subr.mxu0 0.0
        %2764 = vmatpush1.msra.mxu0 0.0
        %2765 = vmatprep.subr.mxu0 0.0
        %2766 = vmatpush1.msra.mxu0 0.0
        %2767 = vmatprep.subr.mxu0 0.0
        %2768 = vmatpush1.msra.mxu0 0.0
        %2769 = vmatprep.subr.mxu0 0.0
        %2770 = vmatpush1.msra.mxu0 0.0
        %2771 = vmatprep.subr.mxu0 0.0
        %2772 = vmatpush1.msra.mxu0 0.0
        %2773 = vmatprep.subr.mxu0 0.0
        %2774 = vmatpush1.msra.mxu0 0.0
        %2775 = vmatprep.subr.mxu0 0.0
        %2776 = vmatpush1.msra.mxu0 0.0
        %2777 = vmatprep.subr.mxu0 0.0
        %2778 = vmatpush1.msra.mxu0 0.0
        %2779 = vmatprep.subr.mxu0 0.0
        %2780 = vmatpush1.msra.mxu0 0.0
        %2781 = vmatprep.subr.mxu0 0.0
        %2782 = vmatpush1.msra.mxu0 0.0
        %2783 = vmatprep.subr.mxu0 0.0
        %2784 = vmatpush1.msra.mxu0 0.0
        %2785 = vmatprep.subr.mxu0 0.0
        %2786 = vmatpush1.msra.mxu0 0.0
        %2787 = vmatprep.subr.mxu0 0.0
        %2788 = vmatpush1.msra.mxu0 0.0
        %2789 = vmatprep.subr.mxu0 0.0
        %2790 = vmatpush1.msra.mxu0 0.0
        %2791 = vmatprep.subr.mxu0 0.0
        %2792 = vmatpush1.msra.mxu0 0.0
        %2793 = vmatprep.subr.mxu0 0.0
        %2794 = vmatpush1.msra.mxu0 0.0
        %2795 = vmatprep.subr.mxu0 0.0
        %2796 = vmatpush1.msra.mxu0 0.0
        %2797 = vmatprep.subr.mxu0 0.0
        %2798 = vmatpush1.msra.mxu0 0.0
        %2799 = vmatprep.mubr.f32.mxu0 0.0
        %2800 = vmatmul.mubr.f32.gmra.mrb[0].mxu0 %v2730
        %v2801 = vpop.f32.mrb[0].mxu0
        %v2802 = vadd.f32 %v2721, %v2801
        %v2803 = vpop.f32.mrb[0].mxu0
        %2804 = vmatprep.mubr.f32.mxu0 0.0
        %2805 = vmatmul.mubr.f32.gmra.mrb[0].mxu0 %v2733
        %v2806 = vpop.f32.mrb[0].mxu0
        %v2807 = vadd.f32 %v2726, %v2806
        %v2808 = vpop.f32.mrb[0].mxu0
        %2809 = vdwg.mxu0
        %v2810 = vadd.f32 %v2802, %v2622
        %v2811 = vadd.f32 %v2807, %v2627
        %2812 = vst [vmem:[%s592] sm:$0xff] %v2629
        %2813 = vst [vmem:[%s592 + $0x8] sm:$0xff] %v2630
        %2814 = vst [vmem:[%s592 + $0x10] sm:$0xff] %v2810
        %2815 = vst [vmem:[%s592 + $0x18] sm:$0xff] %v2811
        %s2816 = sand.u32 %s405, 1
        %s2817 = scalar_lea.sflag [#allocation4], %s2816
        %s2818 = sand.u32 %s405, 1
        %s2819 = smul.addr %s2818, 32
        %s2820 = scalar_lea.vmem [#allocation8], %s2819
        // Predicated region
        $region101: #{tpu_custom_call.1} parent=87 // pred_check
          %p2821 = pneg %p415
        $region102: #{tpu_custom_call.1} parent=87 // pred_check_branch
          %2823 = sbr.rel (%p2821) target = $region104
        $region103: #{tpu_custom_call.1} parent=87 // pred_region
          %s2825 = ssub.s32 512, 512
          %2826 = vsyncadd %s2817, %s2825
          %s2827 = smul.addr %s35, 4
          %s2828 = smul.addr %s2827, 128
          %s2829 = scalar_lea.hbm %s17, %s2828
          %s2830 = sshll.u32 %s2820, 4
          %s2831 = int_to_ptr.vmem [resolvable:$true] %s2830
          %2836 = dma.vmem_to_hbm [thread:$0]  %s2831, 512, %s2829, %s2817, 128, 128, 8
        $region104: #{tpu_custom_call.1} parent=87 // pred_fallthru
          _
      $region88: #{tpu_custom_call.1} parent=5 // pred_fallthru
        _
      %p2837 = scmp.le.s32.totalorder 2, %s30
      // Predicated region
      $region105: #{tpu_custom_call.1} parent=5 // pred_check
        %p2838 = pneg %p2837
      $region106: #{tpu_custom_call.1} parent=5 // pred_check_branch
        %2840 = sbr.rel (%p2838) target = $region108
      $region107: #{tpu_custom_call.1} parent=5 // pred_region
        %s2841 = ssub.s32 %s30, 2
        // Predicated region
        $region109: #{tpu_custom_call.1} parent=107 // pred_check
          %p2842 = pneg %p421
        $region110: #{tpu_custom_call.1} parent=107 // pred_check_branch
          %2844 = sbr.rel (%p2842) target = $region112
        $region111: #{tpu_custom_call.1} parent=107 // pred_region
          %s2845 = sand.u32 %s406, 1
          %s2846 = scalar_lea.sflag [#allocation4], %s2845
          %s2847 = sand.u32 %s406, 1
          %s2848 = smul.addr %s2847, 32
          %s2849 = scalar_lea.vmem [#allocation8], %s2848
          %2850 = dma.done %s2846, 512
        $region112: #{tpu_custom_call.1} parent=107 // pred_fallthru
          _
      $region108: #{tpu_custom_call.1} parent=5 // pred_fallthru
        _
    $region6: #{tpu_custom_call.1} parent=1 // loop_footer
      %s34 = sadd.s32 1, %s30
    $region7: #{tpu_custom_call.1} parent=1 // loop_footer_branch
      %29 = sbr.rel target = $region3
    $region8: #{tpu_custom_call.1} parent=1 // loop_exit
      _
    %2851 = vsyncpa [#allocation3], 1
    %s2852 = scalar_lea.sflag [#allocation3], 1
    %2853 = vsyncpa %s2852, 1
    %2854 = vsyncpa [#allocation6], 1
    %2855 = vsyncpa [#allocation4], 1
    %s2856 = scalar_lea.sflag [#allocation4], 1
    %2857 = vsyncpa %s2856, 1

</llo_original>
